<compile_context>
chip_gen: v7x
topology: tpu7x:2x2x1
jax: 0.10.0
libtpu: 0.0.40
codegen_flags: <defaults>
</compile_context>

<pallas_src>
import math

import jax
import jax.numpy as jnp
from jax.experimental import pallas as pl
from jax.experimental.pallas import tpu as pltpu


# ----------------------------------------------------------------------------- kernel helpers
def _dilation_matrix(lin, lpad, stride, left):
    """(lin, lpad) 0/1 matrix placing x[:, i] at column stride*i + left.

    Right-multiplying by this matrix performs zero-dilation (stride>1) and the
    left/right halo padding of the transposed-conv correlation in one MXU op,
    avoiding in-kernel scatter / pad / reshape.
    """
    i = jax.lax.broadcasted_iota(jnp.int32, (lin, lpad), 0)
    m = jax.lax.broadcasted_iota(jnp.int32, (lin, lpad), 1)
    return (m == stride * i + left).astype(jnp.float32)


def _ct_stage(h, w_ref, shift_ref, y_scr, *, k, cout_p, stride, padding, out_padding,
              scale_ref=None, skip=None, act="relu"):
    """One fused ConvTranspose1d (+skip) + BN-affine + activation on a (Cin, Lin) tile.

    out[:, n] = sum_j wf[j] @ xp[:, n + j]   with xp the dilated+padded input and
    wf[j] = w[:, :, k-1-j].T (pre-stacked row-wise into w_ref, BN scale pre-folded
    for non-skip stages).
    """
    cin, lin = h.shape
    lout = (lin - 1) * stride - 2 * padding + k + out_padding
    left = k - 1 - padding
    lpad = lout + k - 1

    # zero-dilation + halo padding as a matmul (MXU; no scatter/pad ops in-kernel)
    xp = jnp.dot(h, _dilation_matrix(lin, lpad, stride, left),
                 preferred_element_type=jnp.float32)                     # (cin, lpad)
    # single stacked-tap matmul: one MXU fill for all k taps
    y = jnp.dot(w_ref[...], xp, preferred_element_type=jnp.float32)      # (k*cout_p, lpad)
    # tap gather: k lane-shifted adds, staged through VMEM scratch
    y_scr[0:k * cout_p, 0:lpad] = y
    acc = y_scr[0:cout_p, 0:lout]
    for j in range(1, k):
        acc = acc + y_scr[j * cout_p:(j + 1) * cout_p, j:j + lout]

    if skip is not None:
        acc = (acc + skip) * scale_ref[...]     # BN scale after the skip add
    out = acc + shift_ref[...]                  # conv bias + BN shift (folded)
    if act == "relu":
        out = jnp.maximum(out, 0.0)
    elif act == "sigmoid":
        out = jax.nn.sigmoid(out)               # exp/recip ride the EUP slot
    return out


def _decoder_kernel(x_ref, x3_ref, x2_ref, x1_ref,
                    sc8, sh8,
                    w2, sh9,
                    w3, sc10, sh10,
                    w4, sh11,
                    w5, sc12, sh12,
                    w6, sh13,
                    w7, sh14,
                    w8, sh15,
                    o_ref, y_scr):
    # prologue: relu(bn8(bottleneck(x) + x3)), bottleneck == identity
    h = jnp.maximum((x_ref[0] + x3_ref[0]) * sc8[...] + sh8[...], 0.0)          # (64, L)
    # dec2 + bn9 + relu
    h = _ct_stage(h, w2, sh9, y_scr, k=3, cout_p=32, stride=1, padding=1,
                  out_padding=0)                                                  # (32, L)
    # dec3 (+x2) + bn10 + relu
    h = _ct_stage(h, w3, sh10, y_scr, k=5, cout_p=32, stride=2, padding=2,
                  out_padding=1, scale_ref=sc10, skip=x2_ref[0])                  # (32, 2L)
    # dec4 + bn11 + relu
    h = _ct_stage(h, w4, sh11, y_scr, k=5, cout_p=16, stride=1, padding=2,
                  out_padding=0)                                                  # (16, 2L)
    # dec5 (+x1) + bn12 + relu
    h = _ct_stage(h, w5, sh12, y_scr, k=7, cout_p=16, stride=2, padding=3,
                  out_padding=1, scale_ref=sc12, skip=x1_ref[0])                  # (16, 4L)
    # dec6 + bn13 + relu
    h = _ct_stage(h, w6, sh13, y_scr, k=7, cout_p=8, stride=1, padding=3,
                  out_padding=0)                                                  # (8, 4L)
    # dec7 + bn14 + relu
    h = _ct_stage(h, w7, sh14, y_scr, k=9, cout_p=8, stride=2, padding=4,
                  out_padding=1)                                                  # (8, 8L)
    # dec8 + bn15 + sigmoid (Cout=2 zero-padded to 8 in the weights)
    h = _ct_stage(h, w8, sh15, y_scr, k=9, cout_p=8, stride=1, padding=4,
                  out_padding=0, act="sigmoid")                                   # (8, 8L)
    o_ref[0, :, :] = h[0:o_ref.shape[1], :].astype(o_ref.dtype)                   # (2, 8L)


# ----------------------------------------------------------------------------- wrapper
def _fold_bn(bias, bn):
    """Fold conv bias + eval-mode BatchNorm1d into per-channel (scale, shift)."""
    inv = (bn["gamma"] / jnp.sqrt(bn["var"] + bn["eps"])).astype(jnp.float32)
    shift = ((bias - bn["mean"]) * inv + bn["beta"]).astype(jnp.float32)
    return inv, shift


def _prep_w(w, scale=None, cout_pad=None):
    """Torch (Cin, Cout, k) ConvTranspose1d weight -> stacked-tap matrix (k*Cout_p, Cin).

    Row block j holds the flipped tap w[:, :, k-1-j].T; optional BN-scale fold and
    zero-padding of Cout (for the 2-channel final stage).
    """
    cin, cout, k = w.shape
    wf = jnp.transpose(w[:, :, ::-1], (2, 1, 0)).astype(jnp.float32)   # (k, cout, cin)
    if scale is not None:
        wf = wf * scale[None, :, None]
    cp = cout if cout_pad is None else cout_pad
    if cp > cout:
        wf = jnp.pad(wf, ((0, 0), (0, cp - cout), (0, 0)))
    return wf.reshape(k * cp, cin)


def det_decoder_forward(x, x1, x2, x3, p):
    """Pallas implementation of Det_Decoder.forward (prob branch, bottleneck = identity)."""
    B, c0, L0 = x.shape
    assert c0 == 64
    # halo formula left = k-1-padding requires padding <= k-1 for every stage.
    for (k_, p_) in [(3, 1), (5, 2), (5, 2), (7, 3), (7, 3), (9, 4), (9, 4)]:
        assert 0 <= p_ <= k_ - 1

    x = x.astype(jnp.float32)
    x1 = x1.astype(jnp.float32)
    x2 = x2.astype(jnp.float32)
    x3 = x3.astype(jnp.float32)

    # fold conv bias + BN into per-channel scale/shift (scale folded into weights
    # for non-skip stages).
    sc8, sh8 = _fold_bn(jnp.zeros((64,), jnp.float32), p["bn8"])
    sc9, sh9 = _fold_bn(p["dec2"]["b"], p["bn9"])
    sc10, sh10 = _fold_bn(p["dec3"]["b"], p["bn10"])
    sc11, sh11 = _fold_bn(p["dec4"]["b"], p["bn11"])
    sc12, sh12 = _fold_bn(p["dec5"]["b"], p["bn12"])
    sc13, sh13 = _fold_bn(p["dec6"]["b"], p["bn13"])
    sc14, sh14 = _fold_bn(p["dec7"]["b"], p["bn14"])
    sc15, sh15 = _fold_bn(p["dec8"]["b"], p["bn15"])

    w2 = _prep_w(p["dec2"]["w"], scale=sc9)                 # (3*32, 64)
    w3 = _prep_w(p["dec3"]["w"])                            # (5*32, 32)  skip stage
    w4 = _prep_w(p["dec4"]["w"], scale=sc11)                # (5*16, 32)
    w5 = _prep_w(p["dec5"]["w"])                            # (7*16, 16)  skip stage
    w6 = _prep_w(p["dec6"]["w"], scale=sc13)                # (7*8, 16)
    w7 = _prep_w(p["dec7"]["w"], scale=sc14)                # (9*8, 8)
    w8 = _prep_w(p["dec8"]["w"], scale=sc15, cout_pad=8)    # (9*8, 8)   Cout 2 -> 8

    sh15p = jnp.pad(sh15, (0, 8 - sh15.shape[0]))
    col = lambda v: v.reshape(-1, 1)

    args = [x, x3, x2, x1,
            col(sc8), col(sh8),
            w2, col(sh9),
            w3, col(sc10), col(sh10),
            w4, col(sh11),
            w5, col(sc12), col(sh12),
            w6, col(sh13),
            w7, col(sh14),
            w8, col(sh15p)]

    def act_spec(c, l):
        return pl.BlockSpec((1, c, l), lambda b: (b, 0, 0))

    def par_spec(a):
        return pl.BlockSpec(a.shape, lambda b: (0,) * a.ndim)

    in_specs = [act_spec(64, L0), act_spec(64, L0),
                act_spec(32, 2 * L0), act_spec(16, 4 * L0)]
    in_specs += [par_spec(a) for a in args[4:]]

    l_final = 8 * L0
    scratch_rows = 160            # max over stages of k * Cout_padded
    scratch_cols = 8 * L0 + 8     # max over stages of Lpad = Lout + k - 1

    return pl.pallas_call(
        _decoder_kernel,
        out_shape=jax.ShapeDtypeStruct((B, 2, l_final), jnp.float32),
        grid=(B,),
        in_specs=in_specs,
        out_specs=pl.BlockSpec((1, 2, l_final), lambda b: (b, 0, 0)),
        scratch_shapes=[pltpu.VMEM((scratch_rows, scratch_cols), jnp.float32)],
        compiler_params=pltpu.CompilerParams(dimension_semantics=("parallel",)),
    )(*args)


# ----------------------------------------------------------------------------- reference
def _conv_transpose1d_ref(x, w, b, stride, padding, output_padding):
    k = w.shape[-1]
    w_oiw = jnp.transpose(w[:, :, ::-1], (1, 0, 2))  # (Cout, Cin, k), taps flipped
    out = jax.lax.conv_general_dilated(
        x, w_oiw,
        window_strides=(1,),
        padding=[(k - 1 - padding, k - 1 - padding + output_padding)],
        lhs_dilation=(stride,),
        rhs_dilation=(1,),
        dimension_numbers=("NCH", "OIH", "NCH"),
        precision=jax.lax.Precision.HIGHEST)
    return out + b[None, :, None]


def _bn_ref(v, q):
    inv = q["gamma"] / jnp.sqrt(q["var"] + q["eps"])
    return (v - q["mean"][None, :, None]) * inv[None, :, None] + q["beta"][None, :, None]


def det_decoder_ref(x, x1, x2, x3, p):
    h = jax.nn.relu(_bn_ref(x + x3, p["bn8"]))
    h = jax.nn.relu(_bn_ref(_conv_transpose1d_ref(h, p["dec2"]["w"], p["dec2"]["b"], 1, 1, 0), p["bn9"]))
    h = _conv_transpose1d_ref(h, p["dec3"]["w"], p["dec3"]["b"], 2, 2, 1)
    h = jax.nn.relu(_bn_ref(h + x2, p["bn10"]))
    h = jax.nn.relu(_bn_ref(_conv_transpose1d_ref(h, p["dec4"]["w"], p["dec4"]["b"], 1, 2, 0), p["bn11"]))
    h = _conv_transpose1d_ref(h, p["dec5"]["w"], p["dec5"]["b"], 2, 3, 1)
    h = jax.nn.relu(_bn_ref(h + x1, p["bn12"]))
    h = jax.nn.relu(_bn_ref(_conv_transpose1d_ref(h, p["dec6"]["w"], p["dec6"]["b"], 1, 3, 0), p["bn13"]))
    h = jax.nn.relu(_bn_ref(_conv_transpose1d_ref(h, p["dec7"]["w"], p["dec7"]["b"], 2, 4, 1), p["bn14"]))
    h = jax.nn.sigmoid(_bn_ref(_conv_transpose1d_ref(h, p["dec8"]["w"], p["dec8"]["b"], 1, 4, 0), p["bn15"]))
    return h


# ----------------------------------------------------------------------------- init & test
def _init_ct(key, cin, cout, k):
    kw, kb = jax.random.split(key)
    s = 1.0 / math.sqrt(cin * k)
    return {"w": jax.random.normal(kw, (cin, cout, k), jnp.float32) * s,
            "b": jax.random.normal(kb, (cout,), jnp.float32) * 0.1}


def _init_bn(key, c):
    k1, k2, k3, k4 = jax.random.split(key, 4)
    return {"gamma": 1.0 + 0.1 * jax.random.normal(k1, (c,), jnp.float32),
            "beta": 0.1 * jax.random.normal(k2, (c,), jnp.float32),
            "mean": 0.1 * jax.random.normal(k3, (c,), jnp.float32),
            "var": 0.5 + jax.random.uniform(k4, (c,), jnp.float32),
            "eps": 1e-5}


if __name__ == "__main__":
    key = jax.random.PRNGKey(0)
    keys = jax.random.split(key, 20)

    B, L0 = 2, 16
    x = jax.random.normal(keys[0], (B, 64, L0), jnp.float32)
    x3 = jax.random.normal(keys[1], (B, 64, L0), jnp.float32)
    x2 = jax.random.normal(keys[2], (B, 32, 2 * L0), jnp.float32)
    x1 = jax.random.normal(keys[3], (B, 16, 4 * L0), jnp.float32)

    params = {
        "dec2": _init_ct(keys[4], 64, 32, 3),
        "dec3": _init_ct(keys[5], 32, 32, 5),
        "dec4": _init_ct(keys[6], 32, 16, 5),
        "dec5": _init_ct(keys[7], 16, 16, 7),
        "dec6": _init_ct(keys[8], 16, 8, 7),
        "dec7": _init_ct(keys[9], 8, 8, 9),
        "dec8": _init_ct(keys[10], 8, 2, 9),
        "bn8": _init_bn(keys[11], 64),
        "bn9": _init_bn(keys[12], 32),
        "bn10": _init_bn(keys[13], 32),
        "bn11": _init_bn(keys[14], 16),
        "bn12": _init_bn(keys[15], 16),
        "bn13": _init_bn(keys[16], 8),
        "bn14": _init_bn(keys[17], 8),
        "bn15": _init_bn(keys[18], 2),
    }

    out = jax.jit(det_decoder_forward)(x, x1, x2, x3, params)
    out = jax.block_until_ready(out)

    ref = det_decoder_ref(x, x1, x2, x3, params)
    assert out.shape == (B, 2, 8 * L0), out.shape
    # f32 on TPU vs the module's f64; MXU matmul path vs XLA HIGHEST-precision conv.
    assert jnp.allclose(out, ref, atol=5e-3, rtol=5e-3), float(jnp.max(jnp.abs(out - ref)))

    print("KERNEL_OK")
</pallas_src>

<mosaic_0001>
module attributes {stable_mosaic.version = 11 : i64} {
  func.func @_decoder_kernel(%arg0: i32, %arg1: memref<1x64x16xf32, #tpu.memory_space<vmem>>, %arg2: memref<1x64x16xf32, #tpu.memory_space<vmem>>, %arg3: memref<1x32x32xf32, #tpu.memory_space<vmem>>, %arg4: memref<1x16x64xf32, #tpu.memory_space<vmem>>, %arg5: memref<64x1xf32, #tpu.memory_space<vmem>>, %arg6: memref<64x1xf32, #tpu.memory_space<vmem>>, %arg7: memref<96x64xf32, #tpu.memory_space<vmem>>, %arg8: memref<32x1xf32, #tpu.memory_space<vmem>>, %arg9: memref<160x32xf32, #tpu.memory_space<vmem>>, %arg10: memref<32x1xf32, #tpu.memory_space<vmem>>, %arg11: memref<32x1xf32, #tpu.memory_space<vmem>>, %arg12: memref<80x32xf32, #tpu.memory_space<vmem>>, %arg13: memref<16x1xf32, #tpu.memory_space<vmem>>, %arg14: memref<112x16xf32, #tpu.memory_space<vmem>>, %arg15: memref<16x1xf32, #tpu.memory_space<vmem>>, %arg16: memref<16x1xf32, #tpu.memory_space<vmem>>, %arg17: memref<56x16xf32, #tpu.memory_space<vmem>>, %arg18: memref<8x1xf32, #tpu.memory_space<vmem>>, %arg19: memref<72x8xf32, #tpu.memory_space<vmem>>, %arg20: memref<8x1xf32, #tpu.memory_space<vmem>>, %arg21: memref<72x8xf32, #tpu.memory_space<vmem>>, %arg22: memref<8x1xf32, #tpu.memory_space<vmem>>, %arg23: memref<1x2x128xf32, #tpu.memory_space<vmem>>, %arg24: memref<160x136xf32, #tpu.memory_space<vmem>>) attributes {dimension_semantics = [#tpu.dimension_semantics<parallel>], iteration_bounds = array<i64: 2>, scalar_prefetch = 0 : i64, scratch_operands = 1 : i64, tpu.core_type = #tpu.core_type<tc>, window_params = [{transform_indices = @transform_0, window_bounds = array<i64: 1, 64, 16>}, {transform_indices = @transform_1, window_bounds = array<i64: 1, 64, 16>}, {transform_indices = @transform_2, window_bounds = array<i64: 1, 32, 32>}, {transform_indices = @transform_3, window_bounds = array<i64: 1, 16, 64>}, {pipeline_mode = #tpu.pipeline_mode<synchronous>, transform_indices = @transform_4, window_bounds = array<i64: 64, 1>}, {pipeline_mode = #tpu.pipeline_mode<synchronous>, transform_indices = @transform_5, window_bounds = array<i64: 64, 1>}, {pipeline_mode = #tpu.pipeline_mode<synchronous>, transform_indices = @transform_6, window_bounds = array<i64: 96, 64>}, {pipeline_mode = #tpu.pipeline_mode<synchronous>, transform_indices = @transform_7, window_bounds = array<i64: 32, 1>}, {pipeline_mode = #tpu.pipeline_mode<synchronous>, transform_indices = @transform_8, window_bounds = array<i64: 160, 32>}, {pipeline_mode = #tpu.pipeline_mode<synchronous>, transform_indices = @transform_9, window_bounds = array<i64: 32, 1>}, {pipeline_mode = #tpu.pipeline_mode<synchronous>, transform_indices = @transform_10, window_bounds = array<i64: 32, 1>}, {pipeline_mode = #tpu.pipeline_mode<synchronous>, transform_indices = @transform_11, window_bounds = array<i64: 80, 32>}, {pipeline_mode = #tpu.pipeline_mode<synchronous>, transform_indices = @transform_12, window_bounds = array<i64: 16, 1>}, {pipeline_mode = #tpu.pipeline_mode<synchronous>, transform_indices = @transform_13, window_bounds = array<i64: 112, 16>}, {pipeline_mode = #tpu.pipeline_mode<synchronous>, transform_indices = @transform_14, window_bounds = array<i64: 16, 1>}, {pipeline_mode = #tpu.pipeline_mode<synchronous>, transform_indices = @transform_15, window_bounds = array<i64: 16, 1>}, {pipeline_mode = #tpu.pipeline_mode<synchronous>, transform_indices = @transform_16, window_bounds = array<i64: 56, 16>}, {pipeline_mode = #tpu.pipeline_mode<synchronous>, transform_indices = @transform_17, window_bounds = array<i64: 8, 1>}, {pipeline_mode = #tpu.pipeline_mode<synchronous>, transform_indices = @transform_18, window_bounds = array<i64: 72, 8>}, {pipeline_mode = #tpu.pipeline_mode<synchronous>, transform_indices = @transform_19, window_bounds = array<i64: 8, 1>}, {pipeline_mode = #tpu.pipeline_mode<synchronous>, transform_indices = @transform_20, window_bounds = array<i64: 72, 8>}, {pipeline_mode = #tpu.pipeline_mode<synchronous>, transform_indices = @transform_21, window_bounds = array<i64: 8, 1>}, {transform_indices = @transform_22, window_bounds = array<i64: 1, 2, 128>}]} {
    %c0 = arith.constant 0 : index
    %c0_0 = arith.constant 0 : index
    %c0_1 = arith.constant 0 : index
    %0 = vector.load %arg1[%c0, %c0_0, %c0_1] : memref<1x64x16xf32, #tpu.memory_space<vmem>>, vector<1x64x16xf32>
    %1 = vector.shape_cast %0 : vector<1x64x16xf32> to vector<64x16xf32>
    %c0_2 = arith.constant 0 : index
    %c0_3 = arith.constant 0 : index
    %c0_4 = arith.constant 0 : index
    %2 = vector.load %arg2[%c0_2, %c0_3, %c0_4] : memref<1x64x16xf32, #tpu.memory_space<vmem>>, vector<1x64x16xf32>
    %3 = vector.shape_cast %2 : vector<1x64x16xf32> to vector<64x16xf32>
    %4 = arith.addf %1, %3 : vector<64x16xf32>
    %c0_5 = arith.constant 0 : index
    %c0_6 = arith.constant 0 : index
    %5 = vector.load %arg5[%c0_5, %c0_6] : memref<64x1xf32, #tpu.memory_space<vmem>>, vector<64x1xf32>
    %6 = vector.broadcast %5 : vector<64x1xf32> to vector<64x16xf32>
    %7 = arith.mulf %4, %6 : vector<64x16xf32>
    %c0_7 = arith.constant 0 : index
    %c0_8 = arith.constant 0 : index
    %8 = vector.load %arg6[%c0_7, %c0_8] : memref<64x1xf32, #tpu.memory_space<vmem>>, vector<64x1xf32>
    %9 = vector.broadcast %8 : vector<64x1xf32> to vector<64x16xf32>
    %10 = arith.addf %7, %9 : vector<64x16xf32>
    %cst = arith.constant 0.000000e+00 : f32
    %11 = vector.broadcast %cst : f32 to vector<64x16xf32>
    %12 = arith.maximumf %10, %11 : vector<64x16xf32>
    %13 = tpu.iota {dimensions = array<i32: 0>} : vector<16x18xi32>
    %14 = tpu.iota {dimensions = array<i32: 1>} : vector<16x18xi32>
    %c1_i32 = arith.constant 1 : i32
    %15 = vector.broadcast %c1_i32 : i32 to vector<16x18xi32>
    %16 = arith.muli %15, %13 : vector<16x18xi32>
    %c1_i32_9 = arith.constant 1 : i32
    %17 = vector.broadcast %c1_i32_9 : i32 to vector<16x18xi32>
    %18 = arith.addi %16, %17 : vector<16x18xi32>
    %19 = arith.cmpi eq, %14, %18 : vector<16x18xi32>
    %20 = arith.extui %19 : vector<16x18xi1> to vector<16x18xi32>
    %21 = arith.sitofp %20 : vector<16x18xi32> to vector<16x18xf32>
    %cst_10 = arith.constant dense<0.000000e+00> : vector<64x18xf32>
    %22 = tpu.matmul %12, %21, %cst_10 {dimension_numbers = #tpu.dot_dimension_numbers<[1], [0], [0], [1], [0, 0, 1, 1], [], []>} : vector<64x16xf32>, vector<16x18xf32>, vector<64x18xf32> -> vector<64x18xf32>
    %c0_11 = arith.constant 0 : index
    %c0_12 = arith.constant 0 : index
    %23 = vector.load %arg7[%c0_11, %c0_12] : memref<96x64xf32, #tpu.memory_space<vmem>>, vector<96x64xf32>
    %cst_13 = arith.constant dense<0.000000e+00> : vector<96x18xf32>
    %24 = tpu.matmul %23, %22, %cst_13 {dimension_numbers = #tpu.dot_dimension_numbers<[1], [0], [0], [1], [0, 0, 1, 1], [], []>} : vector<96x64xf32>, vector<64x18xf32>, vector<96x18xf32> -> vector<96x18xf32>
    %c0_14 = arith.constant 0 : index
    %c0_15 = arith.constant 0 : index
    %25 = vector.load %arg24[%c0_14, %c0_15] : memref<160x136xf32, #tpu.memory_space<vmem>>, vector<96x18xf32>
    tpu.vector_store %arg24[%c0_14, %c0_15], %24 {strides = array<i32>} : memref<160x136xf32, #tpu.memory_space<vmem>>, vector<96x18xf32>,
    %c0_16 = arith.constant 0 : index
    %c0_17 = arith.constant 0 : index
    %26 = vector.load %arg24[%c0_16, %c0_17] : memref<160x136xf32, #tpu.memory_space<vmem>>, vector<32x16xf32>
    %c32 = arith.constant 32 : index
    %c1 = arith.constant 1 : index
    %27 = vector.load %arg24[%c32, %c1] : memref<160x136xf32, #tpu.memory_space<vmem>>, vector<32x16xf32>
    %28 = arith.addf %26, %27 : vector<32x16xf32>
    %c64 = arith.constant 64 : index
    %c2 = arith.constant 2 : index
    %29 = vector.load %arg24[%c64, %c2] : memref<160x136xf32, #tpu.memory_space<vmem>>, vector<32x16xf32>
    %30 = arith.addf %28, %29 : vector<32x16xf32>
    %c0_18 = arith.constant 0 : index
    %c0_19 = arith.constant 0 : index
    %31 = vector.load %arg8[%c0_18, %c0_19] : memref<32x1xf32, #tpu.memory_space<vmem>>, vector<32x1xf32>
    %32 = vector.broadcast %31 : vector<32x1xf32> to vector<32x16xf32>
    %33 = arith.addf %30, %32 : vector<32x16xf32>
    %cst_20 = arith.constant 0.000000e+00 : f32
    %34 = vector.broadcast %cst_20 : f32 to vector<32x16xf32>
    %35 = arith.maximumf %33, %34 : vector<32x16xf32>
    %c0_21 = arith.constant 0 : index
    %c0_22 = arith.constant 0 : index
    %c0_23 = arith.constant 0 : index
    %36 = vector.load %arg3[%c0_21, %c0_22, %c0_23] : memref<1x32x32xf32, #tpu.memory_space<vmem>>, vector<1x32x32xf32>
    %37 = vector.shape_cast %36 : vector<1x32x32xf32> to vector<32x32xf32>
    %38 = tpu.iota {dimensions = array<i32: 0>} : vector<16x36xi32>
    %39 = tpu.iota {dimensions = array<i32: 1>} : vector<16x36xi32>
    %c2_i32 = arith.constant 2 : i32
    %40 = vector.broadcast %c2_i32 : i32 to vector<16x36xi32>
    %41 = arith.muli %40, %38 : vector<16x36xi32>
    %c2_i32_24 = arith.constant 2 : i32
    %42 = vector.broadcast %c2_i32_24 : i32 to vector<16x36xi32>
    %43 = arith.addi %41, %42 : vector<16x36xi32>
    %44 = arith.cmpi eq, %39, %43 : vector<16x36xi32>
    %45 = arith.extui %44 : vector<16x36xi1> to vector<16x36xi32>
    %46 = arith.sitofp %45 : vector<16x36xi32> to vector<16x36xf32>
    %cst_25 = arith.constant dense<0.000000e+00> : vector<32x36xf32>
    %47 = tpu.matmul %35, %46, %cst_25 {dimension_numbers = #tpu.dot_dimension_numbers<[1], [0], [0], [1], [0, 0, 1, 1], [], []>} : vector<32x16xf32>, vector<16x36xf32>, vector<32x36xf32> -> vector<32x36xf32>
    %c0_26 = arith.constant 0 : index
    %c0_27 = arith.constant 0 : index
    %48 = vector.load %arg9[%c0_26, %c0_27] : memref<160x32xf32, #tpu.memory_space<vmem>>, vector<160x32xf32>
    %cst_28 = arith.constant dense<0.000000e+00> : vector<160x36xf32>
    %49 = tpu.matmul %48, %47, %cst_28 {dimension_numbers = #tpu.dot_dimension_numbers<[1], [0], [0], [1], [0, 0, 1, 1], [], []>} : vector<160x32xf32>, vector<32x36xf32>, vector<160x36xf32> -> vector<160x36xf32>
    %c0_29 = arith.constant 0 : index
    %c0_30 = arith.constant 0 : index
    %50 = vector.load %arg24[%c0_29, %c0_30] : memref<160x136xf32, #tpu.memory_space<vmem>>, vector<160x36xf32>
    tpu.vector_store %arg24[%c0_29, %c0_30], %49 {strides = array<i32>} : memref<160x136xf32, #tpu.memory_space<vmem>>, vector<160x36xf32>,
    %c0_31 = arith.constant 0 : index
    %c0_32 = arith.constant 0 : index
    %51 = vector.load %arg24[%c0_31, %c0_32] : memref<160x136xf32, #tpu.memory_space<vmem>>, vector<32x32xf32>
    %c32_33 = arith.constant 32 : index
    %c1_34 = arith.constant 1 : index
    %52 = vector.load %arg24[%c32_33, %c1_34] : memref<160x136xf32, #tpu.memory_space<vmem>>, vector<32x32xf32>
    %53 = arith.addf %51, %52 : vector<32x32xf32>
    %c64_35 = arith.constant 64 : index
    %c2_36 = arith.constant 2 : index
    %54 = vector.load %arg24[%c64_35, %c2_36] : memref<160x136xf32, #tpu.memory_space<vmem>>, vector<32x32xf32>
    %55 = arith.addf %53, %54 : vector<32x32xf32>
    %c96 = arith.constant 96 : index
    %c3 = arith.constant 3 : index
    %56 = vector.load %arg24[%c96, %c3] : memref<160x136xf32, #tpu.memory_space<vmem>>, vector<32x32xf32>
    %57 = arith.addf %55, %56 : vector<32x32xf32>
    %c128 = arith.constant 128 : index
    %c4 = arith.constant 4 : index
    %58 = vector.load %arg24[%c128, %c4] : memref<160x136xf32, #tpu.memory_space<vmem>>, vector<32x32xf32>
    %59 = arith.addf %57, %58 : vector<32x32xf32>
    %60 = arith.addf %59, %37 : vector<32x32xf32>
    %c0_37 = arith.constant 0 : index
    %c0_38 = arith.constant 0 : index
    %61 = vector.load %arg10[%c0_37, %c0_38] : memref<32x1xf32, #tpu.memory_space<vmem>>, vector<32x1xf32>
    %62 = vector.broadcast %61 : vector<32x1xf32> to vector<32x32xf32>
    %63 = arith.mulf %60, %62 : vector<32x32xf32>
    %c0_39 = arith.constant 0 : index
    %c0_40 = arith.constant 0 : index
    %64 = vector.load %arg11[%c0_39, %c0_40] : memref<32x1xf32, #tpu.memory_space<vmem>>, vector<32x1xf32>
    %65 = vector.broadcast %64 : vector<32x1xf32> to vector<32x32xf32>
    %66 = arith.addf %63, %65 : vector<32x32xf32>
    %cst_41 = arith.constant 0.000000e+00 : f32
    %67 = vector.broadcast %cst_41 : f32 to vector<32x32xf32>
    %68 = arith.maximumf %66, %67 : vector<32x32xf32>
    %69 = tpu.iota {dimensions = array<i32: 0>} : vector<32x36xi32>
    %70 = tpu.iota {dimensions = array<i32: 1>} : vector<32x36xi32>
    %c1_i32_42 = arith.constant 1 : i32
    %71 = vector.broadcast %c1_i32_42 : i32 to vector<32x36xi32>
    %72 = arith.muli %71, %69 : vector<32x36xi32>
    %c2_i32_43 = arith.constant 2 : i32
    %73 = vector.broadcast %c2_i32_43 : i32 to vector<32x36xi32>
    %74 = arith.addi %72, %73 : vector<32x36xi32>
    %75 = arith.cmpi eq, %70, %74 : vector<32x36xi32>
    %76 = arith.extui %75 : vector<32x36xi1> to vector<32x36xi32>
    %77 = arith.sitofp %76 : vector<32x36xi32> to vector<32x36xf32>
    %cst_44 = arith.constant dense<0.000000e+00> : vector<32x36xf32>
    %78 = tpu.matmul %68, %77, %cst_44 {dimension_numbers = #tpu.dot_dimension_numbers<[1], [0], [0], [1], [0, 0, 1, 1], [], []>} : vector<32x32xf32>, vector<32x36xf32>, vector<32x36xf32> -> vector<32x36xf32>
    %c0_45 = arith.constant 0 : index
    %c0_46 = arith.constant 0 : index
    %79 = vector.load %arg12[%c0_45, %c0_46] : memref<80x32xf32, #tpu.memory_space<vmem>>, vector<80x32xf32>
    %cst_47 = arith.constant dense<0.000000e+00> : vector<80x36xf32>
    %80 = tpu.matmul %79, %78, %cst_47 {dimension_numbers = #tpu.dot_dimension_numbers<[1], [0], [0], [1], [0, 0, 1, 1], [], []>} : vector<80x32xf32>, vector<32x36xf32>, vector<80x36xf32> -> vector<80x36xf32>
    %c0_48 = arith.constant 0 : index
    %c0_49 = arith.constant 0 : index
    %81 = vector.load %arg24[%c0_48, %c0_49] : memref<160x136xf32, #tpu.memory_space<vmem>>, vector<80x36xf32>
    tpu.vector_store %arg24[%c0_48, %c0_49], %80 {strides = array<i32>} : memref<160x136xf32, #tpu.memory_space<vmem>>, vector<80x36xf32>,
    %c0_50 = arith.constant 0 : index
    %c0_51 = arith.constant 0 : index
    %82 = vector.load %arg24[%c0_50, %c0_51] : memref<160x136xf32, #tpu.memory_space<vmem>>, vector<16x32xf32>
    %c16 = arith.constant 16 : index
    %c1_52 = arith.constant 1 : index
    %83 = vector.load %arg24[%c16, %c1_52] : memref<160x136xf32, #tpu.memory_space<vmem>>, vector<16x32xf32>
    %84 = arith.addf %82, %83 : vector<16x32xf32>
    %c32_53 = arith.constant 32 : index
    %c2_54 = arith.constant 2 : index
    %85 = vector.load %arg24[%c32_53, %c2_54] : memref<160x136xf32, #tpu.memory_space<vmem>>, vector<16x32xf32>
    %86 = arith.addf %84, %85 : vector<16x32xf32>
    %c48 = arith.constant 48 : index
    %c3_55 = arith.constant 3 : index
    %87 = vector.load %arg24[%c48, %c3_55] : memref<160x136xf32, #tpu.memory_space<vmem>>, vector<16x32xf32>
    %88 = arith.addf %86, %87 : vector<16x32xf32>
    %c64_56 = arith.constant 64 : index
    %c4_57 = arith.constant 4 : index
    %89 = vector.load %arg24[%c64_56, %c4_57] : memref<160x136xf32, #tpu.memory_space<vmem>>, vector<16x32xf32>
    %90 = arith.addf %88, %89 : vector<16x32xf32>
    %c0_58 = arith.constant 0 : index
    %c0_59 = arith.constant 0 : index
    %91 = vector.load %arg13[%c0_58, %c0_59] : memref<16x1xf32, #tpu.memory_space<vmem>>, vector<16x1xf32>
    %92 = vector.broadcast %91 : vector<16x1xf32> to vector<16x32xf32>
    %93 = arith.addf %90, %92 : vector<16x32xf32>
    %cst_60 = arith.constant 0.000000e+00 : f32
    %94 = vector.broadcast %cst_60 : f32 to vector<16x32xf32>
    %95 = arith.maximumf %93, %94 : vector<16x32xf32>
    %c0_61 = arith.constant 0 : index
    %c0_62 = arith.constant 0 : index
    %c0_63 = arith.constant 0 : index
    %96 = vector.load %arg4[%c0_61, %c0_62, %c0_63] : memref<1x16x64xf32, #tpu.memory_space<vmem>>, vector<1x16x64xf32>
    %97 = vector.shape_cast %96 : vector<1x16x64xf32> to vector<16x64xf32>
    %98 = tpu.iota {dimensions = array<i32: 0>} : vector<32x70xi32>
    %99 = tpu.iota {dimensions = array<i32: 1>} : vector<32x70xi32>
    %c2_i32_64 = arith.constant 2 : i32
    %100 = vector.broadcast %c2_i32_64 : i32 to vector<32x70xi32>
    %101 = arith.muli %100, %98 : vector<32x70xi32>
    %c3_i32 = arith.constant 3 : i32
    %102 = vector.broadcast %c3_i32 : i32 to vector<32x70xi32>
    %103 = arith.addi %101, %102 : vector<32x70xi32>
    %104 = arith.cmpi eq, %99, %103 : vector<32x70xi32>
    %105 = arith.extui %104 : vector<32x70xi1> to vector<32x70xi32>
    %106 = arith.sitofp %105 : vector<32x70xi32> to vector<32x70xf32>
    %cst_65 = arith.constant dense<0.000000e+00> : vector<16x70xf32>
    %107 = tpu.matmul %95, %106, %cst_65 {dimension_numbers = #tpu.dot_dimension_numbers<[1], [0], [0], [1], [0, 0, 1, 1], [], []>} : vector<16x32xf32>, vector<32x70xf32>, vector<16x70xf32> -> vector<16x70xf32>
    %c0_66 = arith.constant 0 : index
    %c0_67 = arith.constant 0 : index
    %108 = vector.load %arg14[%c0_66, %c0_67] : memref<112x16xf32, #tpu.memory_space<vmem>>, vector<112x16xf32>
    %cst_68 = arith.constant dense<0.000000e+00> : vector<112x70xf32>
    %109 = tpu.matmul %108, %107, %cst_68 {dimension_numbers = #tpu.dot_dimension_numbers<[1], [0], [0], [1], [0, 0, 1, 1], [], []>} : vector<112x16xf32>, vector<16x70xf32>, vector<112x70xf32> -> vector<112x70xf32>
    %c0_69 = arith.constant 0 : index
    %c0_70 = arith.constant 0 : index
    %110 = vector.load %arg24[%c0_69, %c0_70] : memref<160x136xf32, #tpu.memory_space<vmem>>, vector<112x70xf32>
    tpu.vector_store %arg24[%c0_69, %c0_70], %109 {strides = array<i32>} : memref<160x136xf32, #tpu.memory_space<vmem>>, vector<112x70xf32>,
    %c0_71 = arith.constant 0 : index
    %c0_72 = arith.constant 0 : index
    %111 = vector.load %arg24[%c0_71, %c0_72] : memref<160x136xf32, #tpu.memory_space<vmem>>, vector<16x64xf32>
    %c16_73 = arith.constant 16 : index
    %c1_74 = arith.constant 1 : index
    %112 = vector.load %arg24[%c16_73, %c1_74] : memref<160x136xf32, #tpu.memory_space<vmem>>, vector<16x64xf32>
    %113 = arith.addf %111, %112 : vector<16x64xf32>
    %c32_75 = arith.constant 32 : index
    %c2_76 = arith.constant 2 : index
    %114 = vector.load %arg24[%c32_75, %c2_76] : memref<160x136xf32, #tpu.memory_space<vmem>>, vector<16x64xf32>
    %115 = arith.addf %113, %114 : vector<16x64xf32>
    %c48_77 = arith.constant 48 : index
    %c3_78 = arith.constant 3 : index
    %116 = vector.load %arg24[%c48_77, %c3_78] : memref<160x136xf32, #tpu.memory_space<vmem>>, vector<16x64xf32>
    %117 = arith.addf %115, %116 : vector<16x64xf32>
    %c64_79 = arith.constant 64 : index
    %c4_80 = arith.constant 4 : index
    %118 = vector.load %arg24[%c64_79, %c4_80] : memref<160x136xf32, #tpu.memory_space<vmem>>, vector<16x64xf32>
    %119 = arith.addf %117, %118 : vector<16x64xf32>
    %c80 = arith.constant 80 : index
    %c5 = arith.constant 5 : index
    %120 = vector.load %arg24[%c80, %c5] : memref<160x136xf32, #tpu.memory_space<vmem>>, vector<16x64xf32>
    %121 = arith.addf %119, %120 : vector<16x64xf32>
    %c96_81 = arith.constant 96 : index
    %c6 = arith.constant 6 : index
    %122 = vector.load %arg24[%c96_81, %c6] : memref<160x136xf32, #tpu.memory_space<vmem>>, vector<16x64xf32>
    %123 = arith.addf %121, %122 : vector<16x64xf32>
    %124 = arith.addf %123, %97 : vector<16x64xf32>
    %c0_82 = arith.constant 0 : index
    %c0_83 = arith.constant 0 : index
    %125 = vector.load %arg15[%c0_82, %c0_83] : memref<16x1xf32, #tpu.memory_space<vmem>>, vector<16x1xf32>
    %126 = vector.broadcast %125 : vector<16x1xf32> to vector<16x64xf32>
    %127 = arith.mulf %124, %126 : vector<16x64xf32>
    %c0_84 = arith.constant 0 : index
    %c0_85 = arith.constant 0 : index
    %128 = vector.load %arg16[%c0_84, %c0_85] : memref<16x1xf32, #tpu.memory_space<vmem>>, vector<16x1xf32>
    %129 = vector.broadcast %128 : vector<16x1xf32> to vector<16x64xf32>
    %130 = arith.addf %127, %129 : vector<16x64xf32>
    %cst_86 = arith.constant 0.000000e+00 : f32
    %131 = vector.broadcast %cst_86 : f32 to vector<16x64xf32>
    %132 = arith.maximumf %130, %131 : vector<16x64xf32>
    %133 = tpu.iota {dimensions = array<i32: 0>} : vector<64x70xi32>
    %134 = tpu.iota {dimensions = array<i32: 1>} : vector<64x70xi32>
    %c1_i32_87 = arith.constant 1 : i32
    %135 = vector.broadcast %c1_i32_87 : i32 to vector<64x70xi32>
    %136 = arith.muli %135, %133 : vector<64x70xi32>
    %c3_i32_88 = arith.constant 3 : i32
    %137 = vector.broadcast %c3_i32_88 : i32 to vector<64x70xi32>
    %138 = arith.addi %136, %137 : vector<64x70xi32>
    %139 = arith.cmpi eq, %134, %138 : vector<64x70xi32>
    %140 = arith.extui %139 : vector<64x70xi1> to vector<64x70xi32>
    %141 = arith.sitofp %140 : vector<64x70xi32> to vector<64x70xf32>
    %cst_89 = arith.constant dense<0.000000e+00> : vector<16x70xf32>
    %142 = tpu.matmul %132, %141, %cst_89 {dimension_numbers = #tpu.dot_dimension_numbers<[1], [0], [0], [1], [0, 0, 1, 1], [], []>} : vector<16x64xf32>, vector<64x70xf32>, vector<16x70xf32> -> vector<16x70xf32>
    %c0_90 = arith.constant 0 : index
    %c0_91 = arith.constant 0 : index
    %143 = vector.load %arg17[%c0_90, %c0_91] : memref<56x16xf32, #tpu.memory_space<vmem>>, vector<56x16xf32>
    %cst_92 = arith.constant dense<0.000000e+00> : vector<56x70xf32>
    %144 = tpu.matmul %143, %142, %cst_92 {dimension_numbers = #tpu.dot_dimension_numbers<[1], [0], [0], [1], [0, 0, 1, 1], [], []>} : vector<56x16xf32>, vector<16x70xf32>, vector<56x70xf32> -> vector<56x70xf32>
    %c0_93 = arith.constant 0 : index
    %c0_94 = arith.constant 0 : index
    %145 = vector.load %arg24[%c0_93, %c0_94] : memref<160x136xf32, #tpu.memory_space<vmem>>, vector<56x70xf32>
    tpu.vector_store %arg24[%c0_93, %c0_94], %144 {strides = array<i32>} : memref<160x136xf32, #tpu.memory_space<vmem>>, vector<56x70xf32>,
    %c0_95 = arith.constant 0 : index
    %c0_96 = arith.constant 0 : index
    %146 = vector.load %arg24[%c0_95, %c0_96] : memref<160x136xf32, #tpu.memory_space<vmem>>, vector<8x64xf32>
    %c8 = arith.constant 8 : index
    %c1_97 = arith.constant 1 : index
    %147 = vector.load %arg24[%c8, %c1_97] : memref<160x136xf32, #tpu.memory_space<vmem>>, vector<8x64xf32>
    %148 = arith.addf %146, %147 : vector<8x64xf32>
    %c16_98 = arith.constant 16 : index
    %c2_99 = arith.constant 2 : index
    %149 = vector.load %arg24[%c16_98, %c2_99] : memref<160x136xf32, #tpu.memory_space<vmem>>, vector<8x64xf32>
    %150 = arith.addf %148, %149 : vector<8x64xf32>
    %c24 = arith.constant 24 : index
    %c3_100 = arith.constant 3 : index
    %151 = vector.load %arg24[%c24, %c3_100] : memref<160x136xf32, #tpu.memory_space<vmem>>, vector<8x64xf32>
    %152 = arith.addf %150, %151 : vector<8x64xf32>
    %c32_101 = arith.constant 32 : index
    %c4_102 = arith.constant 4 : index
    %153 = vector.load %arg24[%c32_101, %c4_102] : memref<160x136xf32, #tpu.memory_space<vmem>>, vector<8x64xf32>
    %154 = arith.addf %152, %153 : vector<8x64xf32>
    %c40 = arith.constant 40 : index
    %c5_103 = arith.constant 5 : index
    %155 = vector.load %arg24[%c40, %c5_103] : memref<160x136xf32, #tpu.memory_space<vmem>>, vector<8x64xf32>
    %156 = arith.addf %154, %155 : vector<8x64xf32>
    %c48_104 = arith.constant 48 : index
    %c6_105 = arith.constant 6 : index
    %157 = vector.load %arg24[%c48_104, %c6_105] : memref<160x136xf32, #tpu.memory_space<vmem>>, vector<8x64xf32>
    %158 = arith.addf %156, %157 : vector<8x64xf32>
    %c0_106 = arith.constant 0 : index
    %c0_107 = arith.constant 0 : index
    %159 = vector.load %arg18[%c0_106, %c0_107] : memref<8x1xf32, #tpu.memory_space<vmem>>, vector<8x1xf32>
    %160 = vector.broadcast %159 : vector<8x1xf32> to vector<8x64xf32>
    %161 = arith.addf %158, %160 : vector<8x64xf32>
    %cst_108 = arith.constant 0.000000e+00 : f32
    %162 = vector.broadcast %cst_108 : f32 to vector<8x64xf32>
    %163 = arith.maximumf %161, %162 : vector<8x64xf32>
    %164 = tpu.iota {dimensions = array<i32: 0>} : vector<64x136xi32>
    %165 = tpu.iota {dimensions = array<i32: 1>} : vector<64x136xi32>
    %c2_i32_109 = arith.constant 2 : i32
    %166 = vector.broadcast %c2_i32_109 : i32 to vector<64x136xi32>
    %167 = arith.muli %166, %164 : vector<64x136xi32>
    %c4_i32 = arith.constant 4 : i32
    %168 = vector.broadcast %c4_i32 : i32 to vector<64x136xi32>
    %169 = arith.addi %167, %168 : vector<64x136xi32>
    %170 = arith.cmpi eq, %165, %169 : vector<64x136xi32>
    %171 = arith.extui %170 : vector<64x136xi1> to vector<64x136xi32>
    %172 = arith.sitofp %171 : vector<64x136xi32> to vector<64x136xf32>
    %cst_110 = arith.constant dense<0.000000e+00> : vector<8x136xf32>
    %173 = tpu.matmul %163, %172, %cst_110 {dimension_numbers = #tpu.dot_dimension_numbers<[1], [0], [0], [1], [0, 0, 1, 1], [], []>} : vector<8x64xf32>, vector<64x136xf32>, vector<8x136xf32> -> vector<8x136xf32>
    %c0_111 = arith.constant 0 : index
    %c0_112 = arith.constant 0 : index
    %174 = vector.load %arg19[%c0_111, %c0_112] : memref<72x8xf32, #tpu.memory_space<vmem>>, vector<72x8xf32>
    %cst_113 = arith.constant dense<0.000000e+00> : vector<72x136xf32>
    %175 = tpu.matmul %174, %173, %cst_113 {dimension_numbers = #tpu.dot_dimension_numbers<[1], [0], [0], [1], [0, 0, 1, 1], [], []>} : vector<72x8xf32>, vector<8x136xf32>, vector<72x136xf32> -> vector<72x136xf32>
    %c0_114 = arith.constant 0 : index
    %c0_115 = arith.constant 0 : index
    %176 = vector.load %arg24[%c0_114, %c0_115] : memref<160x136xf32, #tpu.memory_space<vmem>>, vector<72x136xf32>
    tpu.vector_store %arg24[%c0_114, %c0_115], %175 {strides = array<i32>} : memref<160x136xf32, #tpu.memory_space<vmem>>, vector<72x136xf32>,
    %c0_116 = arith.constant 0 : index
    %c0_117 = arith.constant 0 : index
    %177 = vector.load %arg24[%c0_116, %c0_117] : memref<160x136xf32, #tpu.memory_space<vmem>>, vector<8x128xf32>
    %c8_118 = arith.constant 8 : index
    %c1_119 = arith.constant 1 : index
    %178 = vector.load %arg24[%c8_118, %c1_119] : memref<160x136xf32, #tpu.memory_space<vmem>>, vector<8x128xf32>
    %179 = arith.addf %177, %178 : vector<8x128xf32>
    %c16_120 = arith.constant 16 : index
    %c2_121 = arith.constant 2 : index
    %180 = vector.load %arg24[%c16_120, %c2_121] : memref<160x136xf32, #tpu.memory_space<vmem>>, vector<8x128xf32>
    %181 = arith.addf %179, %180 : vector<8x128xf32>
    %c24_122 = arith.constant 24 : index
    %c3_123 = arith.constant 3 : index
    %182 = vector.load %arg24[%c24_122, %c3_123] : memref<160x136xf32, #tpu.memory_space<vmem>>, vector<8x128xf32>
    %183 = arith.addf %181, %182 : vector<8x128xf32>
    %c32_124 = arith.constant 32 : index
    %c4_125 = arith.constant 4 : index
    %184 = vector.load %arg24[%c32_124, %c4_125] : memref<160x136xf32, #tpu.memory_space<vmem>>, vector<8x128xf32>
    %185 = arith.addf %183, %184 : vector<8x128xf32>
    %c40_126 = arith.constant 40 : index
    %c5_127 = arith.constant 5 : index
    %186 = vector.load %arg24[%c40_126, %c5_127] : memref<160x136xf32, #tpu.memory_space<vmem>>, vector<8x128xf32>
    %187 = arith.addf %185, %186 : vector<8x128xf32>
    %c48_128 = arith.constant 48 : index
    %c6_129 = arith.constant 6 : index
    %188 = vector.load %arg24[%c48_128, %c6_129] : memref<160x136xf32, #tpu.memory_space<vmem>>, vector<8x128xf32>
    %189 = arith.addf %187, %188 : vector<8x128xf32>
    %c56 = arith.constant 56 : index
    %c7 = arith.constant 7 : index
    %190 = vector.load %arg24[%c56, %c7] : memref<160x136xf32, #tpu.memory_space<vmem>>, vector<8x128xf32>
    %191 = arith.addf %189, %190 : vector<8x128xf32>
    %c64_130 = arith.constant 64 : index
    %c8_131 = arith.constant 8 : index
    %192 = vector.load %arg24[%c64_130, %c8_131] : memref<160x136xf32, #tpu.memory_space<vmem>>, vector<8x128xf32>
    %193 = arith.addf %191, %192 : vector<8x128xf32>
    %c0_132 = arith.constant 0 : index
    %c0_133 = arith.constant 0 : index
    %194 = vector.load %arg20[%c0_132, %c0_133] : memref<8x1xf32, #tpu.memory_space<vmem>>, vector<8x1xf32>
    %195 = vector.broadcast %194 : vector<8x1xf32> to vector<8x128xf32>
    %196 = arith.addf %193, %195 : vector<8x128xf32>
    %cst_134 = arith.constant 0.000000e+00 : f32
    %197 = vector.broadcast %cst_134 : f32 to vector<8x128xf32>
    %198 = arith.maximumf %196, %197 : vector<8x128xf32>
    %199 = tpu.iota {dimensions = array<i32: 0>} : vector<128x136xi32>
    %200 = tpu.iota {dimensions = array<i32: 1>} : vector<128x136xi32>
    %c1_i32_135 = arith.constant 1 : i32
    %201 = vector.broadcast %c1_i32_135 : i32 to vector<128x136xi32>
    %202 = arith.muli %201, %199 : vector<128x136xi32>
    %c4_i32_136 = arith.constant 4 : i32
    %203 = vector.broadcast %c4_i32_136 : i32 to vector<128x136xi32>
    %204 = arith.addi %202, %203 : vector<128x136xi32>
    %205 = arith.cmpi eq, %200, %204 : vector<128x136xi32>
    %206 = arith.extui %205 : vector<128x136xi1> to vector<128x136xi32>
    %207 = arith.sitofp %206 : vector<128x136xi32> to vector<128x136xf32>
    %cst_137 = arith.constant dense<0.000000e+00> : vector<8x136xf32>
    %208 = tpu.matmul %198, %207, %cst_137 {dimension_numbers = #tpu.dot_dimension_numbers<[1], [0], [0], [1], [0, 0, 1, 1], [], []>} : vector<8x128xf32>, vector<128x136xf32>, vector<8x136xf32> -> vector<8x136xf32>
    %c0_138 = arith.constant 0 : index
    %c0_139 = arith.constant 0 : index
    %209 = vector.load %arg21[%c0_138, %c0_139] : memref<72x8xf32, #tpu.memory_space<vmem>>, vector<72x8xf32>
    %cst_140 = arith.constant dense<0.000000e+00> : vector<72x136xf32>
    %210 = tpu.matmul %209, %208, %cst_140 {dimension_numbers = #tpu.dot_dimension_numbers<[1], [0], [0], [1], [0, 0, 1, 1], [], []>} : vector<72x8xf32>, vector<8x136xf32>, vector<72x136xf32> -> vector<72x136xf32>
    %c0_141 = arith.constant 0 : index
    %c0_142 = arith.constant 0 : index
    %211 = vector.load %arg24[%c0_141, %c0_142] : memref<160x136xf32, #tpu.memory_space<vmem>>, vector<72x136xf32>
    tpu.vector_store %arg24[%c0_141, %c0_142], %210 {strides = array<i32>} : memref<160x136xf32, #tpu.memory_space<vmem>>, vector<72x136xf32>,
    %c0_143 = arith.constant 0 : index
    %c0_144 = arith.constant 0 : index
    %212 = vector.load %arg24[%c0_143, %c0_144] : memref<160x136xf32, #tpu.memory_space<vmem>>, vector<8x128xf32>
    %c8_145 = arith.constant 8 : index
    %c1_146 = arith.constant 1 : index
    %213 = vector.load %arg24[%c8_145, %c1_146] : memref<160x136xf32, #tpu.memory_space<vmem>>, vector<8x128xf32>
    %214 = arith.addf %212, %213 : vector<8x128xf32>
    %c16_147 = arith.constant 16 : index
    %c2_148 = arith.constant 2 : index
    %215 = vector.load %arg24[%c16_147, %c2_148] : memref<160x136xf32, #tpu.memory_space<vmem>>, vector<8x128xf32>
    %216 = arith.addf %214, %215 : vector<8x128xf32>
    %c24_149 = arith.constant 24 : index
    %c3_150 = arith.constant 3 : index
    %217 = vector.load %arg24[%c24_149, %c3_150] : memref<160x136xf32, #tpu.memory_space<vmem>>, vector<8x128xf32>
    %218 = arith.addf %216, %217 : vector<8x128xf32>
    %c32_151 = arith.constant 32 : index
    %c4_152 = arith.constant 4 : index
    %219 = vector.load %arg24[%c32_151, %c4_152] : memref<160x136xf32, #tpu.memory_space<vmem>>, vector<8x128xf32>
    %220 = arith.addf %218, %219 : vector<8x128xf32>
    %c40_153 = arith.constant 40 : index
    %c5_154 = arith.constant 5 : index
    %221 = vector.load %arg24[%c40_153, %c5_154] : memref<160x136xf32, #tpu.memory_space<vmem>>, vector<8x128xf32>
    %222 = arith.addf %220, %221 : vector<8x128xf32>
    %c48_155 = arith.constant 48 : index
    %c6_156 = arith.constant 6 : index
    %223 = vector.load %arg24[%c48_155, %c6_156] : memref<160x136xf32, #tpu.memory_space<vmem>>, vector<8x128xf32>
    %224 = arith.addf %222, %223 : vector<8x128xf32>
    %c56_157 = arith.constant 56 : index
    %c7_158 = arith.constant 7 : index
    %225 = vector.load %arg24[%c56_157, %c7_158] : memref<160x136xf32, #tpu.memory_space<vmem>>, vector<8x128xf32>
    %226 = arith.addf %224, %225 : vector<8x128xf32>
    %c64_159 = arith.constant 64 : index
    %c8_160 = arith.constant 8 : index
    %227 = vector.load %arg24[%c64_159, %c8_160] : memref<160x136xf32, #tpu.memory_space<vmem>>, vector<8x128xf32>
    %228 = arith.addf %226, %227 : vector<8x128xf32>
    %c0_161 = arith.constant 0 : index
    %c0_162 = arith.constant 0 : index
    %229 = vector.load %arg22[%c0_161, %c0_162] : memref<8x1xf32, #tpu.memory_space<vmem>>, vector<8x1xf32>
    %230 = vector.broadcast %229 : vector<8x1xf32> to vector<8x128xf32>
    %231 = arith.addf %228, %230 : vector<8x128xf32>
    %232 = arith.negf %231 : vector<8x128xf32>
    %233 = math.exp %232 : vector<8x128xf32>
    %cst_163 = arith.constant 1.000000e+00 : f32
    %234 = vector.broadcast %cst_163 : f32 to vector<8x128xf32>
    %235 = arith.addf %234, %233 : vector<8x128xf32>
    %236 = arith.divf %234, %235 : vector<8x128xf32>
    %237 = vector.extract_strided_slice %236 {offsets = [0, 0], sizes = [2, 128], strides = [1, 1]} : vector<8x128xf32> to vector<2x128xf32>
    %c0_164 = arith.constant 0 : index
    %c0_165 = arith.constant 0 : index
    %c0_166 = arith.constant 0 : index
    %238 = vector.load %arg23[%c0_164, %c0_165, %c0_166] : memref<1x2x128xf32, #tpu.memory_space<vmem>>, vector<1x2x128xf32>
    %239 = vector.shape_cast %238 : vector<1x2x128xf32> to vector<2x128xf32>
    %240 = vector.shape_cast %237 : vector<2x128xf32> to vector<1x2x128xf32>
    tpu.vector_store %arg23[%c0_164, %c0_165, %c0_166], %240 {strides = array<i32>} : memref<1x2x128xf32, #tpu.memory_space<vmem>>, vector<1x2x128xf32>,
    return
  }
  func.func @transform_0(%arg0: i32) -> (i32, i32, i32) {
    %c0_i32 = arith.constant 0 : i32
    %c0_i32_0 = arith.constant 0 : i32
    %c0_i32_1 = arith.constant 0 : i32
    return %arg0, %c0_i32, %c0_i32_0 : i32, i32, i32
  }
  func.func @transform_1(%arg0: i32) -> (i32, i32, i32) {
    %c0_i32 = arith.constant 0 : i32
    %c0_i32_0 = arith.constant 0 : i32
    %c0_i32_1 = arith.constant 0 : i32
    return %arg0, %c0_i32, %c0_i32_0 : i32, i32, i32
  }
  func.func @transform_2(%arg0: i32) -> (i32, i32, i32) {
    %c0_i32 = arith.constant 0 : i32
    %c0_i32_0 = arith.constant 0 : i32
    %c0_i32_1 = arith.constant 0 : i32
    return %arg0, %c0_i32, %c0_i32_0 : i32, i32, i32
  }
  func.func @transform_3(%arg0: i32) -> (i32, i32, i32) {
    %c0_i32 = arith.constant 0 : i32
    %c0_i32_0 = arith.constant 0 : i32
    %c0_i32_1 = arith.constant 0 : i32
    return %arg0, %c0_i32, %c0_i32_0 : i32, i32, i32
  }
  func.func @transform_4(%arg0: i32) -> (i32, i32) {
    %c0_i32 = arith.constant 0 : i32
    %c0_i32_0 = arith.constant 0 : i32
    %c0_i32_1 = arith.constant 0 : i32
    return %c0_i32, %c0_i32_0 : i32, i32
  }
  func.func @transform_5(%arg0: i32) -> (i32, i32) {
    %c0_i32 = arith.constant 0 : i32
    %c0_i32_0 = arith.constant 0 : i32
    %c0_i32_1 = arith.constant 0 : i32
    return %c0_i32, %c0_i32_0 : i32, i32
  }
  func.func @transform_6(%arg0: i32) -> (i32, i32) {
    %c0_i32 = arith.constant 0 : i32
    %c0_i32_0 = arith.constant 0 : i32
    %c0_i32_1 = arith.constant 0 : i32
    return %c0_i32, %c0_i32_0 : i32, i32
  }
  func.func @transform_7(%arg0: i32) -> (i32, i32) {
    %c0_i32 = arith.constant 0 : i32
    %c0_i32_0 = arith.constant 0 : i32
    %c0_i32_1 = arith.constant 0 : i32
    return %c0_i32, %c0_i32_0 : i32, i32
  }
  func.func @transform_8(%arg0: i32) -> (i32, i32) {
    %c0_i32 = arith.constant 0 : i32
    %c0_i32_0 = arith.constant 0 : i32
    %c0_i32_1 = arith.constant 0 : i32
    return %c0_i32, %c0_i32_0 : i32, i32
  }
  func.func @transform_9(%arg0: i32) -> (i32, i32) {
    %c0_i32 = arith.constant 0 : i32
    %c0_i32_0 = arith.constant 0 : i32
    %c0_i32_1 = arith.constant 0 : i32
    return %c0_i32, %c0_i32_0 : i32, i32
  }
  func.func @transform_10(%arg0: i32) -> (i32, i32) {
    %c0_i32 = arith.constant 0 : i32
    %c0_i32_0 = arith.constant 0 : i32
    %c0_i32_1 = arith.constant 0 : i32
    return %c0_i32, %c0_i32_0 : i32, i32
  }
  func.func @transform_11(%arg0: i32) -> (i32, i32) {
    %c0_i32 = arith.constant 0 : i32
    %c0_i32_0 = arith.constant 0 : i32
    %c0_i32_1 = arith.constant 0 : i32
    return %c0_i32, %c0_i32_0 : i32, i32
  }
  func.func @transform_12(%arg0: i32) -> (i32, i32) {
    %c0_i32 = arith.constant 0 : i32
    %c0_i32_0 = arith.constant 0 : i32
    %c0_i32_1 = arith.constant 0 : i32
    return %c0_i32, %c0_i32_0 : i32, i32
  }
  func.func @transform_13(%arg0: i32) -> (i32, i32) {
    %c0_i32 = arith.constant 0 : i32
    %c0_i32_0 = arith.constant 0 : i32
    %c0_i32_1 = arith.constant 0 : i32
    return %c0_i32, %c0_i32_0 : i32, i32
  }
  func.func @transform_14(%arg0: i32) -> (i32, i32) {
    %c0_i32 = arith.constant 0 : i32
    %c0_i32_0 = arith.constant 0 : i32
    %c0_i32_1 = arith.constant 0 : i32
    return %c0_i32, %c0_i32_0 : i32, i32
  }
  func.func @transform_15(%arg0: i32) -> (i32, i32) {
    %c0_i32 = arith.constant 0 : i32
    %c0_i32_0 = arith.constant 0 : i32
    %c0_i32_1 = arith.constant 0 : i32
    return %c0_i32, %c0_i32_0 : i32, i32
  }
  func.func @transform_16(%arg0: i32) -> (i32, i32) {
    %c0_i32 = arith.constant 0 : i32
    %c0_i32_0 = arith.constant 0 : i32
    %c0_i32_1 = arith.constant 0 : i32
    return %c0_i32, %c0_i32_0 : i32, i32
  }
  func.func @transform_17(%arg0: i32) -> (i32, i32) {
    %c0_i32 = arith.constant 0 : i32
    %c0_i32_0 = arith.constant 0 : i32
    %c0_i32_1 = arith.constant 0 : i32
    return %c0_i32, %c0_i32_0 : i32, i32
  }
  func.func @transform_18(%arg0: i32) -> (i32, i32) {
    %c0_i32 = arith.constant 0 : i32
    %c0_i32_0 = arith.constant 0 : i32
    %c0_i32_1 = arith.constant 0 : i32
    return %c0_i32, %c0_i32_0 : i32, i32
  }
  func.func @transform_19(%arg0: i32) -> (i32, i32) {
    %c0_i32 = arith.constant 0 : i32
    %c0_i32_0 = arith.constant 0 : i32
    %c0_i32_1 = arith.constant 0 : i32
    return %c0_i32, %c0_i32_0 : i32, i32
  }
  func.func @transform_20(%arg0: i32) -> (i32, i32) {
    %c0_i32 = arith.constant 0 : i32
    %c0_i32_0 = arith.constant 0 : i32
    %c0_i32_1 = arith.constant 0 : i32
    return %c0_i32, %c0_i32_0 : i32, i32
  }
  func.func @transform_21(%arg0: i32) -> (i32, i32) {
    %c0_i32 = arith.constant 0 : i32
    %c0_i32_0 = arith.constant 0 : i32
    %c0_i32_1 = arith.constant 0 : i32
    return %c0_i32, %c0_i32_0 : i32, i32
  }
  func.func @transform_22(%arg0: i32) -> (i32, i32, i32) {
    %c0_i32 = arith.constant 0 : i32
    %c0_i32_0 = arith.constant 0 : i32
    %c0_i32_1 = arith.constant 0 : i32
    return %arg0, %c0_i32, %c0_i32_0 : i32, i32, i32
  }
}

</mosaic_0001>

<llo_original>
// kernel: det_decoder_forward.1
$region0: #{det_decoder_forward.1}
  #allocation0 [shape = 'u32[]', space=smem, size = 0x4, offset = 0x4, fixed_abs, tag = 'smem constant byte address 0x4 - core index']
  #allocation1 [shape = 'u32[144,128]{1,0:T(1,128)}', space=vmem, size = 0x12000, scoped, tag = 'internal scratch']
  #allocation2 [shape = 'f32[160,136]{1,0:T(8,128)}', space=vmem, size = 0x28000, scoped, tag = 'scratch operand']
  %s0 = inlined_call_operand.vmem [shape: f32[2,64,16], index: 0, kind: input, shape index: {}]
  %s1 = inlined_call_operand.vmem [shape: f32[2,64,16], index: 1, kind: input, shape index: {}]
  %s2 = inlined_call_operand.vmem [shape: f32[2,32,32], index: 2, kind: input, shape index: {}]
  %s3 = inlined_call_operand.vmem [shape: f32[2,16,64], index: 3, kind: input, shape index: {}]
  %s4 = inlined_call_operand.vmem [shape: f32[64,1], index: 4, kind: input, shape index: {}]
  %s5 = inlined_call_operand.vmem [shape: f32[64,1], index: 5, kind: input, shape index: {}]
  %s6 = inlined_call_operand.vmem [shape: f32[96,64], index: 6, kind: input, shape index: {}]
  %s7 = inlined_call_operand.vmem [shape: f32[32,1], index: 7, kind: input, shape index: {}]
  %s8 = inlined_call_operand.vmem [shape: f32[160,32], index: 8, kind: input, shape index: {}]
  %s9 = inlined_call_operand.vmem [shape: f32[32,1], index: 9, kind: input, shape index: {}]
  %s10 = inlined_call_operand.vmem [shape: f32[32,1], index: 10, kind: input, shape index: {}]
  %s11 = inlined_call_operand.vmem [shape: f32[80,32], index: 11, kind: input, shape index: {}]
  %s12 = inlined_call_operand.vmem [shape: f32[16,1], index: 12, kind: input, shape index: {}]
  %s13 = inlined_call_operand.vmem [shape: f32[112,16], index: 13, kind: input, shape index: {}]
  %s14 = inlined_call_operand.vmem [shape: f32[16,1], index: 14, kind: input, shape index: {}]
  %s15 = inlined_call_operand.vmem [shape: f32[16,1], index: 15, kind: input, shape index: {}]
  %s16 = inlined_call_operand.vmem [shape: f32[56,16], index: 16, kind: input, shape index: {}]
  %s17 = inlined_call_operand.vmem [shape: f32[8,1], index: 17, kind: input, shape index: {}]
  %s18 = inlined_call_operand.vmem [shape: f32[72,8], index: 18, kind: input, shape index: {}]
  %s19 = inlined_call_operand.vmem [shape: f32[8,1], index: 19, kind: input, shape index: {}]
  %s20 = inlined_call_operand.vmem [shape: f32[72,8], index: 20, kind: input, shape index: {}]
  %s21 = inlined_call_operand.vmem [shape: f32[8,1], index: 21, kind: input, shape index: {}]
  %s22 = inlined_call_operand.hbm [shape: f32[2,2,128], index: 22, kind: output, shape index: {}]
  %s23 = sld [smem:[#allocation0]]
  $region121: #{det_decoder_forward.1} parent=0
    _
  %s25 = ssub.s32 1, %s23
  %s26 = scalar_select 0, %s25, %s23
  $region1: #{det_decoder_forward.1} parent=0
    #allocation3 [shape = 'u8[2048]{0}', space=vmem, size = 0x800, scoped, tag = 'output window, operand 0']
    #allocation4 [shape = 's32[2]{0}', space=sflag, size = 0x8, scoped, tag = 'scoped memory for det_decoder_forward.1']
    %27 = vsyncpa [#allocation4], 0
    %s28 = scalar_lea.sflag [#allocation4], 1
    %29 = vsyncpa %s28, 0
    loop: start=0, step=1, limit=4
    $region2: #{det_decoder_forward.1} parent=1 // loop_pre_header
      _
    $region3: #{det_decoder_forward.1} parent=1 // loop_header
      %s31 = sphi 0, %s35
      %p32 = scmp.ge.s32.totalorder %s31, 4
      %s41 = sphi 0, %s43
      %s44 = sphi 0, %s41
      %s45 = sphi 0, %s44
      %s61 = sphi 0, %s45
      %s67 = sphi 0, %s69
      %s70 = sphi 0, %s67
      %s71 = sphi 0, %s70
      %s87 = sphi 0, %s71
      %s93 = sphi 0, %s95
      %s96 = sphi 0, %s93
      %s97 = sphi 0, %s96
      %s113 = sphi 0, %s97
      %s119 = sphi 0, %s121
      %s122 = sphi 0, %s119
      %s123 = sphi 0, %s122
      %s139 = sphi 0, %s123
      %s143 = sphi 0, %s143
      %s145 = sphi 0, %s143
      %s146 = sphi 0, %s145
      %s160 = sphi 0, %s146
      %s164 = sphi 0, %s164
      %s166 = sphi 0, %s164
      %s167 = sphi 0, %s166
      %s181 = sphi 0, %s167
      %s185 = sphi 0, %s185
      %s187 = sphi 0, %s185
      %s188 = sphi 0, %s187
      %s202 = sphi 0, %s188
      %s206 = sphi 0, %s206
      %s208 = sphi 0, %s206
      %s209 = sphi 0, %s208
      %s223 = sphi 0, %s209
      %s227 = sphi 0, %s227
      %s229 = sphi 0, %s227
      %s230 = sphi 0, %s229
      %s244 = sphi 0, %s230
      %s248 = sphi 0, %s248
      %s250 = sphi 0, %s248
      %s251 = sphi 0, %s250
      %s265 = sphi 0, %s251
      %s269 = sphi 0, %s269
      %s271 = sphi 0, %s269
      %s272 = sphi 0, %s271
      %s286 = sphi 0, %s272
      %s290 = sphi 0, %s290
      %s292 = sphi 0, %s290
      %s293 = sphi 0, %s292
      %s307 = sphi 0, %s293
      %s311 = sphi 0, %s311
      %s313 = sphi 0, %s311
      %s314 = sphi 0, %s313
      %s328 = sphi 0, %s314
      %s332 = sphi 0, %s332
      %s334 = sphi 0, %s332
      %s335 = sphi 0, %s334
      %s349 = sphi 0, %s335
      %s353 = sphi 0, %s353
      %s355 = sphi 0, %s353
      %s356 = sphi 0, %s355
      %s370 = sphi 0, %s356
      %s374 = sphi 0, %s374
      %s376 = sphi 0, %s374
      %s377 = sphi 0, %s376
      %s391 = sphi 0, %s377
      %s395 = sphi 0, %s395
      %s397 = sphi 0, %s395
      %s398 = sphi 0, %s397
      %s412 = sphi 0, %s398
      %s416 = sphi 0, %s416
      %s418 = sphi 0, %s416
      %s419 = sphi 0, %s418
      %s433 = sphi 0, %s419
      %s437 = sphi 0, %s437
      %s439 = sphi 0, %s437
      %s440 = sphi 0, %s439
      %s454 = sphi 0, %s440
      %s458 = sphi 0, %s458
      %s460 = sphi 0, %s458
      %s461 = sphi 0, %s460
      %s475 = sphi 0, %s461
      %s479 = sphi 0, %s479
      %s481 = sphi 0, %s479
      %s482 = sphi 0, %s481
      %s496 = sphi 0, %s482
      %s500 = sphi 0, %s500
      %s502 = sphi 0, %s500
      %s503 = sphi 0, %s502
      %s517 = sphi 0, %s503
      %s523 = sphi 0, %s525
      %s526 = sphi 0, %s523
      %s527 = sphi 0, %s526
      %s543 = sphi 0, %s527
    $region4: #{det_decoder_forward.1} parent=1 // loop_header_branch
      %34 = sbr.rel (%p32) target = $region8
    $region5: #{det_decoder_forward.1} parent=1 // loop_body
      %s36 = ssub.s32 %s31, 1
      %s37 = ssub.s32 %s31, 2
      %s38 = sadd.s32 %s31, 1
      %s39 = ssub.s32 %s31, %s38
      %p40 = scmp.eq.s32.totalorder %s39, 0
      %s42 = sadd.s32 %s41, 1
      %s43 = scalar_select %p40, %s41, %s42
      %p46 = pneg %p40
      %p47 = scmp.eq.s32.totalorder %s31, 1
      %p48 = por %p46, %p47
      %p49 = scmp.ne.s32.totalorder %s41, %s44
      %p50 = scmp.eq.s32.totalorder %s31, 0
      %p51 = por %p49, %p50
      %p52 = scmp.ne.s32.totalorder %s41, %s44
      %p53 = scmp.eq.s32.totalorder %s36, 1
      %p54 = por %p52, %p53
      %p55 = scmp.ne.s32.totalorder %s44, %s45
      %p56 = scmp.eq.s32.totalorder %s36, 0
      %p57 = por %p55, %p56
      %p58 = scmp.ne.s32.totalorder %s44, %s45
      %p59 = scmp.eq.s32.totalorder %s37, 1
      %p60 = por %p58, %p59
      %p62 = scmp.ne.s32.totalorder %s45, %s61
      %p63 = scmp.eq.s32.totalorder %s37, 0
      %p64 = por %p62, %p63
      %s65 = ssub.s32 %s31, %s38
      %p66 = scmp.eq.s32.totalorder %s65, 0
      %s68 = sadd.s32 %s67, 1
      %s69 = scalar_select %p66, %s67, %s68
      %p72 = pneg %p66
      %p73 = scmp.eq.s32.totalorder %s31, 1
      %p74 = por %p72, %p73
      %p75 = scmp.ne.s32.totalorder %s67, %s70
      %p76 = scmp.eq.s32.totalorder %s31, 0
      %p77 = por %p75, %p76
      %p78 = scmp.ne.s32.totalorder %s67, %s70
      %p79 = scmp.eq.s32.totalorder %s36, 1
      %p80 = por %p78, %p79
      %p81 = scmp.ne.s32.totalorder %s70, %s71
      %p82 = scmp.eq.s32.totalorder %s36, 0
      %p83 = por %p81, %p82
      %p84 = scmp.ne.s32.totalorder %s70, %s71
      %p85 = scmp.eq.s32.totalorder %s37, 1
      %p86 = por %p84, %p85
      %p88 = scmp.ne.s32.totalorder %s71, %s87
      %p89 = scmp.eq.s32.totalorder %s37, 0
      %p90 = por %p88, %p89
      %s91 = ssub.s32 %s31, %s38
      %p92 = scmp.eq.s32.totalorder %s91, 0
      %s94 = sadd.s32 %s93, 1
      %s95 = scalar_select %p92, %s93, %s94
      %p98 = pneg %p92
      %p99 = scmp.eq.s32.totalorder %s31, 1
      %p100 = por %p98, %p99
      %p101 = scmp.ne.s32.totalorder %s93, %s96
      %p102 = scmp.eq.s32.totalorder %s31, 0
      %p103 = por %p101, %p102
      %p104 = scmp.ne.s32.totalorder %s93, %s96
      %p105 = scmp.eq.s32.totalorder %s36, 1
      %p106 = por %p104, %p105
      %p107 = scmp.ne.s32.totalorder %s96, %s97
      %p108 = scmp.eq.s32.totalorder %s36, 0
      %p109 = por %p107, %p108
      %p110 = scmp.ne.s32.totalorder %s96, %s97
      %p111 = scmp.eq.s32.totalorder %s37, 1
      %p112 = por %p110, %p111
      %p114 = scmp.ne.s32.totalorder %s97, %s113
      %p115 = scmp.eq.s32.totalorder %s37, 0
      %p116 = por %p114, %p115
      %s117 = ssub.s32 %s31, %s38
      %p118 = scmp.eq.s32.totalorder %s117, 0
      %s120 = sadd.s32 %s119, 1
      %s121 = scalar_select %p118, %s119, %s120
      %p124 = pneg %p118
      %p125 = scmp.eq.s32.totalorder %s31, 1
      %p126 = por %p124, %p125
      %p127 = scmp.ne.s32.totalorder %s119, %s122
      %p128 = scmp.eq.s32.totalorder %s31, 0
      %p129 = por %p127, %p128
      %p130 = scmp.ne.s32.totalorder %s119, %s122
      %p131 = scmp.eq.s32.totalorder %s36, 1
      %p132 = por %p130, %p131
      %p133 = scmp.ne.s32.totalorder %s122, %s123
      %p134 = scmp.eq.s32.totalorder %s36, 0
      %p135 = por %p133, %p134
      %p136 = scmp.ne.s32.totalorder %s122, %s123
      %p137 = scmp.eq.s32.totalorder %s37, 1
      %p138 = por %p136, %p137
      %p140 = scmp.ne.s32.totalorder %s123, %s139
      %p141 = scmp.eq.s32.totalorder %s37, 0
      %p142 = por %p140, %p141
      %s144 = sadd.s32 %s143, 1
      %p147 = scmp.eq.s32.totalorder %s31, 1
      %p148 = scmp.ne.s32.totalorder %s143, %s145
      %p149 = scmp.eq.s32.totalorder %s31, 0
      %p150 = por %p148, %p149
      %p151 = scmp.ne.s32.totalorder %s143, %s145
      %p152 = scmp.eq.s32.totalorder %s36, 1
      %p153 = por %p151, %p152
      %p154 = scmp.ne.s32.totalorder %s145, %s146
      %p155 = scmp.eq.s32.totalorder %s36, 0
      %p156 = por %p154, %p155
      %p157 = scmp.ne.s32.totalorder %s145, %s146
      %p158 = scmp.eq.s32.totalorder %s37, 1
      %p159 = por %p157, %p158
      %p161 = scmp.ne.s32.totalorder %s146, %s160
      %p162 = scmp.eq.s32.totalorder %s37, 0
      %p163 = por %p161, %p162
      %s165 = sadd.s32 %s164, 1
      %p168 = scmp.eq.s32.totalorder %s31, 1
      %p169 = scmp.ne.s32.totalorder %s164, %s166
      %p170 = scmp.eq.s32.totalorder %s31, 0
      %p171 = por %p169, %p170
      %p172 = scmp.ne.s32.totalorder %s164, %s166
      %p173 = scmp.eq.s32.totalorder %s36, 1
      %p174 = por %p172, %p173
      %p175 = scmp.ne.s32.totalorder %s166, %s167
      %p176 = scmp.eq.s32.totalorder %s36, 0
      %p177 = por %p175, %p176
      %p178 = scmp.ne.s32.totalorder %s166, %s167
      %p179 = scmp.eq.s32.totalorder %s37, 1
      %p180 = por %p178, %p179
      %p182 = scmp.ne.s32.totalorder %s167, %s181
      %p183 = scmp.eq.s32.totalorder %s37, 0
      %p184 = por %p182, %p183
      %s186 = sadd.s32 %s185, 1
      %p189 = scmp.eq.s32.totalorder %s31, 1
      %p190 = scmp.ne.s32.totalorder %s185, %s187
      %p191 = scmp.eq.s32.totalorder %s31, 0
      %p192 = por %p190, %p191
      %p193 = scmp.ne.s32.totalorder %s185, %s187
      %p194 = scmp.eq.s32.totalorder %s36, 1
      %p195 = por %p193, %p194
      %p196 = scmp.ne.s32.totalorder %s187, %s188
      %p197 = scmp.eq.s32.totalorder %s36, 0
      %p198 = por %p196, %p197
      %p199 = scmp.ne.s32.totalorder %s187, %s188
      %p200 = scmp.eq.s32.totalorder %s37, 1
      %p201 = por %p199, %p200
      %p203 = scmp.ne.s32.totalorder %s188, %s202
      %p204 = scmp.eq.s32.totalorder %s37, 0
      %p205 = por %p203, %p204
      %s207 = sadd.s32 %s206, 1
      %p210 = scmp.eq.s32.totalorder %s31, 1
      %p211 = scmp.ne.s32.totalorder %s206, %s208
      %p212 = scmp.eq.s32.totalorder %s31, 0
      %p213 = por %p211, %p212
      %p214 = scmp.ne.s32.totalorder %s206, %s208
      %p215 = scmp.eq.s32.totalorder %s36, 1
      %p216 = por %p214, %p215
      %p217 = scmp.ne.s32.totalorder %s208, %s209
      %p218 = scmp.eq.s32.totalorder %s36, 0
      %p219 = por %p217, %p218
      %p220 = scmp.ne.s32.totalorder %s208, %s209
      %p221 = scmp.eq.s32.totalorder %s37, 1
      %p222 = por %p220, %p221
      %p224 = scmp.ne.s32.totalorder %s209, %s223
      %p225 = scmp.eq.s32.totalorder %s37, 0
      %p226 = por %p224, %p225
      %s228 = sadd.s32 %s227, 1
      %p231 = scmp.eq.s32.totalorder %s31, 1
      %p232 = scmp.ne.s32.totalorder %s227, %s229
      %p233 = scmp.eq.s32.totalorder %s31, 0
      %p234 = por %p232, %p233
      %p235 = scmp.ne.s32.totalorder %s227, %s229
      %p236 = scmp.eq.s32.totalorder %s36, 1
      %p237 = por %p235, %p236
      %p238 = scmp.ne.s32.totalorder %s229, %s230
      %p239 = scmp.eq.s32.totalorder %s36, 0
      %p240 = por %p238, %p239
      %p241 = scmp.ne.s32.totalorder %s229, %s230
      %p242 = scmp.eq.s32.totalorder %s37, 1
      %p243 = por %p241, %p242
      %p245 = scmp.ne.s32.totalorder %s230, %s244
      %p246 = scmp.eq.s32.totalorder %s37, 0
      %p247 = por %p245, %p246
      %s249 = sadd.s32 %s248, 1
      %p252 = scmp.eq.s32.totalorder %s31, 1
      %p253 = scmp.ne.s32.totalorder %s248, %s250
      %p254 = scmp.eq.s32.totalorder %s31, 0
      %p255 = por %p253, %p254
      %p256 = scmp.ne.s32.totalorder %s248, %s250
      %p257 = scmp.eq.s32.totalorder %s36, 1
      %p258 = por %p256, %p257
      %p259 = scmp.ne.s32.totalorder %s250, %s251
      %p260 = scmp.eq.s32.totalorder %s36, 0
      %p261 = por %p259, %p260
      %p262 = scmp.ne.s32.totalorder %s250, %s251
      %p263 = scmp.eq.s32.totalorder %s37, 1
      %p264 = por %p262, %p263
      %p266 = scmp.ne.s32.totalorder %s251, %s265
      %p267 = scmp.eq.s32.totalorder %s37, 0
      %p268 = por %p266, %p267
      %s270 = sadd.s32 %s269, 1
      %p273 = scmp.eq.s32.totalorder %s31, 1
      %p274 = scmp.ne.s32.totalorder %s269, %s271
      %p275 = scmp.eq.s32.totalorder %s31, 0
      %p276 = por %p274, %p275
      %p277 = scmp.ne.s32.totalorder %s269, %s271
      %p278 = scmp.eq.s32.totalorder %s36, 1
      %p279 = por %p277, %p278
      %p280 = scmp.ne.s32.totalorder %s271, %s272
      %p281 = scmp.eq.s32.totalorder %s36, 0
      %p282 = por %p280, %p281
      %p283 = scmp.ne.s32.totalorder %s271, %s272
      %p284 = scmp.eq.s32.totalorder %s37, 1
      %p285 = por %p283, %p284
      %p287 = scmp.ne.s32.totalorder %s272, %s286
      %p288 = scmp.eq.s32.totalorder %s37, 0
      %p289 = por %p287, %p288
      %s291 = sadd.s32 %s290, 1
      %p294 = scmp.eq.s32.totalorder %s31, 1
      %p295 = scmp.ne.s32.totalorder %s290, %s292
      %p296 = scmp.eq.s32.totalorder %s31, 0
      %p297 = por %p295, %p296
      %p298 = scmp.ne.s32.totalorder %s290, %s292
      %p299 = scmp.eq.s32.totalorder %s36, 1
      %p300 = por %p298, %p299
      %p301 = scmp.ne.s32.totalorder %s292, %s293
      %p302 = scmp.eq.s32.totalorder %s36, 0
      %p303 = por %p301, %p302
      %p304 = scmp.ne.s32.totalorder %s292, %s293
      %p305 = scmp.eq.s32.totalorder %s37, 1
      %p306 = por %p304, %p305
      %p308 = scmp.ne.s32.totalorder %s293, %s307
      %p309 = scmp.eq.s32.totalorder %s37, 0
      %p310 = por %p308, %p309
      %s312 = sadd.s32 %s311, 1
      %p315 = scmp.eq.s32.totalorder %s31, 1
      %p316 = scmp.ne.s32.totalorder %s311, %s313
      %p317 = scmp.eq.s32.totalorder %s31, 0
      %p318 = por %p316, %p317
      %p319 = scmp.ne.s32.totalorder %s311, %s313
      %p320 = scmp.eq.s32.totalorder %s36, 1
      %p321 = por %p319, %p320
      %p322 = scmp.ne.s32.totalorder %s313, %s314
      %p323 = scmp.eq.s32.totalorder %s36, 0
      %p324 = por %p322, %p323
      %p325 = scmp.ne.s32.totalorder %s313, %s314
      %p326 = scmp.eq.s32.totalorder %s37, 1
      %p327 = por %p325, %p326
      %p329 = scmp.ne.s32.totalorder %s314, %s328
      %p330 = scmp.eq.s32.totalorder %s37, 0
      %p331 = por %p329, %p330
      %s333 = sadd.s32 %s332, 1
      %p336 = scmp.eq.s32.totalorder %s31, 1
      %p337 = scmp.ne.s32.totalorder %s332, %s334
      %p338 = scmp.eq.s32.totalorder %s31, 0
      %p339 = por %p337, %p338
      %p340 = scmp.ne.s32.totalorder %s332, %s334
      %p341 = scmp.eq.s32.totalorder %s36, 1
      %p342 = por %p340, %p341
      %p343 = scmp.ne.s32.totalorder %s334, %s335
      %p344 = scmp.eq.s32.totalorder %s36, 0
      %p345 = por %p343, %p344
      %p346 = scmp.ne.s32.totalorder %s334, %s335
      %p347 = scmp.eq.s32.totalorder %s37, 1
      %p348 = por %p346, %p347
      %p350 = scmp.ne.s32.totalorder %s335, %s349
      %p351 = scmp.eq.s32.totalorder %s37, 0
      %p352 = por %p350, %p351
      %s354 = sadd.s32 %s353, 1
      %p357 = scmp.eq.s32.totalorder %s31, 1
      %p358 = scmp.ne.s32.totalorder %s353, %s355
      %p359 = scmp.eq.s32.totalorder %s31, 0
      %p360 = por %p358, %p359
      %p361 = scmp.ne.s32.totalorder %s353, %s355
      %p362 = scmp.eq.s32.totalorder %s36, 1
      %p363 = por %p361, %p362
      %p364 = scmp.ne.s32.totalorder %s355, %s356
      %p365 = scmp.eq.s32.totalorder %s36, 0
      %p366 = por %p364, %p365
      %p367 = scmp.ne.s32.totalorder %s355, %s356
      %p368 = scmp.eq.s32.totalorder %s37, 1
      %p369 = por %p367, %p368
      %p371 = scmp.ne.s32.totalorder %s356, %s370
      %p372 = scmp.eq.s32.totalorder %s37, 0
      %p373 = por %p371, %p372
      %s375 = sadd.s32 %s374, 1
      %p378 = scmp.eq.s32.totalorder %s31, 1
      %p379 = scmp.ne.s32.totalorder %s374, %s376
      %p380 = scmp.eq.s32.totalorder %s31, 0
      %p381 = por %p379, %p380
      %p382 = scmp.ne.s32.totalorder %s374, %s376
      %p383 = scmp.eq.s32.totalorder %s36, 1
      %p384 = por %p382, %p383
      %p385 = scmp.ne.s32.totalorder %s376, %s377
      %p386 = scmp.eq.s32.totalorder %s36, 0
      %p387 = por %p385, %p386
      %p388 = scmp.ne.s32.totalorder %s376, %s377
      %p389 = scmp.eq.s32.totalorder %s37, 1
      %p390 = por %p388, %p389
      %p392 = scmp.ne.s32.totalorder %s377, %s391
      %p393 = scmp.eq.s32.totalorder %s37, 0
      %p394 = por %p392, %p393
      %s396 = sadd.s32 %s395, 1
      %p399 = scmp.eq.s32.totalorder %s31, 1
      %p400 = scmp.ne.s32.totalorder %s395, %s397
      %p401 = scmp.eq.s32.totalorder %s31, 0
      %p402 = por %p400, %p401
      %p403 = scmp.ne.s32.totalorder %s395, %s397
      %p404 = scmp.eq.s32.totalorder %s36, 1
      %p405 = por %p403, %p404
      %p406 = scmp.ne.s32.totalorder %s397, %s398
      %p407 = scmp.eq.s32.totalorder %s36, 0
      %p408 = por %p406, %p407
      %p409 = scmp.ne.s32.totalorder %s397, %s398
      %p410 = scmp.eq.s32.totalorder %s37, 1
      %p411 = por %p409, %p410
      %p413 = scmp.ne.s32.totalorder %s398, %s412
      %p414 = scmp.eq.s32.totalorder %s37, 0
      %p415 = por %p413, %p414
      %s417 = sadd.s32 %s416, 1
      %p420 = scmp.eq.s32.totalorder %s31, 1
      %p421 = scmp.ne.s32.totalorder %s416, %s418
      %p422 = scmp.eq.s32.totalorder %s31, 0
      %p423 = por %p421, %p422
      %p424 = scmp.ne.s32.totalorder %s416, %s418
      %p425 = scmp.eq.s32.totalorder %s36, 1
      %p426 = por %p424, %p425
      %p427 = scmp.ne.s32.totalorder %s418, %s419
      %p428 = scmp.eq.s32.totalorder %s36, 0
      %p429 = por %p427, %p428
      %p430 = scmp.ne.s32.totalorder %s418, %s419
      %p431 = scmp.eq.s32.totalorder %s37, 1
      %p432 = por %p430, %p431
      %p434 = scmp.ne.s32.totalorder %s419, %s433
      %p435 = scmp.eq.s32.totalorder %s37, 0
      %p436 = por %p434, %p435
      %s438 = sadd.s32 %s437, 1
      %p441 = scmp.eq.s32.totalorder %s31, 1
      %p442 = scmp.ne.s32.totalorder %s437, %s439
      %p443 = scmp.eq.s32.totalorder %s31, 0
      %p444 = por %p442, %p443
      %p445 = scmp.ne.s32.totalorder %s437, %s439
      %p446 = scmp.eq.s32.totalorder %s36, 1
      %p447 = por %p445, %p446
      %p448 = scmp.ne.s32.totalorder %s439, %s440
      %p449 = scmp.eq.s32.totalorder %s36, 0
      %p450 = por %p448, %p449
      %p451 = scmp.ne.s32.totalorder %s439, %s440
      %p452 = scmp.eq.s32.totalorder %s37, 1
      %p453 = por %p451, %p452
      %p455 = scmp.ne.s32.totalorder %s440, %s454
      %p456 = scmp.eq.s32.totalorder %s37, 0
      %p457 = por %p455, %p456
      %s459 = sadd.s32 %s458, 1
      %p462 = scmp.eq.s32.totalorder %s31, 1
      %p463 = scmp.ne.s32.totalorder %s458, %s460
      %p464 = scmp.eq.s32.totalorder %s31, 0
      %p465 = por %p463, %p464
      %p466 = scmp.ne.s32.totalorder %s458, %s460
      %p467 = scmp.eq.s32.totalorder %s36, 1
      %p468 = por %p466, %p467
      %p469 = scmp.ne.s32.totalorder %s460, %s461
      %p470 = scmp.eq.s32.totalorder %s36, 0
      %p471 = por %p469, %p470
      %p472 = scmp.ne.s32.totalorder %s460, %s461
      %p473 = scmp.eq.s32.totalorder %s37, 1
      %p474 = por %p472, %p473
      %p476 = scmp.ne.s32.totalorder %s461, %s475
      %p477 = scmp.eq.s32.totalorder %s37, 0
      %p478 = por %p476, %p477
      %s480 = sadd.s32 %s479, 1
      %p483 = scmp.eq.s32.totalorder %s31, 1
      %p484 = scmp.ne.s32.totalorder %s479, %s481
      %p485 = scmp.eq.s32.totalorder %s31, 0
      %p486 = por %p484, %p485
      %p487 = scmp.ne.s32.totalorder %s479, %s481
      %p488 = scmp.eq.s32.totalorder %s36, 1
      %p489 = por %p487, %p488
      %p490 = scmp.ne.s32.totalorder %s481, %s482
      %p491 = scmp.eq.s32.totalorder %s36, 0
      %p492 = por %p490, %p491
      %p493 = scmp.ne.s32.totalorder %s481, %s482
      %p494 = scmp.eq.s32.totalorder %s37, 1
      %p495 = por %p493, %p494
      %p497 = scmp.ne.s32.totalorder %s482, %s496
      %p498 = scmp.eq.s32.totalorder %s37, 0
      %p499 = por %p497, %p498
      %s501 = sadd.s32 %s500, 1
      %p504 = scmp.eq.s32.totalorder %s31, 1
      %p505 = scmp.ne.s32.totalorder %s500, %s502
      %p506 = scmp.eq.s32.totalorder %s31, 0
      %p507 = por %p505, %p506
      %p508 = scmp.ne.s32.totalorder %s500, %s502
      %p509 = scmp.eq.s32.totalorder %s36, 1
      %p510 = por %p508, %p509
      %p511 = scmp.ne.s32.totalorder %s502, %s503
      %p512 = scmp.eq.s32.totalorder %s36, 0
      %p513 = por %p511, %p512
      %p514 = scmp.ne.s32.totalorder %s502, %s503
      %p515 = scmp.eq.s32.totalorder %s37, 1
      %p516 = por %p514, %p515
      %p518 = scmp.ne.s32.totalorder %s503, %s517
      %p519 = scmp.eq.s32.totalorder %s37, 0
      %p520 = por %p518, %p519
      %s521 = ssub.s32 %s31, %s38
      %p522 = scmp.eq.s32.totalorder %s521, 0
      %s524 = sadd.s32 %s523, 1
      %s525 = scalar_select %p522, %s523, %s524
      %p528 = pneg %p522
      %p529 = scmp.eq.s32.totalorder %s31, 1
      %p530 = por %p528, %p529
      %p531 = scmp.ne.s32.totalorder %s523, %s526
      %p532 = scmp.eq.s32.totalorder %s31, 0
      %p533 = por %p531, %p532
      %p534 = scmp.ne.s32.totalorder %s523, %s526
      %p535 = scmp.eq.s32.totalorder %s36, 1
      %p536 = por %p534, %p535
      %p537 = scmp.ne.s32.totalorder %s526, %s527
      %p538 = scmp.eq.s32.totalorder %s36, 0
      %p539 = por %p537, %p538
      %p540 = scmp.ne.s32.totalorder %s526, %s527
      %p541 = scmp.eq.s32.totalorder %s37, 1
      %p542 = por %p540, %p541
      %p544 = scmp.ne.s32.totalorder %s527, %s543
      %p545 = scmp.eq.s32.totalorder %s37, 0
      %p546 = por %p544, %p545
      %p547 = scmp.le.s32.totalorder 1, %s31
      %p548 = scmp.lt.s32.totalorder %s31, 3
      %p549 = pnand %p547, %p548
      %p550 = pneg %p549
      // Predicated region
      $region9: #{det_decoder_forward.1} parent=5 // pred_check
        _
      $region10: #{det_decoder_forward.1} parent=5 // pred_check_branch
        %552 = sbr.rel (%p549) target = $region12
      $region11: #{det_decoder_forward.1} parent=5 // pred_region
        %s553 = ssub.s32 %s31, 1
        // Predicated region
        $region13: #{det_decoder_forward.1} parent=11 // pred_check
          %p554 = pneg %p156
        $region14: #{det_decoder_forward.1} parent=11 // pred_check_branch
          %556 = sbr.rel (%p554) target = $region16
        $region15: #{det_decoder_forward.1} parent=11 // pred_region
          _
        $region16: #{det_decoder_forward.1} parent=11 // pred_fallthru
          _
        // Predicated region
        $region17: #{det_decoder_forward.1} parent=11 // pred_check
          %p557 = pneg %p177
        $region18: #{det_decoder_forward.1} parent=11 // pred_check_branch
          %559 = sbr.rel (%p557) target = $region20
        $region19: #{det_decoder_forward.1} parent=11 // pred_region
          _
        $region20: #{det_decoder_forward.1} parent=11 // pred_fallthru
          _
        // Predicated region
        $region21: #{det_decoder_forward.1} parent=11 // pred_check
          %p560 = pneg %p198
        $region22: #{det_decoder_forward.1} parent=11 // pred_check_branch
          %562 = sbr.rel (%p560) target = $region24
        $region23: #{det_decoder_forward.1} parent=11 // pred_region
          _
        $region24: #{det_decoder_forward.1} parent=11 // pred_fallthru
          _
        // Predicated region
        $region25: #{det_decoder_forward.1} parent=11 // pred_check
          %p563 = pneg %p219
        $region26: #{det_decoder_forward.1} parent=11 // pred_check_branch
          %565 = sbr.rel (%p563) target = $region28
        $region27: #{det_decoder_forward.1} parent=11 // pred_region
          _
        $region28: #{det_decoder_forward.1} parent=11 // pred_fallthru
          _
        // Predicated region
        $region29: #{det_decoder_forward.1} parent=11 // pred_check
          %p566 = pneg %p240
        $region30: #{det_decoder_forward.1} parent=11 // pred_check_branch
          %568 = sbr.rel (%p566) target = $region32
        $region31: #{det_decoder_forward.1} parent=11 // pred_region
          _
        $region32: #{det_decoder_forward.1} parent=11 // pred_fallthru
          _
        // Predicated region
        $region33: #{det_decoder_forward.1} parent=11 // pred_check
          %p569 = pneg %p261
        $region34: #{det_decoder_forward.1} parent=11 // pred_check_branch
          %571 = sbr.rel (%p569) target = $region36
        $region35: #{det_decoder_forward.1} parent=11 // pred_region
          _
        $region36: #{det_decoder_forward.1} parent=11 // pred_fallthru
          _
        // Predicated region
        $region37: #{det_decoder_forward.1} parent=11 // pred_check
          %p572 = pneg %p282
        $region38: #{det_decoder_forward.1} parent=11 // pred_check_branch
          %574 = sbr.rel (%p572) target = $region40
        $region39: #{det_decoder_forward.1} parent=11 // pred_region
          _
        $region40: #{det_decoder_forward.1} parent=11 // pred_fallthru
          _
        // Predicated region
        $region41: #{det_decoder_forward.1} parent=11 // pred_check
          %p575 = pneg %p303
        $region42: #{det_decoder_forward.1} parent=11 // pred_check_branch
          %577 = sbr.rel (%p575) target = $region44
        $region43: #{det_decoder_forward.1} parent=11 // pred_region
          _
        $region44: #{det_decoder_forward.1} parent=11 // pred_fallthru
          _
        // Predicated region
        $region45: #{det_decoder_forward.1} parent=11 // pred_check
          %p578 = pneg %p324
        $region46: #{det_decoder_forward.1} parent=11 // pred_check_branch
          %580 = sbr.rel (%p578) target = $region48
        $region47: #{det_decoder_forward.1} parent=11 // pred_region
          _
        $region48: #{det_decoder_forward.1} parent=11 // pred_fallthru
          _
        // Predicated region
        $region49: #{det_decoder_forward.1} parent=11 // pred_check
          %p581 = pneg %p345
        $region50: #{det_decoder_forward.1} parent=11 // pred_check_branch
          %583 = sbr.rel (%p581) target = $region52
        $region51: #{det_decoder_forward.1} parent=11 // pred_region
          _
        $region52: #{det_decoder_forward.1} parent=11 // pred_fallthru
          _
        // Predicated region
        $region53: #{det_decoder_forward.1} parent=11 // pred_check
          %p584 = pneg %p366
        $region54: #{det_decoder_forward.1} parent=11 // pred_check_branch
          %586 = sbr.rel (%p584) target = $region56
        $region55: #{det_decoder_forward.1} parent=11 // pred_region
          _
        $region56: #{det_decoder_forward.1} parent=11 // pred_fallthru
          _
        // Predicated region
        $region57: #{det_decoder_forward.1} parent=11 // pred_check
          %p587 = pneg %p387
        $region58: #{det_decoder_forward.1} parent=11 // pred_check_branch
          %589 = sbr.rel (%p587) target = $region60
        $region59: #{det_decoder_forward.1} parent=11 // pred_region
          _
        $region60: #{det_decoder_forward.1} parent=11 // pred_fallthru
          _
        // Predicated region
        $region61: #{det_decoder_forward.1} parent=11 // pred_check
          %p590 = pneg %p408
        $region62: #{det_decoder_forward.1} parent=11 // pred_check_branch
          %592 = sbr.rel (%p590) target = $region64
        $region63: #{det_decoder_forward.1} parent=11 // pred_region
          _
        $region64: #{det_decoder_forward.1} parent=11 // pred_fallthru
          _
        // Predicated region
        $region65: #{det_decoder_forward.1} parent=11 // pred_check
          %p593 = pneg %p429
        $region66: #{det_decoder_forward.1} parent=11 // pred_check_branch
          %595 = sbr.rel (%p593) target = $region68
        $region67: #{det_decoder_forward.1} parent=11 // pred_region
          _
        $region68: #{det_decoder_forward.1} parent=11 // pred_fallthru
          _
        // Predicated region
        $region69: #{det_decoder_forward.1} parent=11 // pred_check
          %p596 = pneg %p450
        $region70: #{det_decoder_forward.1} parent=11 // pred_check_branch
          %598 = sbr.rel (%p596) target = $region72
        $region71: #{det_decoder_forward.1} parent=11 // pred_region
          _
        $region72: #{det_decoder_forward.1} parent=11 // pred_fallthru
          _
        // Predicated region
        $region73: #{det_decoder_forward.1} parent=11 // pred_check
          %p599 = pneg %p471
        $region74: #{det_decoder_forward.1} parent=11 // pred_check_branch
          %601 = sbr.rel (%p599) target = $region76
        $region75: #{det_decoder_forward.1} parent=11 // pred_region
          _
        $region76: #{det_decoder_forward.1} parent=11 // pred_fallthru
          _
        // Predicated region
        $region77: #{det_decoder_forward.1} parent=11 // pred_check
          %p602 = pneg %p492
        $region78: #{det_decoder_forward.1} parent=11 // pred_check_branch
          %604 = sbr.rel (%p602) target = $region80
        $region79: #{det_decoder_forward.1} parent=11 // pred_region
          _
        $region80: #{det_decoder_forward.1} parent=11 // pred_fallthru
          _
        // Predicated region
        $region81: #{det_decoder_forward.1} parent=11 // pred_check
          %p605 = pneg %p513
        $region82: #{det_decoder_forward.1} parent=11 // pred_check_branch
          %607 = sbr.rel (%p605) target = $region84
        $region83: #{det_decoder_forward.1} parent=11 // pred_region
          _
        $region84: #{det_decoder_forward.1} parent=11 // pred_fallthru
          _
      $region12: #{det_decoder_forward.1} parent=5 // pred_fallthru
        _
      %p608 = scmp.lt.s32.totalorder %s31, 2
      // Predicated region
      $region85: #{det_decoder_forward.1} parent=5 // pred_check
        %p609 = pneg %p608
      $region86: #{det_decoder_forward.1} parent=5 // pred_check_branch
        %611 = sbr.rel (%p609) target = $region88
      $region87: #{det_decoder_forward.1} parent=5 // pred_region
        // Predicated region
        $region89: #{det_decoder_forward.1} parent=87 // pred_check
          %p612 = pneg %p51
        $region90: #{det_decoder_forward.1} parent=87 // pred_check_branch
          %614 = sbr.rel (%p612) target = $region92
        $region91: #{det_decoder_forward.1} parent=87 // pred_region
          %p615 = scmp.lt.s32.totalorder %s31, 1
          %s616 = scalar_select %p615, %s31, 1
          %s617 = smul.addr %s616, 8
          %s618 = smul.addr %s617, 8
          %s619 = scalar_lea.vmem %s0, %s618
        $region92: #{det_decoder_forward.1} parent=87 // pred_fallthru
          _
        // Predicated region
        $region93: #{det_decoder_forward.1} parent=87 // pred_check
          %p620 = pneg %p77
        $region94: #{det_decoder_forward.1} parent=87 // pred_check_branch
          %622 = sbr.rel (%p620) target = $region96
        $region95: #{det_decoder_forward.1} parent=87 // pred_region
          %p623 = scmp.lt.s32.totalorder %s31, 1
          %s624 = scalar_select %p623, %s31, 1
          %s625 = smul.addr %s624, 8
          %s626 = smul.addr %s625, 8
          %s627 = scalar_lea.vmem %s1, %s626
        $region96: #{det_decoder_forward.1} parent=87 // pred_fallthru
          _
        // Predicated region
        $region97: #{det_decoder_forward.1} parent=87 // pred_check
          %p628 = pneg %p103
        $region98: #{det_decoder_forward.1} parent=87 // pred_check_branch
          %630 = sbr.rel (%p628) target = $region100
        $region99: #{det_decoder_forward.1} parent=87 // pred_region
          %p631 = scmp.lt.s32.totalorder %s31, 1
          %s632 = scalar_select %p631, %s31, 1
          %s633 = smul.addr %s632, 4
          %s634 = smul.addr %s633, 8
          %s635 = scalar_lea.vmem %s2, %s634
        $region100: #{det_decoder_forward.1} parent=87 // pred_fallthru
          _
        // Predicated region
        $region101: #{det_decoder_forward.1} parent=87 // pred_check
          %p636 = pneg %p129
        $region102: #{det_decoder_forward.1} parent=87 // pred_check_branch
          %638 = sbr.rel (%p636) target = $region104
        $region103: #{det_decoder_forward.1} parent=87 // pred_region
          %p639 = scmp.lt.s32.totalorder %s31, 1
          %s640 = scalar_select %p639, %s31, 1
          %s641 = smul.addr %s640, 2
          %s642 = smul.addr %s641, 8
          %s643 = scalar_lea.vmem %s3, %s642
        $region104: #{det_decoder_forward.1} parent=87 // pred_fallthru
          _
      $region88: #{det_decoder_forward.1} parent=5 // pred_fallthru
        _
      %p644 = scmp.le.s32.totalorder 1, %s31
      %p645 = scmp.lt.s32.totalorder %s31, 3
      %p646 = pnand %p644, %p645
      %p647 = pneg %p646
      // Predicated region
      $region105: #{det_decoder_forward.1} parent=5 // pred_check
        _
      $region106: #{det_decoder_forward.1} parent=5 // pred_check_branch
        %649 = sbr.rel (%p646) target = $region108
      $region107: #{det_decoder_forward.1} parent=5 // pred_region
        %s650 = ssub.s32 %s31, 1
        %p651 = scmp.lt.s32.totalorder %s36, 1
        %s652 = scalar_select %p651, %s36, 1
        %s653 = smul.addr %s652, 8
        %s654 = smul.addr %s653, 8
        %s655 = scalar_lea.vmem %s0, %s654
        %p656 = pneg %p57
        %p657 = pneg %p54
        %p658 = scmp.lt.s32.totalorder %s36, 1
        %s659 = scalar_select %p658, %s36, 1
        %s660 = smul.addr %s659, 8
        %s661 = smul.addr %s660, 8
        %s662 = scalar_lea.vmem %s1, %s661
        %p663 = pneg %p83
        %p664 = pneg %p80
        %p665 = scmp.lt.s32.totalorder %s36, 1
        %s666 = scalar_select %p665, %s36, 1
        %s667 = smul.addr %s666, 4
        %s668 = smul.addr %s667, 8
        %s669 = scalar_lea.vmem %s2, %s668
        %p670 = pneg %p109
        %p671 = pneg %p106
        %p672 = scmp.lt.s32.totalorder %s36, 1
        %s673 = scalar_select %p672, %s36, 1
        %s674 = smul.addr %s673, 2
        %s675 = smul.addr %s674, 8
        %s676 = scalar_lea.vmem %s3, %s675
        %p677 = pneg %p135
        %p678 = pneg %p132
        %p679 = pneg %p156
        %p680 = pneg %p153
        %p681 = pneg %p177
        %p682 = pneg %p174
        %p683 = pneg %p198
        %p684 = pneg %p195
        %p685 = pneg %p219
        %p686 = pneg %p216
        %p687 = pneg %p240
        %p688 = pneg %p237
        %p689 = pneg %p261
        %p690 = pneg %p258
        %p691 = pneg %p282
        %p692 = pneg %p279
        %p693 = pneg %p303
        %p694 = pneg %p300
        %p695 = pneg %p324
        %p696 = pneg %p321
        %p697 = pneg %p345
        %p698 = pneg %p342
        %p699 = pneg %p366
        %p700 = pneg %p363
        %p701 = pneg %p387
        %p702 = pneg %p384
        %p703 = pneg %p408
        %p704 = pneg %p405
        %p705 = pneg %p429
        %p706 = pneg %p426
        %p707 = pneg %p450
        %p708 = pneg %p447
        %p709 = pneg %p471
        %p710 = pneg %p468
        %p711 = pneg %p492
        %p712 = pneg %p489
        %p713 = pneg %p513
        %p714 = pneg %p510
        %p715 = pneg %p539
        %p716 = pneg %p536
        %s717 = sand.u32 %s526, 1
        %s718 = scalar_lea.sflag [#allocation4], %s717
        %s719 = sand.u32 %s526, 1
        %s720 = smul.addr %s719, 2
        %s721 = scalar_lea.vmem [#allocation3], %s720
        %p722 = scmp.lt.s32.totalorder %s36, 1
        %s723 = scalar_select %p722, %s36, 1
        %s724 = smul.addr %s723, 8
        %s725 = smul.addr %s724, 8
        %s726 = scalar_lea.vmem %s0, %s725
        %p727 = scmp.lt.s32.totalorder %s36, 1
        %s728 = scalar_select %p727, %s36, 1
        %s729 = smul.addr %s728, 8
        %s730 = smul.addr %s729, 8
        %s731 = scalar_lea.vmem %s1, %s730
        %p732 = scmp.lt.s32.totalorder %s36, 1
        %s733 = scalar_select %p732, %s36, 1
        %s734 = smul.addr %s733, 4
        %s735 = smul.addr %s734, 8
        %s736 = scalar_lea.vmem %s2, %s735
        %p737 = scmp.lt.s32.totalorder %s36, 1
        %s738 = scalar_select %p737, %s36, 1
        %s739 = smul.addr %s738, 2
        %s740 = smul.addr %s739, 8
        %s741 = scalar_lea.vmem %s3, %s740
        %v742 = vld [vmem:[%s726] sm:$0xff]
        %v743 = vld [vmem:[%s726 + $0x8] sm:$0xff]
        %v744 = vld [vmem:[%s726 + $0x10] sm:$0xff]
        %v745 = vld [vmem:[%s726 + $0x18] sm:$0xff]
        %v746 = vld [vmem:[%s726 + $0x20] sm:$0xff]
        %v747 = vld [vmem:[%s726 + $0x28] sm:$0xff]
        %v748 = vld [vmem:[%s726 + $0x30] sm:$0xff]
        %v749 = vld [vmem:[%s726 + $0x38] sm:$0xff]
        %v750 = vld [vmem:[%s731] sm:$0xff]
        %v751 = vld [vmem:[%s731 + $0x8] sm:$0xff]
        %v752 = vld [vmem:[%s731 + $0x10] sm:$0xff]
        %v753 = vld [vmem:[%s731 + $0x18] sm:$0xff]
        %v754 = vld [vmem:[%s731 + $0x20] sm:$0xff]
        %v755 = vld [vmem:[%s731 + $0x28] sm:$0xff]
        %v756 = vld [vmem:[%s731 + $0x30] sm:$0xff]
        %v757 = vld [vmem:[%s731 + $0x38] sm:$0xff]
        %v758 = vadd.f32 %v742, %v750
        %v759 = vadd.f32 %v743, %v751
        %v760 = vadd.f32 %v744, %v752
        %v761 = vadd.f32 %v745, %v753
        %v762 = vadd.f32 %v746, %v754
        %v763 = vadd.f32 %v747, %v755
        %v764 = vadd.f32 %v748, %v756
        %v765 = vadd.f32 %v749, %v757
        %v766 = vld [vmem:[%s4] sm:$0xff]
        %v767 = vld [vmem:[%s4 + $0x8] sm:$0xff]
        %v768 = vld [vmem:[%s4 + $0x10] sm:$0xff]
        %v769 = vld [vmem:[%s4 + $0x18] sm:$0xff]
        %v770 = vld [vmem:[%s4 + $0x20] sm:$0xff]
        %v771 = vld [vmem:[%s4 + $0x28] sm:$0xff]
        %v772 = vld [vmem:[%s4 + $0x30] sm:$0xff]
        %v773 = vld [vmem:[%s4 + $0x38] sm:$0xff]
        %775 = vset.pattern.permute.xlu0 0
        %776 = vperm.xlu0 %775, %v766
        %v777 = vpop.permute.xlu0 %776
        %780 = vset.pattern.permute.xlu0 0
        %781 = vperm.xlu0 %780, %v767
        %v782 = vpop.permute.xlu0 %781
        %785 = vset.pattern.permute.xlu0 0
        %786 = vperm.xlu0 %785, %v768
        %v787 = vpop.permute.xlu0 %786
        %790 = vset.pattern.permute.xlu0 0
        %791 = vperm.xlu0 %790, %v769
        %v792 = vpop.permute.xlu0 %791
        %795 = vset.pattern.permute.xlu0 0
        %796 = vperm.xlu0 %795, %v770
        %v797 = vpop.permute.xlu0 %796
        %800 = vset.pattern.permute.xlu0 0
        %801 = vperm.xlu0 %800, %v771
        %v802 = vpop.permute.xlu0 %801
        %805 = vset.pattern.permute.xlu0 0
        %806 = vperm.xlu0 %805, %v772
        %v807 = vpop.permute.xlu0 %806
        %810 = vset.pattern.permute.xlu0 0
        %811 = vperm.xlu0 %810, %v773
        %v812 = vpop.permute.xlu0 %811
        %v814 = vmul.f32 %v758, %v777
        %v815 = vmul.f32 %v759, %v782
        %v816 = vmul.f32 %v760, %v787
        %v817 = vmul.f32 %v761, %v792
        %v818 = vmul.f32 %v762, %v797
        %v819 = vmul.f32 %v763, %v802
        %v820 = vmul.f32 %v764, %v807
        %v821 = vmul.f32 %v765, %v812
        %v822 = vld [vmem:[%s5] sm:$0xff]
        %v823 = vld [vmem:[%s5 + $0x8] sm:$0xff]
        %v824 = vld [vmem:[%s5 + $0x10] sm:$0xff]
        %v825 = vld [vmem:[%s5 + $0x18] sm:$0xff]
        %v826 = vld [vmem:[%s5 + $0x20] sm:$0xff]
        %v827 = vld [vmem:[%s5 + $0x28] sm:$0xff]
        %v828 = vld [vmem:[%s5 + $0x30] sm:$0xff]
        %v829 = vld [vmem:[%s5 + $0x38] sm:$0xff]
        %831 = vset.pattern.permute.xlu0 0
        %832 = vperm.xlu0 %831, %v822
        %v833 = vpop.permute.xlu0 %832
        %836 = vset.pattern.permute.xlu0 0
        %837 = vperm.xlu0 %836, %v823
        %v838 = vpop.permute.xlu0 %837
        %841 = vset.pattern.permute.xlu0 0
        %842 = vperm.xlu0 %841, %v824
        %v843 = vpop.permute.xlu0 %842
        %846 = vset.pattern.permute.xlu0 0
        %847 = vperm.xlu0 %846, %v825
        %v848 = vpop.permute.xlu0 %847
        %851 = vset.pattern.permute.xlu0 0
        %852 = vperm.xlu0 %851, %v826
        %v853 = vpop.permute.xlu0 %852
        %856 = vset.pattern.permute.xlu0 0
        %857 = vperm.xlu0 %856, %v827
        %v858 = vpop.permute.xlu0 %857
        %861 = vset.pattern.permute.xlu0 0
        %862 = vperm.xlu0 %861, %v828
        %v863 = vpop.permute.xlu0 %862
        %866 = vset.pattern.permute.xlu0 0
        %867 = vperm.xlu0 %866, %v829
        %v868 = vpop.permute.xlu0 %867
        %v870 = vadd.f32 %v814, %v833
        %v871 = vadd.f32 %v815, %v838
        %v872 = vadd.f32 %v816, %v843
        %v873 = vadd.f32 %v817, %v848
        %v874 = vadd.f32 %v818, %v853
        %v875 = vadd.f32 %v819, %v858
        %v876 = vadd.f32 %v820, %v863
        %v877 = vadd.f32 %v821, %v868
        %v878 = vmax.f32 %v870, 0.0
        %v879 = vmax.f32 %v871, 0.0
        %v880 = vmax.f32 %v872, 0.0
        %v881 = vmax.f32 %v873, 0.0
        %v882 = vmax.f32 %v874, 0.0
        %v883 = vmax.f32 %v875, 0.0
        %v884 = vmax.f32 %v876, 0.0
        %v885 = vmax.f32 %v877, 0.0
        %v886 = vlaneseq
        %v887 = vshrl.u32 %v886, 7
        %v888 = vadd.s32 %v887, 8
        %v889 = vlaneseq
        %v890 = vand.u32 %v889, 127
        %v891 = vadd.s32 %v887, 1
        %v892 = vadd.s32 %v888, 1
        %vm893 = vcmp.eq.s32.totalorder %v890, %v891
        %vm894 = vcmp.eq.s32.totalorder %v890, %v892
        %v895 = vsel %vm893, 1, 0
        %v896 = vsel %vm894, 1, 0
        %v897 = vcvt.s32.f32 %v895
        %v898 = vcvt.s32.f32 %v896
        %vm899 = vcmask 130048
        %v901 = vsel %vm899, %v878, 0
        %v904 = vsel %vm899, %v879, 0
        %v907 = vsel %vm899, %v880, 0
        %v910 = vsel %vm899, %v881, 0
        %v913 = vsel %vm899, %v882, 0
        %v916 = vsel %vm899, %v883, 0
        %v919 = vsel %vm899, %v884, 0
        %v922 = vsel %vm899, %v885, 0
        %924 = vmatprep.subr.mxu0 0.0
        %925 = vmatpush1.msra.mxu0 %v897
        %926 = vmatprep.subr.mxu0 0.0
        %927 = vmatpush1.msra.mxu0 %v898
        %928 = vmatprep.subr.mxu0 0.0
        %929 = vmatpush1.msra.mxu0 0.0
        %930 = vmatprep.subr.mxu0 0.0
        %931 = vmatpush1.msra.mxu0 0.0
        %932 = vmatprep.subr.mxu0 0.0
        %933 = vmatpush1.msra.mxu0 0.0
        %934 = vmatprep.subr.mxu0 0.0
        %935 = vmatpush1.msra.mxu0 0.0
        %936 = vmatprep.subr.mxu0 0.0
        %937 = vmatpush1.msra.mxu0 0.0
        %938 = vmatprep.subr.mxu0 0.0
        %939 = vmatpush1.msra.mxu0 0.0
        %940 = vmatprep.subr.mxu0 0.0
        %941 = vmatpush1.msra.mxu0 0.0
        %942 = vmatprep.subr.mxu0 0.0
        %943 = vmatpush1.msra.mxu0 0.0
        %944 = vmatprep.subr.mxu0 0.0
        %945 = vmatpush1.msra.mxu0 0.0
        %946 = vmatprep.subr.mxu0 0.0
        %947 = vmatpush1.msra.mxu0 0.0
        %948 = vmatprep.subr.mxu0 0.0
        %949 = vmatpush1.msra.mxu0 0.0
        %950 = vmatprep.subr.mxu0 0.0
        %951 = vmatpush1.msra.mxu0 0.0
        %952 = vmatprep.subr.mxu0 0.0
        %953 = vmatpush1.msra.mxu0 0.0
        %954 = vmatprep.subr.mxu0 0.0
        %955 = vmatpush1.msra.mxu0 0.0
        %956 = vmatprep.subr.mxu0 0.0
        %957 = vmatpush1.msra.mxu0 0.0
        %958 = vmatprep.subr.mxu0 0.0
        %959 = vmatpush1.msra.mxu0 0.0
        %960 = vmatprep.subr.mxu0 0.0
        %961 = vmatpush1.msra.mxu0 0.0
        %962 = vmatprep.subr.mxu0 0.0
        %963 = vmatpush1.msra.mxu0 0.0
        %964 = vmatprep.subr.mxu0 0.0
        %965 = vmatpush1.msra.mxu0 0.0
        %966 = vmatprep.subr.mxu0 0.0
        %967 = vmatpush1.msra.mxu0 0.0
        %968 = vmatprep.subr.mxu0 0.0
        %969 = vmatpush1.msra.mxu0 0.0
        %970 = vmatprep.subr.mxu0 0.0
        %971 = vmatpush1.msra.mxu0 0.0
        %972 = vmatprep.subr.mxu0 0.0
        %973 = vmatpush1.msra.mxu0 0.0
        %974 = vmatprep.subr.mxu0 0.0
        %975 = vmatpush1.msra.mxu0 0.0
        %976 = vmatprep.subr.mxu0 0.0
        %977 = vmatpush1.msra.mxu0 0.0
        %978 = vmatprep.subr.mxu0 0.0
        %979 = vmatpush1.msra.mxu0 0.0
        %980 = vmatprep.subr.mxu0 0.0
        %981 = vmatpush1.msra.mxu0 0.0
        %982 = vmatprep.subr.mxu0 0.0
        %983 = vmatpush1.msra.mxu0 0.0
        %984 = vmatprep.subr.mxu0 0.0
        %985 = vmatpush1.msra.mxu0 0.0
        %986 = vmatprep.subr.mxu0 0.0
        %987 = vmatpush1.msra.mxu0 0.0
        %988 = vmatprep.mubr.f32.mxu0 0.0
        %989 = vmatmul.mubr.f32.gmra.mrb[0].mxu0 %v901
        %v990 = vpop.f32.mrb[0].mxu0
        %v991 = vadd.f32 0.0, %v990
        %v992 = vpop.f32.mrb[0].mxu0
        %993 = vmatprep.mubr.f32.mxu0 0.0
        %994 = vmatmul.mubr.f32.gmra.mrb[0].mxu0 %v904
        %v995 = vpop.f32.mrb[0].mxu0
        %v996 = vadd.f32 0.0, %v995
        %v997 = vpop.f32.mrb[0].mxu0
        %998 = vmatprep.mubr.f32.mxu0 0.0
        %999 = vmatmul.mubr.f32.gmra.mrb[0].mxu0 %v907
        %v1000 = vpop.f32.mrb[0].mxu0
        %v1001 = vadd.f32 0.0, %v1000
        %v1002 = vpop.f32.mrb[0].mxu0
        %1003 = vmatprep.mubr.f32.mxu0 0.0
        %1004 = vmatmul.mubr.f32.gmra.mrb[0].mxu0 %v910
        %v1005 = vpop.f32.mrb[0].mxu0
        %v1006 = vadd.f32 0.0, %v1005
        %v1007 = vpop.f32.mrb[0].mxu0
        %1008 = vmatprep.mubr.f32.mxu0 0.0
        %1009 = vmatmul.mubr.f32.gmra.mrb[0].mxu0 %v913
        %v1010 = vpop.f32.mrb[0].mxu0
        %v1011 = vadd.f32 0.0, %v1010
        %v1012 = vpop.f32.mrb[0].mxu0
        %1013 = vmatprep.mubr.f32.mxu0 0.0
        %1014 = vmatmul.mubr.f32.gmra.mrb[0].mxu0 %v916
        %v1015 = vpop.f32.mrb[0].mxu0
        %v1016 = vadd.f32 0.0, %v1015
        %v1017 = vpop.f32.mrb[0].mxu0
        %1018 = vmatprep.mubr.f32.mxu0 0.0
        %1019 = vmatmul.mubr.f32.gmra.mrb[0].mxu0 %v919
        %v1020 = vpop.f32.mrb[0].mxu0
        %v1021 = vadd.f32 0.0, %v1020
        %v1022 = vpop.f32.mrb[0].mxu0
        %1023 = vmatprep.mubr.f32.mxu0 0.0
        %1024 = vmatmul.mubr.f32.gmra.mrb[0].mxu0 %v922
        %v1025 = vpop.f32.mrb[0].mxu0
        %v1026 = vadd.f32 0.0, %v1025
        %v1027 = vpop.f32.mrb[0].mxu0
        %1028 = vdwg.mxu0
        %v1029 = vld [vmem:[%s6] sm:$0xff]
        %v1030 = vld [vmem:[%s6 + $0x8] sm:$0xff]
        %v1031 = vld [vmem:[%s6 + $0x10] sm:$0xff]
        %v1032 = vld [vmem:[%s6 + $0x18] sm:$0xff]
        %v1033 = vld [vmem:[%s6 + $0x20] sm:$0xff]
        %v1034 = vld [vmem:[%s6 + $0x28] sm:$0xff]
        %v1035 = vld [vmem:[%s6 + $0x30] sm:$0xff]
        %v1036 = vld [vmem:[%s6 + $0x38] sm:$0xff]
        %v1037 = vld [vmem:[%s6 + $0x40] sm:$0xff]
        %v1038 = vld [vmem:[%s6 + $0x48] sm:$0xff]
        %v1039 = vld [vmem:[%s6 + $0x50] sm:$0xff]
        %v1040 = vld [vmem:[%s6 + $0x58] sm:$0xff]
        %vm1041 = vcmask 523264
        %v1043 = vsel %vm1041, %v1029, 0
        %v1046 = vsel %vm1041, %v1030, 0
        %v1049 = vsel %vm1041, %v1031, 0
        %v1052 = vsel %vm1041, %v1032, 0
        %v1055 = vsel %vm1041, %v1033, 0
        %v1058 = vsel %vm1041, %v1034, 0
        %v1061 = vsel %vm1041, %v1035, 0
        %v1064 = vsel %vm1041, %v1036, 0
        %v1067 = vsel %vm1041, %v1037, 0
        %v1070 = vsel %vm1041, %v1038, 0
        %v1073 = vsel %vm1041, %v1039, 0
        %v1076 = vsel %vm1041, %v1040, 0
        %1078 = vmatprep.subr.mxu0 0.0
        %1079 = vmatpush1.msra.mxu0 %v991
        %1080 = vmatprep.subr.mxu0 0.0
        %1081 = vmatpush1.msra.mxu0 %v996
        %1082 = vmatprep.subr.mxu0 0.0
        %1083 = vmatpush1.msra.mxu0 %v1001
        %1084 = vmatprep.subr.mxu0 0.0
        %1085 = vmatpush1.msra.mxu0 %v1006
        %1086 = vmatprep.subr.mxu0 0.0
        %1087 = vmatpush1.msra.mxu0 %v1011
        %1088 = vmatprep.subr.mxu0 0.0
        %1089 = vmatpush1.msra.mxu0 %v1016
        %1090 = vmatprep.subr.mxu0 0.0
        %1091 = vmatpush1.msra.mxu0 %v1021
        %1092 = vmatprep.subr.mxu0 0.0
        %1093 = vmatpush1.msra.mxu0 %v1026
        %1094 = vmatprep.subr.mxu0 0.0
        %1095 = vmatpush1.msra.mxu0 0.0
        %1096 = vmatprep.subr.mxu0 0.0
        %1097 = vmatpush1.msra.mxu0 0.0
        %1098 = vmatprep.subr.mxu0 0.0
        %1099 = vmatpush1.msra.mxu0 0.0
        %1100 = vmatprep.subr.mxu0 0.0
        %1101 = vmatpush1.msra.mxu0 0.0
        %1102 = vmatprep.subr.mxu0 0.0
        %1103 = vmatpush1.msra.mxu0 0.0
        %1104 = vmatprep.subr.mxu0 0.0
        %1105 = vmatpush1.msra.mxu0 0.0
        %1106 = vmatprep.subr.mxu0 0.0
        %1107 = vmatpush1.msra.mxu0 0.0
        %1108 = vmatprep.subr.mxu0 0.0
        %1109 = vmatpush1.msra.mxu0 0.0
        %1110 = vmatprep.subr.mxu0 0.0
        %1111 = vmatpush1.msra.mxu0 0.0
        %1112 = vmatprep.subr.mxu0 0.0
        %1113 = vmatpush1.msra.mxu0 0.0
        %1114 = vmatprep.subr.mxu0 0.0
        %1115 = vmatpush1.msra.mxu0 0.0
        %1116 = vmatprep.subr.mxu0 0.0
        %1117 = vmatpush1.msra.mxu0 0.0
        %1118 = vmatprep.subr.mxu0 0.0
        %1119 = vmatpush1.msra.mxu0 0.0
        %1120 = vmatprep.subr.mxu0 0.0
        %1121 = vmatpush1.msra.mxu0 0.0
        %1122 = vmatprep.subr.mxu0 0.0
        %1123 = vmatpush1.msra.mxu0 0.0
        %1124 = vmatprep.subr.mxu0 0.0
        %1125 = vmatpush1.msra.mxu0 0.0
        %1126 = vmatprep.subr.mxu0 0.0
        %1127 = vmatpush1.msra.mxu0 0.0
        %1128 = vmatprep.subr.mxu0 0.0
        %1129 = vmatpush1.msra.mxu0 0.0
        %1130 = vmatprep.subr.mxu0 0.0
        %1131 = vmatpush1.msra.mxu0 0.0
        %1132 = vmatprep.subr.mxu0 0.0
        %1133 = vmatpush1.msra.mxu0 0.0
        %1134 = vmatprep.subr.mxu0 0.0
        %1135 = vmatpush1.msra.mxu0 0.0
        %1136 = vmatprep.subr.mxu0 0.0
        %1137 = vmatpush1.msra.mxu0 0.0
        %1138 = vmatprep.subr.mxu0 0.0
        %1139 = vmatpush1.msra.mxu0 0.0
        %1140 = vmatprep.subr.mxu0 0.0
        %1141 = vmatpush1.msra.mxu0 0.0
        %1142 = vmatprep.mubr.f32.mxu0 0.0
        %1143 = vmatmul.mubr.f32.gmra.mrb[0].mxu0 %v1043
        %v1144 = vpop.f32.mrb[0].mxu0
        %v1145 = vadd.f32 0.0, %v1144
        %v1146 = vpop.f32.mrb[0].mxu0
        %1147 = vmatprep.mubr.f32.mxu0 0.0
        %1148 = vmatmul.mubr.f32.gmra.mrb[0].mxu0 %v1046
        %v1149 = vpop.f32.mrb[0].mxu0
        %v1150 = vadd.f32 0.0, %v1149
        %v1151 = vpop.f32.mrb[0].mxu0
        %1152 = vmatprep.mubr.f32.mxu0 0.0
        %1153 = vmatmul.mubr.f32.gmra.mrb[0].mxu0 %v1049
        %v1154 = vpop.f32.mrb[0].mxu0
        %v1155 = vadd.f32 0.0, %v1154
        %v1156 = vpop.f32.mrb[0].mxu0
        %1157 = vmatprep.mubr.f32.mxu0 0.0
        %1158 = vmatmul.mubr.f32.gmra.mrb[0].mxu0 %v1052
        %v1159 = vpop.f32.mrb[0].mxu0
        %v1160 = vadd.f32 0.0, %v1159
        %v1161 = vpop.f32.mrb[0].mxu0
        %1162 = vmatprep.mubr.f32.mxu0 0.0
        %1163 = vmatmul.mubr.f32.gmra.mrb[0].mxu0 %v1055
        %v1164 = vpop.f32.mrb[0].mxu0
        %v1165 = vadd.f32 0.0, %v1164
        %v1166 = vpop.f32.mrb[0].mxu0
        %1167 = vmatprep.mubr.f32.mxu0 0.0
        %1168 = vmatmul.mubr.f32.gmra.mrb[0].mxu0 %v1058
        %v1169 = vpop.f32.mrb[0].mxu0
        %v1170 = vadd.f32 0.0, %v1169
        %v1171 = vpop.f32.mrb[0].mxu0
        %1172 = vmatprep.mubr.f32.mxu0 0.0
        %1173 = vmatmul.mubr.f32.gmra.mrb[0].mxu0 %v1061
        %v1174 = vpop.f32.mrb[0].mxu0
        %v1175 = vadd.f32 0.0, %v1174
        %v1176 = vpop.f32.mrb[0].mxu0
        %1177 = vmatprep.mubr.f32.mxu0 0.0
        %1178 = vmatmul.mubr.f32.gmra.mrb[0].mxu0 %v1064
        %v1179 = vpop.f32.mrb[0].mxu0
        %v1180 = vadd.f32 0.0, %v1179
        %v1181 = vpop.f32.mrb[0].mxu0
        %1182 = vmatprep.mubr.f32.mxu0 0.0
        %1183 = vmatmul.mubr.f32.gmra.mrb[0].mxu0 %v1067
        %v1184 = vpop.f32.mrb[0].mxu0
        %v1185 = vadd.f32 0.0, %v1184
        %v1186 = vpop.f32.mrb[0].mxu0
        %1187 = vmatprep.mubr.f32.mxu0 0.0
        %1188 = vmatmul.mubr.f32.gmra.mrb[0].mxu0 %v1070
        %v1189 = vpop.f32.mrb[0].mxu0
        %v1190 = vadd.f32 0.0, %v1189
        %v1191 = vpop.f32.mrb[0].mxu0
        %1192 = vmatprep.mubr.f32.mxu0 0.0
        %1193 = vmatmul.mubr.f32.gmra.mrb[0].mxu0 %v1073
        %v1194 = vpop.f32.mrb[0].mxu0
        %v1195 = vadd.f32 0.0, %v1194
        %v1196 = vpop.f32.mrb[0].mxu0
        %1197 = vmatprep.mubr.f32.mxu0 0.0
        %1198 = vmatmul.mubr.f32.gmra.mrb[0].mxu0 %v1076
        %v1199 = vpop.f32.mrb[0].mxu0
        %v1200 = vadd.f32 0.0, %v1199
        %v1201 = vpop.f32.mrb[0].mxu0
        %1202 = vdwg.mxu0
        %vm1203 = vcmask 146432
        %1204 = vst.msk [vmem:[#allocation2] sm:$0xff] %vm1203, %v1145
        %1205 = vst.msk [vmem:[#allocation2 + $0x10] sm:$0xff] %vm1203, %v1150
        %1206 = vst.msk [vmem:[#allocation2 + $0x20] sm:$0xff] %vm1203, %v1155
        %1207 = vst.msk [vmem:[#allocation2 + $0x30] sm:$0xff] %vm1203, %v1160
        %1208 = vst.msk [vmem:[#allocation2 + $0x40] sm:$0xff] %vm1203, %v1165
        %1209 = vst.msk [vmem:[#allocation2 + $0x50] sm:$0xff] %vm1203, %v1170
        %1210 = vst.msk [vmem:[#allocation2 + $0x60] sm:$0xff] %vm1203, %v1175
        %1211 = vst.msk [vmem:[#allocation2 + $0x70] sm:$0xff] %vm1203, %v1180
        %1212 = vst.msk [vmem:[#allocation2 + $0x80] sm:$0xff] %vm1203, %v1185
        %1213 = vst.msk [vmem:[#allocation2 + $0x90] sm:$0xff] %vm1203, %v1190
        %1214 = vst.msk [vmem:[#allocation2 + $0xa0] sm:$0xff] %vm1203, %v1195
        %1215 = vst.msk [vmem:[#allocation2 + $0xb0] sm:$0xff] %vm1203, %v1200
        %v1216 = vld [vmem:[#allocation2] sm:$0xff]
        %v1217 = vld [vmem:[#allocation2 + $0x10] sm:$0xff]
        %v1218 = vld [vmem:[#allocation2 + $0x20] sm:$0xff]
        %v1219 = vld [vmem:[#allocation2 + $0x30] sm:$0xff]
        %v1220 = vld [vmem:[#allocation2 + $0x40] sm:$0xff]
        %v1221 = vld [vmem:[#allocation2 + $0x50] sm:$0xff]
        %v1222 = vld [vmem:[#allocation2 + $0x60] sm:$0xff]
        %v1223 = vld [vmem:[#allocation2 + $0x70] sm:$0xff]
        %1228 = vrot.lane.b32.xlu0 %v1220, 127
        %v1229 = vpop.permute.xlu0 %1228
        %1230 = vrot.lane.b32.xlu0 %v1221, 127
        %v1231 = vpop.permute.xlu0 %1230
        %1232 = vrot.lane.b32.xlu0 %v1222, 127
        %v1233 = vpop.permute.xlu0 %1232
        %1234 = vrot.lane.b32.xlu0 %v1223, 127
        %v1235 = vpop.permute.xlu0 %1234
        %v1240 = vadd.f32 %v1216, %v1229
        %v1241 = vadd.f32 %v1217, %v1231
        %v1242 = vadd.f32 %v1218, %v1233
        %v1243 = vadd.f32 %v1219, %v1235
        %v1244 = vld [vmem:[#allocation2 + $0x80] sm:$0xff]
        %v1245 = vld [vmem:[#allocation2 + $0x90] sm:$0xff]
        %v1246 = vld [vmem:[#allocation2 + $0xa0] sm:$0xff]
        %v1247 = vld [vmem:[#allocation2 + $0xb0] sm:$0xff]
        %1252 = vrot.lane.b32.xlu0 %v1244, 126
        %v1253 = vpop.permute.xlu0 %1252
        %1254 = vrot.lane.b32.xlu0 %v1245, 126
        %v1255 = vpop.permute.xlu0 %1254
        %1256 = vrot.lane.b32.xlu0 %v1246, 126
        %v1257 = vpop.permute.xlu0 %1256
        %1258 = vrot.lane.b32.xlu0 %v1247, 126
        %v1259 = vpop.permute.xlu0 %1258
        %v1264 = vadd.f32 %v1240, %v1253
        %v1265 = vadd.f32 %v1241, %v1255
        %v1266 = vadd.f32 %v1242, %v1257
        %v1267 = vadd.f32 %v1243, %v1259
        %v1268 = vld [vmem:[%s7] sm:$0xff]
        %v1269 = vld [vmem:[%s7 + $0x8] sm:$0xff]
        %v1270 = vld [vmem:[%s7 + $0x10] sm:$0xff]
        %v1271 = vld [vmem:[%s7 + $0x18] sm:$0xff]
        %1273 = vset.pattern.permute.xlu0 0
        %1274 = vperm.xlu0 %1273, %v1268
        %v1275 = vpop.permute.xlu0 %1274
        %1278 = vset.pattern.permute.xlu0 0
        %1279 = vperm.xlu0 %1278, %v1269
        %v1280 = vpop.permute.xlu0 %1279
        %1283 = vset.pattern.permute.xlu0 0
        %1284 = vperm.xlu0 %1283, %v1270
        %v1285 = vpop.permute.xlu0 %1284
        %1288 = vset.pattern.permute.xlu0 0
        %1289 = vperm.xlu0 %1288, %v1271
        %v1290 = vpop.permute.xlu0 %1289
        %v1292 = vadd.f32 %v1264, %v1275
        %v1293 = vadd.f32 %v1265, %v1280
        %v1294 = vadd.f32 %v1266, %v1285
        %v1295 = vadd.f32 %v1267, %v1290
        %v1296 = vmax.f32 %v1292, 0.0
        %v1297 = vmax.f32 %v1293, 0.0
        %v1298 = vmax.f32 %v1294, 0.0
        %v1299 = vmax.f32 %v1295, 0.0
        %v1300 = vld [vmem:[%s736] sm:$0xff]
        %v1301 = vld [vmem:[%s736 + $0x8] sm:$0xff]
        %v1302 = vld [vmem:[%s736 + $0x10] sm:$0xff]
        %v1303 = vld [vmem:[%s736 + $0x18] sm:$0xff]
        %v1304 = vmul.u32 %v887, 2
        %v1305 = vmul.u32 %v888, 2
        %v1306 = vadd.s32 %v1304, 2
        %v1307 = vadd.s32 %v1305, 2
        %vm1308 = vcmp.eq.s32.totalorder %v890, %v1306
        %vm1309 = vcmp.eq.s32.totalorder %v890, %v1307
        %v1310 = vsel %vm1308, 1, 0
        %v1311 = vsel %vm1309, 1, 0
        %v1312 = vcvt.s32.f32 %v1310
        %v1313 = vcvt.s32.f32 %v1311
        %v1315 = vsel %vm899, %v1296, 0
        %v1318 = vsel %vm899, %v1297, 0
        %v1321 = vsel %vm899, %v1298, 0
        %v1324 = vsel %vm899, %v1299, 0
        %1326 = vmatprep.subr.mxu0 0.0
        %1327 = vmatpush1.msra.mxu0 %v1312
        %1328 = vmatprep.subr.mxu0 0.0
        %1329 = vmatpush1.msra.mxu0 %v1313
        %1330 = vmatprep.subr.mxu0 0.0
        %1331 = vmatpush1.msra.mxu0 0.0
        %1332 = vmatprep.subr.mxu0 0.0
        %1333 = vmatpush1.msra.mxu0 0.0
        %1334 = vmatprep.subr.mxu0 0.0
        %1335 = vmatpush1.msra.mxu0 0.0
        %1336 = vmatprep.subr.mxu0 0.0
        %1337 = vmatpush1.msra.mxu0 0.0
        %1338 = vmatprep.subr.mxu0 0.0
        %1339 = vmatpush1.msra.mxu0 0.0
        %1340 = vmatprep.subr.mxu0 0.0
        %1341 = vmatpush1.msra.mxu0 0.0
        %1342 = vmatprep.subr.mxu0 0.0
        %1343 = vmatpush1.msra.mxu0 0.0
        %1344 = vmatprep.subr.mxu0 0.0
        %1345 = vmatpush1.msra.mxu0 0.0
        %1346 = vmatprep.subr.mxu0 0.0
        %1347 = vmatpush1.msra.mxu0 0.0
        %1348 = vmatprep.subr.mxu0 0.0
        %1349 = vmatpush1.msra.mxu0 0.0
        %1350 = vmatprep.subr.mxu0 0.0
        %1351 = vmatpush1.msra.mxu0 0.0
        %1352 = vmatprep.subr.mxu0 0.0
        %1353 = vmatpush1.msra.mxu0 0.0
        %1354 = vmatprep.subr.mxu0 0.0
        %1355 = vmatpush1.msra.mxu0 0.0
        %1356 = vmatprep.subr.mxu0 0.0
        %1357 = vmatpush1.msra.mxu0 0.0
        %1358 = vmatprep.subr.mxu0 0.0
        %1359 = vmatpush1.msra.mxu0 0.0
        %1360 = vmatprep.subr.mxu0 0.0
        %1361 = vmatpush1.msra.mxu0 0.0
        %1362 = vmatprep.subr.mxu0 0.0
        %1363 = vmatpush1.msra.mxu0 0.0
        %1364 = vmatprep.subr.mxu0 0.0
        %1365 = vmatpush1.msra.mxu0 0.0
        %1366 = vmatprep.subr.mxu0 0.0
        %1367 = vmatpush1.msra.mxu0 0.0
        %1368 = vmatprep.subr.mxu0 0.0
        %1369 = vmatpush1.msra.mxu0 0.0
        %1370 = vmatprep.subr.mxu0 0.0
        %1371 = vmatpush1.msra.mxu0 0.0
        %1372 = vmatprep.subr.mxu0 0.0
        %1373 = vmatpush1.msra.mxu0 0.0
        %1374 = vmatprep.subr.mxu0 0.0
        %1375 = vmatpush1.msra.mxu0 0.0
        %1376 = vmatprep.subr.mxu0 0.0
        %1377 = vmatpush1.msra.mxu0 0.0
        %1378 = vmatprep.subr.mxu0 0.0
        %1379 = vmatpush1.msra.mxu0 0.0
        %1380 = vmatprep.subr.mxu0 0.0
        %1381 = vmatpush1.msra.mxu0 0.0
        %1382 = vmatprep.subr.mxu0 0.0
        %1383 = vmatpush1.msra.mxu0 0.0
        %1384 = vmatprep.subr.mxu0 0.0
        %1385 = vmatpush1.msra.mxu0 0.0
        %1386 = vmatprep.subr.mxu0 0.0
        %1387 = vmatpush1.msra.mxu0 0.0
        %1388 = vmatprep.subr.mxu0 0.0
        %1389 = vmatpush1.msra.mxu0 0.0
        %1390 = vmatprep.mubr.f32.mxu0 0.0
        %1391 = vmatmul.mubr.f32.gmra.mrb[0].mxu0 %v1315
        %v1392 = vpop.f32.mrb[0].mxu0
        %v1393 = vadd.f32 0.0, %v1392
        %v1394 = vpop.f32.mrb[0].mxu0
        %1395 = vmatprep.mubr.f32.mxu0 0.0
        %1396 = vmatmul.mubr.f32.gmra.mrb[0].mxu0 %v1318
        %v1397 = vpop.f32.mrb[0].mxu0
        %v1398 = vadd.f32 0.0, %v1397
        %v1399 = vpop.f32.mrb[0].mxu0
        %1400 = vmatprep.mubr.f32.mxu0 0.0
        %1401 = vmatmul.mubr.f32.gmra.mrb[0].mxu0 %v1321
        %v1402 = vpop.f32.mrb[0].mxu0
        %v1403 = vadd.f32 0.0, %v1402
        %v1404 = vpop.f32.mrb[0].mxu0
        %1405 = vmatprep.mubr.f32.mxu0 0.0
        %1406 = vmatmul.mubr.f32.gmra.mrb[0].mxu0 %v1324
        %v1407 = vpop.f32.mrb[0].mxu0
        %v1408 = vadd.f32 0.0, %v1407
        %v1409 = vpop.f32.mrb[0].mxu0
        %1410 = vdwg.mxu0
        %v1411 = vld [vmem:[%s8] sm:$0xff]
        %v1412 = vld [vmem:[%s8 + $0x8] sm:$0xff]
        %v1413 = vld [vmem:[%s8 + $0x10] sm:$0xff]
        %v1414 = vld [vmem:[%s8 + $0x18] sm:$0xff]
        %v1415 = vld [vmem:[%s8 + $0x20] sm:$0xff]
        %v1416 = vld [vmem:[%s8 + $0x28] sm:$0xff]
        %v1417 = vld [vmem:[%s8 + $0x30] sm:$0xff]
        %v1418 = vld [vmem:[%s8 + $0x38] sm:$0xff]
        %v1419 = vld [vmem:[%s8 + $0x40] sm:$0xff]
        %v1420 = vld [vmem:[%s8 + $0x48] sm:$0xff]
        %v1421 = vld [vmem:[%s8 + $0x50] sm:$0xff]
        %v1422 = vld [vmem:[%s8 + $0x58] sm:$0xff]
        %v1423 = vld [vmem:[%s8 + $0x60] sm:$0xff]
        %v1424 = vld [vmem:[%s8 + $0x68] sm:$0xff]
        %v1425 = vld [vmem:[%s8 + $0x70] sm:$0xff]
        %v1426 = vld [vmem:[%s8 + $0x78] sm:$0xff]
        %v1427 = vld [vmem:[%s8 + $0x80] sm:$0xff]
        %v1428 = vld [vmem:[%s8 + $0x88] sm:$0xff]
        %v1429 = vld [vmem:[%s8 + $0x90] sm:$0xff]
        %v1430 = vld [vmem:[%s8 + $0x98] sm:$0xff]
        %vm1431 = vcmask 261120
        %v1433 = vsel %vm1431, %v1411, 0
        %v1436 = vsel %vm1431, %v1412, 0
        %v1439 = vsel %vm1431, %v1413, 0
        %v1442 = vsel %vm1431, %v1414, 0
        %v1445 = vsel %vm1431, %v1415, 0
        %v1448 = vsel %vm1431, %v1416, 0
        %v1451 = vsel %vm1431, %v1417, 0
        %v1454 = vsel %vm1431, %v1418, 0
        %v1457 = vsel %vm1431, %v1419, 0
        %v1460 = vsel %vm1431, %v1420, 0
        %v1463 = vsel %vm1431, %v1421, 0
        %v1466 = vsel %vm1431, %v1422, 0
        %v1469 = vsel %vm1431, %v1423, 0
        %v1472 = vsel %vm1431, %v1424, 0
        %v1475 = vsel %vm1431, %v1425, 0
        %v1478 = vsel %vm1431, %v1426, 0
        %v1481 = vsel %vm1431, %v1427, 0
        %v1484 = vsel %vm1431, %v1428, 0
        %v1487 = vsel %vm1431, %v1429, 0
        %v1490 = vsel %vm1431, %v1430, 0
        %1492 = vmatprep.subr.mxu0 0.0
        %1493 = vmatpush1.msra.mxu0 %v1393
        %1494 = vmatprep.subr.mxu0 0.0
        %1495 = vmatpush1.msra.mxu0 %v1398
        %1496 = vmatprep.subr.mxu0 0.0
        %1497 = vmatpush1.msra.mxu0 %v1403
        %1498 = vmatprep.subr.mxu0 0.0
        %1499 = vmatpush1.msra.mxu0 %v1408
        %1500 = vmatprep.subr.mxu0 0.0
        %1501 = vmatpush1.msra.mxu0 0.0
        %1502 = vmatprep.subr.mxu0 0.0
        %1503 = vmatpush1.msra.mxu0 0.0
        %1504 = vmatprep.subr.mxu0 0.0
        %1505 = vmatpush1.msra.mxu0 0.0
        %1506 = vmatprep.subr.mxu0 0.0
        %1507 = vmatpush1.msra.mxu0 0.0
        %1508 = vmatprep.subr.mxu0 0.0
        %1509 = vmatpush1.msra.mxu0 0.0
        %1510 = vmatprep.subr.mxu0 0.0
        %1511 = vmatpush1.msra.mxu0 0.0
        %1512 = vmatprep.subr.mxu0 0.0
        %1513 = vmatpush1.msra.mxu0 0.0
        %1514 = vmatprep.subr.mxu0 0.0
        %1515 = vmatpush1.msra.mxu0 0.0
        %1516 = vmatprep.subr.mxu0 0.0
        %1517 = vmatpush1.msra.mxu0 0.0
        %1518 = vmatprep.subr.mxu0 0.0
        %1519 = vmatpush1.msra.mxu0 0.0
        %1520 = vmatprep.subr.mxu0 0.0
        %1521 = vmatpush1.msra.mxu0 0.0
        %1522 = vmatprep.subr.mxu0 0.0
        %1523 = vmatpush1.msra.mxu0 0.0
        %1524 = vmatprep.subr.mxu0 0.0
        %1525 = vmatpush1.msra.mxu0 0.0
        %1526 = vmatprep.subr.mxu0 0.0
        %1527 = vmatpush1.msra.mxu0 0.0
        %1528 = vmatprep.subr.mxu0 0.0
        %1529 = vmatpush1.msra.mxu0 0.0
        %1530 = vmatprep.subr.mxu0 0.0
        %1531 = vmatpush1.msra.mxu0 0.0
        %1532 = vmatprep.subr.mxu0 0.0
        %1533 = vmatpush1.msra.mxu0 0.0
        %1534 = vmatprep.subr.mxu0 0.0
        %1535 = vmatpush1.msra.mxu0 0.0
        %1536 = vmatprep.subr.mxu0 0.0
        %1537 = vmatpush1.msra.mxu0 0.0
        %1538 = vmatprep.subr.mxu0 0.0
        %1539 = vmatpush1.msra.mxu0 0.0
        %1540 = vmatprep.subr.mxu0 0.0
        %1541 = vmatpush1.msra.mxu0 0.0
        %1542 = vmatprep.subr.mxu0 0.0
        %1543 = vmatpush1.msra.mxu0 0.0
        %1544 = vmatprep.subr.mxu0 0.0
        %1545 = vmatpush1.msra.mxu0 0.0
        %1546 = vmatprep.subr.mxu0 0.0
        %1547 = vmatpush1.msra.mxu0 0.0
        %1548 = vmatprep.subr.mxu0 0.0
        %1549 = vmatpush1.msra.mxu0 0.0
        %1550 = vmatprep.subr.mxu0 0.0
        %1551 = vmatpush1.msra.mxu0 0.0
        %1552 = vmatprep.subr.mxu0 0.0
        %1553 = vmatpush1.msra.mxu0 0.0
        %1554 = vmatprep.subr.mxu0 0.0
        %1555 = vmatpush1.msra.mxu0 0.0
        %1556 = vmatprep.mubr.f32.mxu0 0.0
        %1557 = vmatmul.mubr.f32.gmra.mrb[0].mxu0 %v1433
        %v1558 = vpop.f32.mrb[0].mxu0
        %v1559 = vadd.f32 0.0, %v1558
        %v1560 = vpop.f32.mrb[0].mxu0
        %1561 = vmatprep.mubr.f32.mxu0 0.0
        %1562 = vmatmul.mubr.f32.gmra.mrb[0].mxu0 %v1436
        %v1563 = vpop.f32.mrb[0].mxu0
        %v1564 = vadd.f32 0.0, %v1563
        %v1565 = vpop.f32.mrb[0].mxu0
        %1566 = vmatprep.mubr.f32.mxu0 0.0
        %1567 = vmatmul.mubr.f32.gmra.mrb[0].mxu0 %v1439
        %v1568 = vpop.f32.mrb[0].mxu0
        %v1569 = vadd.f32 0.0, %v1568
        %v1570 = vpop.f32.mrb[0].mxu0
        %1571 = vmatprep.mubr.f32.mxu0 0.0
        %1572 = vmatmul.mubr.f32.gmra.mrb[0].mxu0 %v1442
        %v1573 = vpop.f32.mrb[0].mxu0
        %v1574 = vadd.f32 0.0, %v1573
        %v1575 = vpop.f32.mrb[0].mxu0
        %1576 = vmatprep.mubr.f32.mxu0 0.0
        %1577 = vmatmul.mubr.f32.gmra.mrb[0].mxu0 %v1445
        %v1578 = vpop.f32.mrb[0].mxu0
        %v1579 = vadd.f32 0.0, %v1578
        %v1580 = vpop.f32.mrb[0].mxu0
        %1581 = vmatprep.mubr.f32.mxu0 0.0
        %1582 = vmatmul.mubr.f32.gmra.mrb[0].mxu0 %v1448
        %v1583 = vpop.f32.mrb[0].mxu0
        %v1584 = vadd.f32 0.0, %v1583
        %v1585 = vpop.f32.mrb[0].mxu0
        %1586 = vmatprep.mubr.f32.mxu0 0.0
        %1587 = vmatmul.mubr.f32.gmra.mrb[0].mxu0 %v1451
        %v1588 = vpop.f32.mrb[0].mxu0
        %v1589 = vadd.f32 0.0, %v1588
        %v1590 = vpop.f32.mrb[0].mxu0
        %1591 = vmatprep.mubr.f32.mxu0 0.0
        %1592 = vmatmul.mubr.f32.gmra.mrb[0].mxu0 %v1454
        %v1593 = vpop.f32.mrb[0].mxu0
        %v1594 = vadd.f32 0.0, %v1593
        %v1595 = vpop.f32.mrb[0].mxu0
        %1596 = vmatprep.mubr.f32.mxu0 0.0
        %1597 = vmatmul.mubr.f32.gmra.mrb[0].mxu0 %v1457
        %v1598 = vpop.f32.mrb[0].mxu0
        %v1599 = vadd.f32 0.0, %v1598
        %v1600 = vpop.f32.mrb[0].mxu0
        %1601 = vmatprep.mubr.f32.mxu0 0.0
        %1602 = vmatmul.mubr.f32.gmra.mrb[0].mxu0 %v1460
        %v1603 = vpop.f32.mrb[0].mxu0
        %v1604 = vadd.f32 0.0, %v1603
        %v1605 = vpop.f32.mrb[0].mxu0
        %1606 = vmatprep.mubr.f32.mxu0 0.0
        %1607 = vmatmul.mubr.f32.gmra.mrb[0].mxu0 %v1463
        %v1608 = vpop.f32.mrb[0].mxu0
        %v1609 = vadd.f32 0.0, %v1608
        %v1610 = vpop.f32.mrb[0].mxu0
        %1611 = vmatprep.mubr.f32.mxu0 0.0
        %1612 = vmatmul.mubr.f32.gmra.mrb[0].mxu0 %v1466
        %v1613 = vpop.f32.mrb[0].mxu0
        %v1614 = vadd.f32 0.0, %v1613
        %v1615 = vpop.f32.mrb[0].mxu0
        %1616 = vmatprep.mubr.f32.mxu0 0.0
        %1617 = vmatmul.mubr.f32.gmra.mrb[0].mxu0 %v1469
        %v1618 = vpop.f32.mrb[0].mxu0
        %v1619 = vadd.f32 0.0, %v1618
        %v1620 = vpop.f32.mrb[0].mxu0
        %1621 = vmatprep.mubr.f32.mxu0 0.0
        %1622 = vmatmul.mubr.f32.gmra.mrb[0].mxu0 %v1472
        %v1623 = vpop.f32.mrb[0].mxu0
        %v1624 = vadd.f32 0.0, %v1623
        %v1625 = vpop.f32.mrb[0].mxu0
        %1626 = vmatprep.mubr.f32.mxu0 0.0
        %1627 = vmatmul.mubr.f32.gmra.mrb[0].mxu0 %v1475
        %v1628 = vpop.f32.mrb[0].mxu0
        %v1629 = vadd.f32 0.0, %v1628
        %v1630 = vpop.f32.mrb[0].mxu0
        %1631 = vmatprep.mubr.f32.mxu0 0.0
        %1632 = vmatmul.mubr.f32.gmra.mrb[0].mxu0 %v1478
        %v1633 = vpop.f32.mrb[0].mxu0
        %v1634 = vadd.f32 0.0, %v1633
        %v1635 = vpop.f32.mrb[0].mxu0
        %1636 = vmatprep.mubr.f32.mxu0 0.0
        %1637 = vmatmul.mubr.f32.gmra.mrb[0].mxu0 %v1481
        %v1638 = vpop.f32.mrb[0].mxu0
        %v1639 = vadd.f32 0.0, %v1638
        %v1640 = vpop.f32.mrb[0].mxu0
        %1641 = vmatprep.mubr.f32.mxu0 0.0
        %1642 = vmatmul.mubr.f32.gmra.mrb[0].mxu0 %v1484
        %v1643 = vpop.f32.mrb[0].mxu0
        %v1644 = vadd.f32 0.0, %v1643
        %v1645 = vpop.f32.mrb[0].mxu0
        %1646 = vmatprep.mubr.f32.mxu0 0.0
        %1647 = vmatmul.mubr.f32.gmra.mrb[0].mxu0 %v1487
        %v1648 = vpop.f32.mrb[0].mxu0
        %v1649 = vadd.f32 0.0, %v1648
        %v1650 = vpop.f32.mrb[0].mxu0
        %1651 = vmatprep.mubr.f32.mxu0 0.0
        %1652 = vmatmul.mubr.f32.gmra.mrb[0].mxu0 %v1490
        %v1653 = vpop.f32.mrb[0].mxu0
        %v1654 = vadd.f32 0.0, %v1653
        %v1655 = vpop.f32.mrb[0].mxu0
        %1656 = vdwg.mxu0
        %vm1657 = vcmask 293888
        %1658 = vst.msk [vmem:[#allocation2] sm:$0xff] %vm1657, %v1559
        %1659 = vst.msk [vmem:[#allocation2 + $0x10] sm:$0xff] %vm1657, %v1564
        %1660 = vst.msk [vmem:[#allocation2 + $0x20] sm:$0xff] %vm1657, %v1569
        %1661 = vst.msk [vmem:[#allocation2 + $0x30] sm:$0xff] %vm1657, %v1574
        %1662 = vst.msk [vmem:[#allocation2 + $0x40] sm:$0xff] %vm1657, %v1579
        %1663 = vst.msk [vmem:[#allocation2 + $0x50] sm:$0xff] %vm1657, %v1584
        %1664 = vst.msk [vmem:[#allocation2 + $0x60] sm:$0xff] %vm1657, %v1589
        %1665 = vst.msk [vmem:[#allocation2 + $0x70] sm:$0xff] %vm1657, %v1594
        %1666 = vst.msk [vmem:[#allocation2 + $0x80] sm:$0xff] %vm1657, %v1599
        %1667 = vst.msk [vmem:[#allocation2 + $0x90] sm:$0xff] %vm1657, %v1604
        %1668 = vst.msk [vmem:[#allocation2 + $0xa0] sm:$0xff] %vm1657, %v1609
        %1669 = vst.msk [vmem:[#allocation2 + $0xb0] sm:$0xff] %vm1657, %v1614
        %1670 = vst.msk [vmem:[#allocation2 + $0xc0] sm:$0xff] %vm1657, %v1619
        %1671 = vst.msk [vmem:[#allocation2 + $0xd0] sm:$0xff] %vm1657, %v1624
        %1672 = vst.msk [vmem:[#allocation2 + $0xe0] sm:$0xff] %vm1657, %v1629
        %1673 = vst.msk [vmem:[#allocation2 + $0xf0] sm:$0xff] %vm1657, %v1634
        %1674 = vst.msk [vmem:[#allocation2 + $0x100] sm:$0xff] %vm1657, %v1639
        %1675 = vst.msk [vmem:[#allocation2 + $0x110] sm:$0xff] %vm1657, %v1644
        %1676 = vst.msk [vmem:[#allocation2 + $0x120] sm:$0xff] %vm1657, %v1649
        %1677 = vst.msk [vmem:[#allocation2 + $0x130] sm:$0xff] %vm1657, %v1654
        %v1678 = vld [vmem:[#allocation2] sm:$0xff]
        %v1679 = vld [vmem:[#allocation2 + $0x10] sm:$0xff]
        %v1680 = vld [vmem:[#allocation2 + $0x20] sm:$0xff]
        %v1681 = vld [vmem:[#allocation2 + $0x30] sm:$0xff]
        %v1682 = vld [vmem:[#allocation2 + $0x40] sm:$0xff]
        %v1683 = vld [vmem:[#allocation2 + $0x50] sm:$0xff]
        %v1684 = vld [vmem:[#allocation2 + $0x60] sm:$0xff]
        %v1685 = vld [vmem:[#allocation2 + $0x70] sm:$0xff]
        %1690 = vrot.lane.b32.xlu0 %v1682, 127
        %v1691 = vpop.permute.xlu0 %1690
        %1692 = vrot.lane.b32.xlu0 %v1683, 127
        %v1693 = vpop.permute.xlu0 %1692
        %1694 = vrot.lane.b32.xlu0 %v1684, 127
        %v1695 = vpop.permute.xlu0 %1694
        %1696 = vrot.lane.b32.xlu0 %v1685, 127
        %v1697 = vpop.permute.xlu0 %1696
        %v1702 = vadd.f32 %v1678, %v1691
        %v1703 = vadd.f32 %v1679, %v1693
        %v1704 = vadd.f32 %v1680, %v1695
        %v1705 = vadd.f32 %v1681, %v1697
        %v1706 = vld [vmem:[#allocation2 + $0x80] sm:$0xff]
        %v1707 = vld [vmem:[#allocation2 + $0x90] sm:$0xff]
        %v1708 = vld [vmem:[#allocation2 + $0xa0] sm:$0xff]
        %v1709 = vld [vmem:[#allocation2 + $0xb0] sm:$0xff]
        %1714 = vrot.lane.b32.xlu0 %v1706, 126
        %v1715 = vpop.permute.xlu0 %1714
        %1716 = vrot.lane.b32.xlu0 %v1707, 126
        %v1717 = vpop.permute.xlu0 %1716
        %1718 = vrot.lane.b32.xlu0 %v1708, 126
        %v1719 = vpop.permute.xlu0 %1718
        %1720 = vrot.lane.b32.xlu0 %v1709, 126
        %v1721 = vpop.permute.xlu0 %1720
        %v1726 = vadd.f32 %v1702, %v1715
        %v1727 = vadd.f32 %v1703, %v1717
        %v1728 = vadd.f32 %v1704, %v1719
        %v1729 = vadd.f32 %v1705, %v1721
        %v1730 = vld [vmem:[#allocation2 + $0xc0] sm:$0xff]
        %v1731 = vld [vmem:[#allocation2 + $0xd0] sm:$0xff]
        %v1732 = vld [vmem:[#allocation2 + $0xe0] sm:$0xff]
        %v1733 = vld [vmem:[#allocation2 + $0xf0] sm:$0xff]
        %1738 = vrot.lane.b32.xlu0 %v1730, 125
        %v1739 = vpop.permute.xlu0 %1738
        %1740 = vrot.lane.b32.xlu0 %v1731, 125
        %v1741 = vpop.permute.xlu0 %1740
        %1742 = vrot.lane.b32.xlu0 %v1732, 125
        %v1743 = vpop.permute.xlu0 %1742
        %1744 = vrot.lane.b32.xlu0 %v1733, 125
        %v1745 = vpop.permute.xlu0 %1744
        %v1750 = vadd.f32 %v1726, %v1739
        %v1751 = vadd.f32 %v1727, %v1741
        %v1752 = vadd.f32 %v1728, %v1743
        %v1753 = vadd.f32 %v1729, %v1745
        %v1754 = vld [vmem:[#allocation2 + $0x100] sm:$0xff]
        %v1755 = vld [vmem:[#allocation2 + $0x110] sm:$0xff]
        %v1756 = vld [vmem:[#allocation2 + $0x120] sm:$0xff]
        %v1757 = vld [vmem:[#allocation2 + $0x130] sm:$0xff]
        %1762 = vrot.lane.b32.xlu0 %v1754, 124
        %v1763 = vpop.permute.xlu0 %1762
        %1764 = vrot.lane.b32.xlu0 %v1755, 124
        %v1765 = vpop.permute.xlu0 %1764
        %1766 = vrot.lane.b32.xlu0 %v1756, 124
        %v1767 = vpop.permute.xlu0 %1766
        %1768 = vrot.lane.b32.xlu0 %v1757, 124
        %v1769 = vpop.permute.xlu0 %1768
        %v1774 = vadd.f32 %v1750, %v1763
        %v1775 = vadd.f32 %v1751, %v1765
        %v1776 = vadd.f32 %v1752, %v1767
        %v1777 = vadd.f32 %v1753, %v1769
        %v1778 = vadd.f32 %v1774, %v1300
        %v1779 = vadd.f32 %v1775, %v1301
        %v1780 = vadd.f32 %v1776, %v1302
        %v1781 = vadd.f32 %v1777, %v1303
        %v1782 = vld [vmem:[%s9] sm:$0xff]
        %v1783 = vld [vmem:[%s9 + $0x8] sm:$0xff]
        %v1784 = vld [vmem:[%s9 + $0x10] sm:$0xff]
        %v1785 = vld [vmem:[%s9 + $0x18] sm:$0xff]
        %1787 = vset.pattern.permute.xlu0 0
        %1788 = vperm.xlu0 %1787, %v1782
        %v1789 = vpop.permute.xlu0 %1788
        %1792 = vset.pattern.permute.xlu0 0
        %1793 = vperm.xlu0 %1792, %v1783
        %v1794 = vpop.permute.xlu0 %1793
        %1797 = vset.pattern.permute.xlu0 0
        %1798 = vperm.xlu0 %1797, %v1784
        %v1799 = vpop.permute.xlu0 %1798
        %1802 = vset.pattern.permute.xlu0 0
        %1803 = vperm.xlu0 %1802, %v1785
        %v1804 = vpop.permute.xlu0 %1803
        %v1806 = vmul.f32 %v1778, %v1789
        %v1807 = vmul.f32 %v1779, %v1794
        %v1808 = vmul.f32 %v1780, %v1799
        %v1809 = vmul.f32 %v1781, %v1804
        %v1810 = vld [vmem:[%s10] sm:$0xff]
        %v1811 = vld [vmem:[%s10 + $0x8] sm:$0xff]
        %v1812 = vld [vmem:[%s10 + $0x10] sm:$0xff]
        %v1813 = vld [vmem:[%s10 + $0x18] sm:$0xff]
        %1815 = vset.pattern.permute.xlu0 0
        %1816 = vperm.xlu0 %1815, %v1810
        %v1817 = vpop.permute.xlu0 %1816
        %1820 = vset.pattern.permute.xlu0 0
        %1821 = vperm.xlu0 %1820, %v1811
        %v1822 = vpop.permute.xlu0 %1821
        %1825 = vset.pattern.permute.xlu0 0
        %1826 = vperm.xlu0 %1825, %v1812
        %v1827 = vpop.permute.xlu0 %1826
        %1830 = vset.pattern.permute.xlu0 0
        %1831 = vperm.xlu0 %1830, %v1813
        %v1832 = vpop.permute.xlu0 %1831
        %v1834 = vadd.f32 %v1806, %v1817
        %v1835 = vadd.f32 %v1807, %v1822
        %v1836 = vadd.f32 %v1808, %v1827
        %v1837 = vadd.f32 %v1809, %v1832
        %v1838 = vmax.f32 %v1834, 0.0
        %v1839 = vmax.f32 %v1835, 0.0
        %v1840 = vmax.f32 %v1836, 0.0
        %v1841 = vmax.f32 %v1837, 0.0
        %v1842 = vadd.s32 %v887, 16
        %v1843 = vadd.s32 %v887, 24
        %v1844 = vadd.s32 %v887, 2
        %v1845 = vadd.s32 %v888, 2
        %v1846 = vadd.s32 %v1842, 2
        %v1847 = vadd.s32 %v1843, 2
        %vm1848 = vcmp.eq.s32.totalorder %v890, %v1844
        %vm1849 = vcmp.eq.s32.totalorder %v890, %v1845
        %vm1850 = vcmp.eq.s32.totalorder %v890, %v1846
        %vm1851 = vcmp.eq.s32.totalorder %v890, %v1847
        %v1852 = vsel %vm1848, 1, 0
        %v1853 = vsel %vm1849, 1, 0
        %v1854 = vsel %vm1850, 1, 0
        %v1855 = vsel %vm1851, 1, 0
        %v1856 = vcvt.s32.f32 %v1852
        %v1857 = vcvt.s32.f32 %v1853
        %v1858 = vcvt.s32.f32 %v1854
        %v1859 = vcvt.s32.f32 %v1855
        %v1861 = vsel %vm1431, %v1838, 0
        %v1864 = vsel %vm1431, %v1839, 0
        %v1867 = vsel %vm1431, %v1840, 0
        %v1870 = vsel %vm1431, %v1841, 0
        %1872 = vmatprep.subr.mxu0 0.0
        %1873 = vmatpush1.msra.mxu0 %v1856
        %1874 = vmatprep.subr.mxu0 0.0
        %1875 = vmatpush1.msra.mxu0 %v1857
        %1876 = vmatprep.subr.mxu0 0.0
        %1877 = vmatpush1.msra.mxu0 %v1858
        %1878 = vmatprep.subr.mxu0 0.0
        %1879 = vmatpush1.msra.mxu0 %v1859
        %1880 = vmatprep.subr.mxu0 0.0
        %1881 = vmatpush1.msra.mxu0 0.0
        %1882 = vmatprep.subr.mxu0 0.0
        %1883 = vmatpush1.msra.mxu0 0.0
        %1884 = vmatprep.subr.mxu0 0.0
        %1885 = vmatpush1.msra.mxu0 0.0
        %1886 = vmatprep.subr.mxu0 0.0
        %1887 = vmatpush1.msra.mxu0 0.0
        %1888 = vmatprep.subr.mxu0 0.0
        %1889 = vmatpush1.msra.mxu0 0.0
        %1890 = vmatprep.subr.mxu0 0.0
        %1891 = vmatpush1.msra.mxu0 0.0
        %1892 = vmatprep.subr.mxu0 0.0
        %1893 = vmatpush1.msra.mxu0 0.0
        %1894 = vmatprep.subr.mxu0 0.0
        %1895 = vmatpush1.msra.mxu0 0.0
        %1896 = vmatprep.subr.mxu0 0.0
        %1897 = vmatpush1.msra.mxu0 0.0
        %1898 = vmatprep.subr.mxu0 0.0
        %1899 = vmatpush1.msra.mxu0 0.0
        %1900 = vmatprep.subr.mxu0 0.0
        %1901 = vmatpush1.msra.mxu0 0.0
        %1902 = vmatprep.subr.mxu0 0.0
        %1903 = vmatpush1.msra.mxu0 0.0
        %1904 = vmatprep.subr.mxu0 0.0
        %1905 = vmatpush1.msra.mxu0 0.0
        %1906 = vmatprep.subr.mxu0 0.0
        %1907 = vmatpush1.msra.mxu0 0.0
        %1908 = vmatprep.subr.mxu0 0.0
        %1909 = vmatpush1.msra.mxu0 0.0
        %1910 = vmatprep.subr.mxu0 0.0
        %1911 = vmatpush1.msra.mxu0 0.0
        %1912 = vmatprep.subr.mxu0 0.0
        %1913 = vmatpush1.msra.mxu0 0.0
        %1914 = vmatprep.subr.mxu0 0.0
        %1915 = vmatpush1.msra.mxu0 0.0
        %1916 = vmatprep.subr.mxu0 0.0
        %1917 = vmatpush1.msra.mxu0 0.0
        %1918 = vmatprep.subr.mxu0 0.0
        %1919 = vmatpush1.msra.mxu0 0.0
        %1920 = vmatprep.subr.mxu0 0.0
        %1921 = vmatpush1.msra.mxu0 0.0
        %1922 = vmatprep.subr.mxu0 0.0
        %1923 = vmatpush1.msra.mxu0 0.0
        %1924 = vmatprep.subr.mxu0 0.0
        %1925 = vmatpush1.msra.mxu0 0.0
        %1926 = vmatprep.subr.mxu0 0.0
        %1927 = vmatpush1.msra.mxu0 0.0
        %1928 = vmatprep.subr.mxu0 0.0
        %1929 = vmatpush1.msra.mxu0 0.0
        %1930 = vmatprep.subr.mxu0 0.0
        %1931 = vmatpush1.msra.mxu0 0.0
        %1932 = vmatprep.subr.mxu0 0.0
        %1933 = vmatpush1.msra.mxu0 0.0
        %1934 = vmatprep.subr.mxu0 0.0
        %1935 = vmatpush1.msra.mxu0 0.0
        %1936 = vmatprep.mubr.f32.mxu0 0.0
        %1937 = vmatmul.mubr.f32.gmra.mrb[0].mxu0 %v1861
        %v1938 = vpop.f32.mrb[0].mxu0
        %v1939 = vadd.f32 0.0, %v1938
        %v1940 = vpop.f32.mrb[0].mxu0
        %1941 = vmatprep.mubr.f32.mxu0 0.0
        %1942 = vmatmul.mubr.f32.gmra.mrb[0].mxu0 %v1864
        %v1943 = vpop.f32.mrb[0].mxu0
        %v1944 = vadd.f32 0.0, %v1943
        %v1945 = vpop.f32.mrb[0].mxu0
        %1946 = vmatprep.mubr.f32.mxu0 0.0
        %1947 = vmatmul.mubr.f32.gmra.mrb[0].mxu0 %v1867
        %v1948 = vpop.f32.mrb[0].mxu0
        %v1949 = vadd.f32 0.0, %v1948
        %v1950 = vpop.f32.mrb[0].mxu0
        %1951 = vmatprep.mubr.f32.mxu0 0.0
        %1952 = vmatmul.mubr.f32.gmra.mrb[0].mxu0 %v1870
        %v1953 = vpop.f32.mrb[0].mxu0
        %v1954 = vadd.f32 0.0, %v1953
        %v1955 = vpop.f32.mrb[0].mxu0
        %1956 = vdwg.mxu0
        %v1957 = vld [vmem:[%s11] sm:$0xff]
        %v1958 = vld [vmem:[%s11 + $0x8] sm:$0xff]
        %v1959 = vld [vmem:[%s11 + $0x10] sm:$0xff]
        %v1960 = vld [vmem:[%s11 + $0x18] sm:$0xff]
        %v1961 = vld [vmem:[%s11 + $0x20] sm:$0xff]
        %v1962 = vld [vmem:[%s11 + $0x28] sm:$0xff]
        %v1963 = vld [vmem:[%s11 + $0x30] sm:$0xff]
        %v1964 = vld [vmem:[%s11 + $0x38] sm:$0xff]
        %v1965 = vld [vmem:[%s11 + $0x40] sm:$0xff]
        %v1966 = vld [vmem:[%s11 + $0x48] sm:$0xff]
        %v1968 = vsel %vm1431, %v1957, 0
        %v1971 = vsel %vm1431, %v1958, 0
        %v1974 = vsel %vm1431, %v1959, 0
        %v1977 = vsel %vm1431, %v1960, 0
        %v1980 = vsel %vm1431, %v1961, 0
        %v1983 = vsel %vm1431, %v1962, 0
        %v1986 = vsel %vm1431, %v1963, 0
        %v1989 = vsel %vm1431, %v1964, 0
        %v1992 = vsel %vm1431, %v1965, 0
        %v1995 = vsel %vm1431, %v1966, 0
        %1997 = vmatprep.subr.mxu0 0.0
        %1998 = vmatpush1.msra.mxu0 %v1939
        %1999 = vmatprep.subr.mxu0 0.0
        %2000 = vmatpush1.msra.mxu0 %v1944
        %2001 = vmatprep.subr.mxu0 0.0
        %2002 = vmatpush1.msra.mxu0 %v1949
        %2003 = vmatprep.subr.mxu0 0.0
        %2004 = vmatpush1.msra.mxu0 %v1954
        %2005 = vmatprep.subr.mxu0 0.0
        %2006 = vmatpush1.msra.mxu0 0.0
        %2007 = vmatprep.subr.mxu0 0.0
        %2008 = vmatpush1.msra.mxu0 0.0
        %2009 = vmatprep.subr.mxu0 0.0
        %2010 = vmatpush1.msra.mxu0 0.0
        %2011 = vmatprep.subr.mxu0 0.0
        %2012 = vmatpush1.msra.mxu0 0.0
        %2013 = vmatprep.subr.mxu0 0.0
        %2014 = vmatpush1.msra.mxu0 0.0
        %2015 = vmatprep.subr.mxu0 0.0
        %2016 = vmatpush1.msra.mxu0 0.0
        %2017 = vmatprep.subr.mxu0 0.0
        %2018 = vmatpush1.msra.mxu0 0.0
        %2019 = vmatprep.subr.mxu0 0.0
        %2020 = vmatpush1.msra.mxu0 0.0
        %2021 = vmatprep.subr.mxu0 0.0
        %2022 = vmatpush1.msra.mxu0 0.0
        %2023 = vmatprep.subr.mxu0 0.0
        %2024 = vmatpush1.msra.mxu0 0.0
        %2025 = vmatprep.subr.mxu0 0.0
        %2026 = vmatpush1.msra.mxu0 0.0
        %2027 = vmatprep.subr.mxu0 0.0
        %2028 = vmatpush1.msra.mxu0 0.0
        %2029 = vmatprep.subr.mxu0 0.0
        %2030 = vmatpush1.msra.mxu0 0.0
        %2031 = vmatprep.subr.mxu0 0.0
        %2032 = vmatpush1.msra.mxu0 0.0
        %2033 = vmatprep.subr.mxu0 0.0
        %2034 = vmatpush1.msra.mxu0 0.0
        %2035 = vmatprep.subr.mxu0 0.0
        %2036 = vmatpush1.msra.mxu0 0.0
        %2037 = vmatprep.subr.mxu0 0.0
        %2038 = vmatpush1.msra.mxu0 0.0
        %2039 = vmatprep.subr.mxu0 0.0
        %2040 = vmatpush1.msra.mxu0 0.0
        %2041 = vmatprep.subr.mxu0 0.0
        %2042 = vmatpush1.msra.mxu0 0.0
        %2043 = vmatprep.subr.mxu0 0.0
        %2044 = vmatpush1.msra.mxu0 0.0
        %2045 = vmatprep.subr.mxu0 0.0
        %2046 = vmatpush1.msra.mxu0 0.0
        %2047 = vmatprep.subr.mxu0 0.0
        %2048 = vmatpush1.msra.mxu0 0.0
        %2049 = vmatprep.subr.mxu0 0.0
        %2050 = vmatpush1.msra.mxu0 0.0
        %2051 = vmatprep.subr.mxu0 0.0
        %2052 = vmatpush1.msra.mxu0 0.0
        %2053 = vmatprep.subr.mxu0 0.0
        %2054 = vmatpush1.msra.mxu0 0.0
        %2055 = vmatprep.subr.mxu0 0.0
        %2056 = vmatpush1.msra.mxu0 0.0
        %2057 = vmatprep.subr.mxu0 0.0
        %2058 = vmatpush1.msra.mxu0 0.0
        %2059 = vmatprep.subr.mxu0 0.0
        %2060 = vmatpush1.msra.mxu0 0.0
        %2061 = vmatprep.mubr.f32.mxu0 0.0
        %2062 = vmatmul.mubr.f32.gmra.mrb[0].mxu0 %v1968
        %v2063 = vpop.f32.mrb[0].mxu0
        %v2064 = vadd.f32 0.0, %v2063
        %v2065 = vpop.f32.mrb[0].mxu0
        %2066 = vmatprep.mubr.f32.mxu0 0.0
        %2067 = vmatmul.mubr.f32.gmra.mrb[0].mxu0 %v1971
        %v2068 = vpop.f32.mrb[0].mxu0
        %v2069 = vadd.f32 0.0, %v2068
        %v2070 = vpop.f32.mrb[0].mxu0
        %2071 = vmatprep.mubr.f32.mxu0 0.0
        %2072 = vmatmul.mubr.f32.gmra.mrb[0].mxu0 %v1974
        %v2073 = vpop.f32.mrb[0].mxu0
        %v2074 = vadd.f32 0.0, %v2073
        %v2075 = vpop.f32.mrb[0].mxu0
        %2076 = vmatprep.mubr.f32.mxu0 0.0
        %2077 = vmatmul.mubr.f32.gmra.mrb[0].mxu0 %v1977
        %v2078 = vpop.f32.mrb[0].mxu0
        %v2079 = vadd.f32 0.0, %v2078
        %v2080 = vpop.f32.mrb[0].mxu0
        %2081 = vmatprep.mubr.f32.mxu0 0.0
        %2082 = vmatmul.mubr.f32.gmra.mrb[0].mxu0 %v1980
        %v2083 = vpop.f32.mrb[0].mxu0
        %v2084 = vadd.f32 0.0, %v2083
        %v2085 = vpop.f32.mrb[0].mxu0
        %2086 = vmatprep.mubr.f32.mxu0 0.0
        %2087 = vmatmul.mubr.f32.gmra.mrb[0].mxu0 %v1983
        %v2088 = vpop.f32.mrb[0].mxu0
        %v2089 = vadd.f32 0.0, %v2088
        %v2090 = vpop.f32.mrb[0].mxu0
        %2091 = vmatprep.mubr.f32.mxu0 0.0
        %2092 = vmatmul.mubr.f32.gmra.mrb[0].mxu0 %v1986
        %v2093 = vpop.f32.mrb[0].mxu0
        %v2094 = vadd.f32 0.0, %v2093
        %v2095 = vpop.f32.mrb[0].mxu0
        %2096 = vmatprep.mubr.f32.mxu0 0.0
        %2097 = vmatmul.mubr.f32.gmra.mrb[0].mxu0 %v1989
        %v2098 = vpop.f32.mrb[0].mxu0
        %v2099 = vadd.f32 0.0, %v2098
        %v2100 = vpop.f32.mrb[0].mxu0
        %2101 = vmatprep.mubr.f32.mxu0 0.0
        %2102 = vmatmul.mubr.f32.gmra.mrb[0].mxu0 %v1992
        %v2103 = vpop.f32.mrb[0].mxu0
        %v2104 = vadd.f32 0.0, %v2103
        %v2105 = vpop.f32.mrb[0].mxu0
        %2106 = vmatprep.mubr.f32.mxu0 0.0
        %2107 = vmatmul.mubr.f32.gmra.mrb[0].mxu0 %v1995
        %v2108 = vpop.f32.mrb[0].mxu0
        %v2109 = vadd.f32 0.0, %v2108
        %v2110 = vpop.f32.mrb[0].mxu0
        %2111 = vdwg.mxu0
        %2112 = vst.msk [vmem:[#allocation2] sm:$0xff] %vm1657, %v2064
        %2113 = vst.msk [vmem:[#allocation2 + $0x10] sm:$0xff] %vm1657, %v2069
        %2114 = vst.msk [vmem:[#allocation2 + $0x20] sm:$0xff] %vm1657, %v2074
        %2115 = vst.msk [vmem:[#allocation2 + $0x30] sm:$0xff] %vm1657, %v2079
        %2116 = vst.msk [vmem:[#allocation2 + $0x40] sm:$0xff] %vm1657, %v2084
        %2117 = vst.msk [vmem:[#allocation2 + $0x50] sm:$0xff] %vm1657, %v2089
        %2118 = vst.msk [vmem:[#allocation2 + $0x60] sm:$0xff] %vm1657, %v2094
        %2119 = vst.msk [vmem:[#allocation2 + $0x70] sm:$0xff] %vm1657, %v2099
        %2120 = vst.msk [vmem:[#allocation2 + $0x80] sm:$0xff] %vm1657, %v2104
        %2121 = vst.msk [vmem:[#allocation2 + $0x90] sm:$0xff] %vm1657, %v2109
        %v2122 = vld [vmem:[#allocation2] sm:$0xff]
        %v2123 = vld [vmem:[#allocation2 + $0x10] sm:$0xff]
        %v2124 = vld [vmem:[#allocation2 + $0x20] sm:$0xff]
        %v2125 = vld [vmem:[#allocation2 + $0x30] sm:$0xff]
        %2128 = vrot.lane.b32.xlu0 %v2124, 127
        %v2129 = vpop.permute.xlu0 %2128
        %2130 = vrot.lane.b32.xlu0 %v2125, 127
        %v2131 = vpop.permute.xlu0 %2130
        %v2134 = vadd.f32 %v2122, %v2129
        %v2135 = vadd.f32 %v2123, %v2131
        %v2136 = vld [vmem:[#allocation2 + $0x40] sm:$0xff]
        %v2137 = vld [vmem:[#allocation2 + $0x50] sm:$0xff]
        %2140 = vrot.lane.b32.xlu0 %v2136, 126
        %v2141 = vpop.permute.xlu0 %2140
        %2142 = vrot.lane.b32.xlu0 %v2137, 126
        %v2143 = vpop.permute.xlu0 %2142
        %v2146 = vadd.f32 %v2134, %v2141
        %v2147 = vadd.f32 %v2135, %v2143
        %v2148 = vld [vmem:[#allocation2 + $0x60] sm:$0xff]
        %v2149 = vld [vmem:[#allocation2 + $0x70] sm:$0xff]
        %2152 = vrot.lane.b32.xlu0 %v2148, 125
        %v2153 = vpop.permute.xlu0 %2152
        %2154 = vrot.lane.b32.xlu0 %v2149, 125
        %v2155 = vpop.permute.xlu0 %2154
        %v2158 = vadd.f32 %v2146, %v2153
        %v2159 = vadd.f32 %v2147, %v2155
        %v2160 = vld [vmem:[#allocation2 + $0x80] sm:$0xff]
        %v2161 = vld [vmem:[#allocation2 + $0x90] sm:$0xff]
        %2164 = vrot.lane.b32.xlu0 %v2160, 124
        %v2165 = vpop.permute.xlu0 %2164
        %2166 = vrot.lane.b32.xlu0 %v2161, 124
        %v2167 = vpop.permute.xlu0 %2166
        %v2170 = vadd.f32 %v2158, %v2165
        %v2171 = vadd.f32 %v2159, %v2167
        %v2172 = vld [vmem:[%s12] sm:$0xff]
        %v2173 = vld [vmem:[%s12 + $0x8] sm:$0xff]
        %2175 = vset.pattern.permute.xlu0 0
        %2176 = vperm.xlu0 %2175, %v2172
        %v2177 = vpop.permute.xlu0 %2176
        %2180 = vset.pattern.permute.xlu0 0
        %2181 = vperm.xlu0 %2180, %v2173
        %v2182 = vpop.permute.xlu0 %2181
        %v2184 = vadd.f32 %v2170, %v2177
        %v2185 = vadd.f32 %v2171, %v2182
        %v2186 = vmax.f32 %v2184, 0.0
        %v2187 = vmax.f32 %v2185, 0.0
        %v2188 = vld [vmem:[%s741] sm:$0xff]
        %v2189 = vld [vmem:[%s741 + $0x8] sm:$0xff]
        %v2190 = vmul.u32 %v1842, 2
        %v2191 = vmul.u32 %v1843, 2
        %v2192 = vadd.s32 %v1304, 3
        %v2193 = vadd.s32 %v1305, 3
        %v2194 = vadd.s32 %v2190, 3
        %v2195 = vadd.s32 %v2191, 3
        %vm2196 = vcmp.eq.s32.totalorder %v890, %v2192
        %vm2197 = vcmp.eq.s32.totalorder %v890, %v2193
        %vm2198 = vcmp.eq.s32.totalorder %v890, %v2194
        %vm2199 = vcmp.eq.s32.totalorder %v890, %v2195
        %v2200 = vsel %vm2196, 1, 0
        %v2201 = vsel %vm2197, 1, 0
        %v2202 = vsel %vm2198, 1, 0
        %v2203 = vsel %vm2199, 1, 0
        %v2204 = vcvt.s32.f32 %v2200
        %v2205 = vcvt.s32.f32 %v2201
        %v2206 = vcvt.s32.f32 %v2202
        %v2207 = vcvt.s32.f32 %v2203
        %v2209 = vsel %vm1431, %v2186, 0
        %v2212 = vsel %vm1431, %v2187, 0
        %2214 = vmatprep.subr.mxu0 0.0
        %2215 = vmatpush1.msra.mxu0 %v2204
        %2216 = vmatprep.subr.mxu0 0.0
        %2217 = vmatpush1.msra.mxu0 %v2205
        %2218 = vmatprep.subr.mxu0 0.0
        %2219 = vmatpush1.msra.mxu0 %v2206
        %2220 = vmatprep.subr.mxu0 0.0
        %2221 = vmatpush1.msra.mxu0 %v2207
        %2222 = vmatprep.subr.mxu0 0.0
        %2223 = vmatpush1.msra.mxu0 0.0
        %2224 = vmatprep.subr.mxu0 0.0
        %2225 = vmatpush1.msra.mxu0 0.0
        %2226 = vmatprep.subr.mxu0 0.0
        %2227 = vmatpush1.msra.mxu0 0.0
        %2228 = vmatprep.subr.mxu0 0.0
        %2229 = vmatpush1.msra.mxu0 0.0
        %2230 = vmatprep.subr.mxu0 0.0
        %2231 = vmatpush1.msra.mxu0 0.0
        %2232 = vmatprep.subr.mxu0 0.0
        %2233 = vmatpush1.msra.mxu0 0.0
        %2234 = vmatprep.subr.mxu0 0.0
        %2235 = vmatpush1.msra.mxu0 0.0
        %2236 = vmatprep.subr.mxu0 0.0
        %2237 = vmatpush1.msra.mxu0 0.0
        %2238 = vmatprep.subr.mxu0 0.0
        %2239 = vmatpush1.msra.mxu0 0.0
        %2240 = vmatprep.subr.mxu0 0.0
        %2241 = vmatpush1.msra.mxu0 0.0
        %2242 = vmatprep.subr.mxu0 0.0
        %2243 = vmatpush1.msra.mxu0 0.0
        %2244 = vmatprep.subr.mxu0 0.0
        %2245 = vmatpush1.msra.mxu0 0.0
        %2246 = vmatprep.subr.mxu0 0.0
        %2247 = vmatpush1.msra.mxu0 0.0
        %2248 = vmatprep.subr.mxu0 0.0
        %2249 = vmatpush1.msra.mxu0 0.0
        %2250 = vmatprep.subr.mxu0 0.0
        %2251 = vmatpush1.msra.mxu0 0.0
        %2252 = vmatprep.subr.mxu0 0.0
        %2253 = vmatpush1.msra.mxu0 0.0
        %2254 = vmatprep.subr.mxu0 0.0
        %2255 = vmatpush1.msra.mxu0 0.0
        %2256 = vmatprep.subr.mxu0 0.0
        %2257 = vmatpush1.msra.mxu0 0.0
        %2258 = vmatprep.subr.mxu0 0.0
        %2259 = vmatpush1.msra.mxu0 0.0
        %2260 = vmatprep.subr.mxu0 0.0
        %2261 = vmatpush1.msra.mxu0 0.0
        %2262 = vmatprep.subr.mxu0 0.0
        %2263 = vmatpush1.msra.mxu0 0.0
        %2264 = vmatprep.subr.mxu0 0.0
        %2265 = vmatpush1.msra.mxu0 0.0
        %2266 = vmatprep.subr.mxu0 0.0
        %2267 = vmatpush1.msra.mxu0 0.0
        %2268 = vmatprep.subr.mxu0 0.0
        %2269 = vmatpush1.msra.mxu0 0.0
        %2270 = vmatprep.subr.mxu0 0.0
        %2271 = vmatpush1.msra.mxu0 0.0
        %2272 = vmatprep.subr.mxu0 0.0
        %2273 = vmatpush1.msra.mxu0 0.0
        %2274 = vmatprep.subr.mxu0 0.0
        %2275 = vmatpush1.msra.mxu0 0.0
        %2276 = vmatprep.subr.mxu0 0.0
        %2277 = vmatpush1.msra.mxu0 0.0
        %2278 = vmatprep.mubr.f32.mxu0 0.0
        %2279 = vmatmul.mubr.f32.gmra.mrb[0].mxu0 %v2209
        %v2280 = vpop.f32.mrb[0].mxu0
        %v2281 = vadd.f32 0.0, %v2280
        %v2282 = vpop.f32.mrb[0].mxu0
        %2283 = vmatprep.mubr.f32.mxu0 0.0
        %2284 = vmatmul.mubr.f32.gmra.mrb[0].mxu0 %v2212
        %v2285 = vpop.f32.mrb[0].mxu0
        %v2286 = vadd.f32 0.0, %v2285
        %v2287 = vpop.f32.mrb[0].mxu0
        %2288 = vdwg.mxu0
        %v2289 = vld [vmem:[%s13] sm:$0xff]
        %v2290 = vld [vmem:[%s13 + $0x8] sm:$0xff]
        %v2291 = vld [vmem:[%s13 + $0x10] sm:$0xff]
        %v2292 = vld [vmem:[%s13 + $0x18] sm:$0xff]
        %v2293 = vld [vmem:[%s13 + $0x20] sm:$0xff]
        %v2294 = vld [vmem:[%s13 + $0x28] sm:$0xff]
        %v2295 = vld [vmem:[%s13 + $0x30] sm:$0xff]
        %v2296 = vld [vmem:[%s13 + $0x38] sm:$0xff]
        %v2297 = vld [vmem:[%s13 + $0x40] sm:$0xff]
        %v2298 = vld [vmem:[%s13 + $0x48] sm:$0xff]
        %v2299 = vld [vmem:[%s13 + $0x50] sm:$0xff]
        %v2300 = vld [vmem:[%s13 + $0x58] sm:$0xff]
        %v2301 = vld [vmem:[%s13 + $0x60] sm:$0xff]
        %v2302 = vld [vmem:[%s13 + $0x68] sm:$0xff]
        %v2304 = vsel %vm899, %v2289, 0
        %v2307 = vsel %vm899, %v2290, 0
        %v2310 = vsel %vm899, %v2291, 0
        %v2313 = vsel %vm899, %v2292, 0
        %v2316 = vsel %vm899, %v2293, 0
        %v2319 = vsel %vm899, %v2294, 0
        %v2322 = vsel %vm899, %v2295, 0
        %v2325 = vsel %vm899, %v2296, 0
        %v2328 = vsel %vm899, %v2297, 0
        %v2331 = vsel %vm899, %v2298, 0
        %v2334 = vsel %vm899, %v2299, 0
        %v2337 = vsel %vm899, %v2300, 0
        %v2340 = vsel %vm899, %v2301, 0
        %v2343 = vsel %vm899, %v2302, 0
        %2345 = vmatprep.subr.mxu0 0.0
        %2346 = vmatpush1.msra.mxu0 %v2281
        %2347 = vmatprep.subr.mxu0 0.0
        %2348 = vmatpush1.msra.mxu0 %v2286
        %2349 = vmatprep.subr.mxu0 0.0
        %2350 = vmatpush1.msra.mxu0 0.0
        %2351 = vmatprep.subr.mxu0 0.0
        %2352 = vmatpush1.msra.mxu0 0.0
        %2353 = vmatprep.subr.mxu0 0.0
        %2354 = vmatpush1.msra.mxu0 0.0
        %2355 = vmatprep.subr.mxu0 0.0
        %2356 = vmatpush1.msra.mxu0 0.0
        %2357 = vmatprep.subr.mxu0 0.0
        %2358 = vmatpush1.msra.mxu0 0.0
        %2359 = vmatprep.subr.mxu0 0.0
        %2360 = vmatpush1.msra.mxu0 0.0
        %2361 = vmatprep.subr.mxu0 0.0
        %2362 = vmatpush1.msra.mxu0 0.0
        %2363 = vmatprep.subr.mxu0 0.0
        %2364 = vmatpush1.msra.mxu0 0.0
        %2365 = vmatprep.subr.mxu0 0.0
        %2366 = vmatpush1.msra.mxu0 0.0
        %2367 = vmatprep.subr.mxu0 0.0
        %2368 = vmatpush1.msra.mxu0 0.0
        %2369 = vmatprep.subr.mxu0 0.0
        %2370 = vmatpush1.msra.mxu0 0.0
        %2371 = vmatprep.subr.mxu0 0.0
        %2372 = vmatpush1.msra.mxu0 0.0
        %2373 = vmatprep.subr.mxu0 0.0
        %2374 = vmatpush1.msra.mxu0 0.0
        %2375 = vmatprep.subr.mxu0 0.0
        %2376 = vmatpush1.msra.mxu0 0.0
        %2377 = vmatprep.subr.mxu0 0.0
        %2378 = vmatpush1.msra.mxu0 0.0
        %2379 = vmatprep.subr.mxu0 0.0
        %2380 = vmatpush1.msra.mxu0 0.0
        %2381 = vmatprep.subr.mxu0 0.0
        %2382 = vmatpush1.msra.mxu0 0.0
        %2383 = vmatprep.subr.mxu0 0.0
        %2384 = vmatpush1.msra.mxu0 0.0
        %2385 = vmatprep.subr.mxu0 0.0
        %2386 = vmatpush1.msra.mxu0 0.0
        %2387 = vmatprep.subr.mxu0 0.0
        %2388 = vmatpush1.msra.mxu0 0.0
        %2389 = vmatprep.subr.mxu0 0.0
        %2390 = vmatpush1.msra.mxu0 0.0
        %2391 = vmatprep.subr.mxu0 0.0
        %2392 = vmatpush1.msra.mxu0 0.0
        %2393 = vmatprep.subr.mxu0 0.0
        %2394 = vmatpush1.msra.mxu0 0.0
        %2395 = vmatprep.subr.mxu0 0.0
        %2396 = vmatpush1.msra.mxu0 0.0
        %2397 = vmatprep.subr.mxu0 0.0
        %2398 = vmatpush1.msra.mxu0 0.0
        %2399 = vmatprep.subr.mxu0 0.0
        %2400 = vmatpush1.msra.mxu0 0.0
        %2401 = vmatprep.subr.mxu0 0.0
        %2402 = vmatpush1.msra.mxu0 0.0
        %2403 = vmatprep.subr.mxu0 0.0
        %2404 = vmatpush1.msra.mxu0 0.0
        %2405 = vmatprep.subr.mxu0 0.0
        %2406 = vmatpush1.msra.mxu0 0.0
        %2407 = vmatprep.subr.mxu0 0.0
        %2408 = vmatpush1.msra.mxu0 0.0
        %2409 = vmatprep.mubr.f32.mxu0 0.0
        %2410 = vmatmul.mubr.f32.gmra.mrb[0].mxu0 %v2304
        %v2411 = vpop.f32.mrb[0].mxu0
        %v2412 = vadd.f32 0.0, %v2411
        %v2413 = vpop.f32.mrb[0].mxu0
        %2414 = vmatprep.mubr.f32.mxu0 0.0
        %2415 = vmatmul.mubr.f32.gmra.mrb[0].mxu0 %v2307
        %v2416 = vpop.f32.mrb[0].mxu0
        %v2417 = vadd.f32 0.0, %v2416
        %v2418 = vpop.f32.mrb[0].mxu0
        %2419 = vmatprep.mubr.f32.mxu0 0.0
        %2420 = vmatmul.mubr.f32.gmra.mrb[0].mxu0 %v2310
        %v2421 = vpop.f32.mrb[0].mxu0
        %v2422 = vadd.f32 0.0, %v2421
        %v2423 = vpop.f32.mrb[0].mxu0
        %2424 = vmatprep.mubr.f32.mxu0 0.0
        %2425 = vmatmul.mubr.f32.gmra.mrb[0].mxu0 %v2313
        %v2426 = vpop.f32.mrb[0].mxu0
        %v2427 = vadd.f32 0.0, %v2426
        %v2428 = vpop.f32.mrb[0].mxu0
        %2429 = vmatprep.mubr.f32.mxu0 0.0
        %2430 = vmatmul.mubr.f32.gmra.mrb[0].mxu0 %v2316
        %v2431 = vpop.f32.mrb[0].mxu0
        %v2432 = vadd.f32 0.0, %v2431
        %v2433 = vpop.f32.mrb[0].mxu0
        %2434 = vmatprep.mubr.f32.mxu0 0.0
        %2435 = vmatmul.mubr.f32.gmra.mrb[0].mxu0 %v2319
        %v2436 = vpop.f32.mrb[0].mxu0
        %v2437 = vadd.f32 0.0, %v2436
        %v2438 = vpop.f32.mrb[0].mxu0
        %2439 = vmatprep.mubr.f32.mxu0 0.0
        %2440 = vmatmul.mubr.f32.gmra.mrb[0].mxu0 %v2322
        %v2441 = vpop.f32.mrb[0].mxu0
        %v2442 = vadd.f32 0.0, %v2441
        %v2443 = vpop.f32.mrb[0].mxu0
        %2444 = vmatprep.mubr.f32.mxu0 0.0
        %2445 = vmatmul.mubr.f32.gmra.mrb[0].mxu0 %v2325
        %v2446 = vpop.f32.mrb[0].mxu0
        %v2447 = vadd.f32 0.0, %v2446
        %v2448 = vpop.f32.mrb[0].mxu0
        %2449 = vmatprep.mubr.f32.mxu0 0.0
        %2450 = vmatmul.mubr.f32.gmra.mrb[0].mxu0 %v2328
        %v2451 = vpop.f32.mrb[0].mxu0
        %v2452 = vadd.f32 0.0, %v2451
        %v2453 = vpop.f32.mrb[0].mxu0
        %2454 = vmatprep.mubr.f32.mxu0 0.0
        %2455 = vmatmul.mubr.f32.gmra.mrb[0].mxu0 %v2331
        %v2456 = vpop.f32.mrb[0].mxu0
        %v2457 = vadd.f32 0.0, %v2456
        %v2458 = vpop.f32.mrb[0].mxu0
        %2459 = vmatprep.mubr.f32.mxu0 0.0
        %2460 = vmatmul.mubr.f32.gmra.mrb[0].mxu0 %v2334
        %v2461 = vpop.f32.mrb[0].mxu0
        %v2462 = vadd.f32 0.0, %v2461
        %v2463 = vpop.f32.mrb[0].mxu0
        %2464 = vmatprep.mubr.f32.mxu0 0.0
        %2465 = vmatmul.mubr.f32.gmra.mrb[0].mxu0 %v2337
        %v2466 = vpop.f32.mrb[0].mxu0
        %v2467 = vadd.f32 0.0, %v2466
        %v2468 = vpop.f32.mrb[0].mxu0
        %2469 = vmatprep.mubr.f32.mxu0 0.0
        %2470 = vmatmul.mubr.f32.gmra.mrb[0].mxu0 %v2340
        %v2471 = vpop.f32.mrb[0].mxu0
        %v2472 = vadd.f32 0.0, %v2471
        %v2473 = vpop.f32.mrb[0].mxu0
        %2474 = vmatprep.mubr.f32.mxu0 0.0
        %2475 = vmatmul.mubr.f32.gmra.mrb[0].mxu0 %v2343
        %v2476 = vpop.f32.mrb[0].mxu0
        %v2477 = vadd.f32 0.0, %v2476
        %v2478 = vpop.f32.mrb[0].mxu0
        %2479 = vdwg.mxu0
        %vm2480 = vcmask 572416
        %2481 = vst.msk [vmem:[#allocation2] sm:$0xff] %vm2480, %v2412
        %2482 = vst.msk [vmem:[#allocation2 + $0x10] sm:$0xff] %vm2480, %v2417
        %2483 = vst.msk [vmem:[#allocation2 + $0x20] sm:$0xff] %vm2480, %v2422
        %2484 = vst.msk [vmem:[#allocation2 + $0x30] sm:$0xff] %vm2480, %v2427
        %2485 = vst.msk [vmem:[#allocation2 + $0x40] sm:$0xff] %vm2480, %v2432
        %2486 = vst.msk [vmem:[#allocation2 + $0x50] sm:$0xff] %vm2480, %v2437
        %2487 = vst.msk [vmem:[#allocation2 + $0x60] sm:$0xff] %vm2480, %v2442
        %2488 = vst.msk [vmem:[#allocation2 + $0x70] sm:$0xff] %vm2480, %v2447
        %2489 = vst.msk [vmem:[#allocation2 + $0x80] sm:$0xff] %vm2480, %v2452
        %2490 = vst.msk [vmem:[#allocation2 + $0x90] sm:$0xff] %vm2480, %v2457
        %2491 = vst.msk [vmem:[#allocation2 + $0xa0] sm:$0xff] %vm2480, %v2462
        %2492 = vst.msk [vmem:[#allocation2 + $0xb0] sm:$0xff] %vm2480, %v2467
        %2493 = vst.msk [vmem:[#allocation2 + $0xc0] sm:$0xff] %vm2480, %v2472
        %2494 = vst.msk [vmem:[#allocation2 + $0xd0] sm:$0xff] %vm2480, %v2477
        %v2495 = vld [vmem:[#allocation2] sm:$0xff]
        %v2496 = vld [vmem:[#allocation2 + $0x10] sm:$0xff]
        %v2497 = vld [vmem:[#allocation2 + $0x20] sm:$0xff]
        %v2498 = vld [vmem:[#allocation2 + $0x30] sm:$0xff]
        %2501 = vrot.lane.b32.xlu0 %v2497, 127
        %v2502 = vpop.permute.xlu0 %2501
        %2503 = vrot.lane.b32.xlu0 %v2498, 127
        %v2504 = vpop.permute.xlu0 %2503
        %v2507 = vadd.f32 %v2495, %v2502
        %v2508 = vadd.f32 %v2496, %v2504
        %v2509 = vld [vmem:[#allocation2 + $0x40] sm:$0xff]
        %v2510 = vld [vmem:[#allocation2 + $0x50] sm:$0xff]
        %2513 = vrot.lane.b32.xlu0 %v2509, 126
        %v2514 = vpop.permute.xlu0 %2513
        %2515 = vrot.lane.b32.xlu0 %v2510, 126
        %v2516 = vpop.permute.xlu0 %2515
        %v2519 = vadd.f32 %v2507, %v2514
        %v2520 = vadd.f32 %v2508, %v2516
        %v2521 = vld [vmem:[#allocation2 + $0x60] sm:$0xff]
        %v2522 = vld [vmem:[#allocation2 + $0x70] sm:$0xff]
        %2525 = vrot.lane.b32.xlu0 %v2521, 125
        %v2526 = vpop.permute.xlu0 %2525
        %2527 = vrot.lane.b32.xlu0 %v2522, 125
        %v2528 = vpop.permute.xlu0 %2527
        %v2531 = vadd.f32 %v2519, %v2526
        %v2532 = vadd.f32 %v2520, %v2528
        %v2533 = vld [vmem:[#allocation2 + $0x80] sm:$0xff]
        %v2534 = vld [vmem:[#allocation2 + $0x90] sm:$0xff]
        %2537 = vrot.lane.b32.xlu0 %v2533, 124
        %v2538 = vpop.permute.xlu0 %2537
        %2539 = vrot.lane.b32.xlu0 %v2534, 124
        %v2540 = vpop.permute.xlu0 %2539
        %v2543 = vadd.f32 %v2531, %v2538
        %v2544 = vadd.f32 %v2532, %v2540
        %v2545 = vld [vmem:[#allocation2 + $0xa0] sm:$0xff]
        %v2546 = vld [vmem:[#allocation2 + $0xb0] sm:$0xff]
        %2549 = vrot.lane.b32.xlu0 %v2545, 123
        %v2550 = vpop.permute.xlu0 %2549
        %2551 = vrot.lane.b32.xlu0 %v2546, 123
        %v2552 = vpop.permute.xlu0 %2551
        %v2555 = vadd.f32 %v2543, %v2550
        %v2556 = vadd.f32 %v2544, %v2552
        %v2557 = vld [vmem:[#allocation2 + $0xc0] sm:$0xff]
        %v2558 = vld [vmem:[#allocation2 + $0xd0] sm:$0xff]
        %2561 = vrot.lane.b32.xlu0 %v2557, 122
        %v2562 = vpop.permute.xlu0 %2561
        %2563 = vrot.lane.b32.xlu0 %v2558, 122
        %v2564 = vpop.permute.xlu0 %2563
        %v2567 = vadd.f32 %v2555, %v2562
        %v2568 = vadd.f32 %v2556, %v2564
        %v2569 = vadd.f32 %v2567, %v2188
        %v2570 = vadd.f32 %v2568, %v2189
        %v2571 = vld [vmem:[%s14] sm:$0xff]
        %v2572 = vld [vmem:[%s14 + $0x8] sm:$0xff]
        %2574 = vset.pattern.permute.xlu0 0
        %2575 = vperm.xlu0 %2574, %v2571
        %v2576 = vpop.permute.xlu0 %2575
        %2579 = vset.pattern.permute.xlu0 0
        %2580 = vperm.xlu0 %2579, %v2572
        %v2581 = vpop.permute.xlu0 %2580
        %v2583 = vmul.f32 %v2569, %v2576
        %v2584 = vmul.f32 %v2570, %v2581
        %v2585 = vld [vmem:[%s15] sm:$0xff]
        %v2586 = vld [vmem:[%s15 + $0x8] sm:$0xff]
        %2588 = vset.pattern.permute.xlu0 0
        %2589 = vperm.xlu0 %2588, %v2585
        %v2590 = vpop.permute.xlu0 %2589
        %2593 = vset.pattern.permute.xlu0 0
        %2594 = vperm.xlu0 %2593, %v2586
        %v2595 = vpop.permute.xlu0 %2594
        %v2597 = vadd.f32 %v2583, %v2590
        %v2598 = vadd.f32 %v2584, %v2595
        %v2599 = vmax.f32 %v2597, 0.0
        %v2600 = vmax.f32 %v2598, 0.0
        %v2601 = vadd.s32 %v887, 32
        %v2602 = vadd.s32 %v887, 40
        %v2603 = vadd.s32 %v887, 48
        %v2604 = vadd.s32 %v887, 56
        %v2605 = vadd.s32 %v887, 3
        %v2606 = vadd.s32 %v888, 3
        %v2607 = vadd.s32 %v1842, 3
        %v2608 = vadd.s32 %v1843, 3
        %v2609 = vadd.s32 %v2601, 3
        %v2610 = vadd.s32 %v2602, 3
        %v2611 = vadd.s32 %v2603, 3
        %v2612 = vadd.s32 %v2604, 3
        %vm2613 = vcmp.eq.s32.totalorder %v890, %v2605
        %vm2614 = vcmp.eq.s32.totalorder %v890, %v2606
        %vm2615 = vcmp.eq.s32.totalorder %v890, %v2607
        %vm2616 = vcmp.eq.s32.totalorder %v890, %v2608
        %vm2617 = vcmp.eq.s32.totalorder %v890, %v2609
        %vm2618 = vcmp.eq.s32.totalorder %v890, %v2610
        %vm2619 = vcmp.eq.s32.totalorder %v890, %v2611
        %vm2620 = vcmp.eq.s32.totalorder %v890, %v2612
        %v2621 = vsel %vm2613, 1, 0
        %v2622 = vsel %vm2614, 1, 0
        %v2623 = vsel %vm2615, 1, 0
        %v2624 = vsel %vm2616, 1, 0
        %v2625 = vsel %vm2617, 1, 0
        %v2626 = vsel %vm2618, 1, 0
        %v2627 = vsel %vm2619, 1, 0
        %v2628 = vsel %vm2620, 1, 0
        %v2629 = vcvt.s32.f32 %v2621
        %v2630 = vcvt.s32.f32 %v2622
        %v2631 = vcvt.s32.f32 %v2623
        %v2632 = vcvt.s32.f32 %v2624
        %v2633 = vcvt.s32.f32 %v2625
        %v2634 = vcvt.s32.f32 %v2626
        %v2635 = vcvt.s32.f32 %v2627
        %v2636 = vcvt.s32.f32 %v2628
        %v2638 = vsel %vm1041, %v2599, 0
        %v2641 = vsel %vm1041, %v2600, 0
        %2643 = vmatprep.subr.mxu0 0.0
        %2644 = vmatpush1.msra.mxu0 %v2629
        %2645 = vmatprep.subr.mxu0 0.0
        %2646 = vmatpush1.msra.mxu0 %v2630
        %2647 = vmatprep.subr.mxu0 0.0
        %2648 = vmatpush1.msra.mxu0 %v2631
        %2649 = vmatprep.subr.mxu0 0.0
        %2650 = vmatpush1.msra.mxu0 %v2632
        %2651 = vmatprep.subr.mxu0 0.0
        %2652 = vmatpush1.msra.mxu0 %v2633
        %2653 = vmatprep.subr.mxu0 0.0
        %2654 = vmatpush1.msra.mxu0 %v2634
        %2655 = vmatprep.subr.mxu0 0.0
        %2656 = vmatpush1.msra.mxu0 %v2635
        %2657 = vmatprep.subr.mxu0 0.0
        %2658 = vmatpush1.msra.mxu0 %v2636
        %2659 = vmatprep.subr.mxu0 0.0
        %2660 = vmatpush1.msra.mxu0 0.0
        %2661 = vmatprep.subr.mxu0 0.0
        %2662 = vmatpush1.msra.mxu0 0.0
        %2663 = vmatprep.subr.mxu0 0.0
        %2664 = vmatpush1.msra.mxu0 0.0
        %2665 = vmatprep.subr.mxu0 0.0
        %2666 = vmatpush1.msra.mxu0 0.0
        %2667 = vmatprep.subr.mxu0 0.0
        %2668 = vmatpush1.msra.mxu0 0.0
        %2669 = vmatprep.subr.mxu0 0.0
        %2670 = vmatpush1.msra.mxu0 0.0
        %2671 = vmatprep.subr.mxu0 0.0
        %2672 = vmatpush1.msra.mxu0 0.0
        %2673 = vmatprep.subr.mxu0 0.0
        %2674 = vmatpush1.msra.mxu0 0.0
        %2675 = vmatprep.subr.mxu0 0.0
        %2676 = vmatpush1.msra.mxu0 0.0
        %2677 = vmatprep.subr.mxu0 0.0
        %2678 = vmatpush1.msra.mxu0 0.0
        %2679 = vmatprep.subr.mxu0 0.0
        %2680 = vmatpush1.msra.mxu0 0.0
        %2681 = vmatprep.subr.mxu0 0.0
        %2682 = vmatpush1.msra.mxu0 0.0
        %2683 = vmatprep.subr.mxu0 0.0
        %2684 = vmatpush1.msra.mxu0 0.0
        %2685 = vmatprep.subr.mxu0 0.0
        %2686 = vmatpush1.msra.mxu0 0.0
        %2687 = vmatprep.subr.mxu0 0.0
        %2688 = vmatpush1.msra.mxu0 0.0
        %2689 = vmatprep.subr.mxu0 0.0
        %2690 = vmatpush1.msra.mxu0 0.0
        %2691 = vmatprep.subr.mxu0 0.0
        %2692 = vmatpush1.msra.mxu0 0.0
        %2693 = vmatprep.subr.mxu0 0.0
        %2694 = vmatpush1.msra.mxu0 0.0
        %2695 = vmatprep.subr.mxu0 0.0
        %2696 = vmatpush1.msra.mxu0 0.0
        %2697 = vmatprep.subr.mxu0 0.0
        %2698 = vmatpush1.msra.mxu0 0.0
        %2699 = vmatprep.subr.mxu0 0.0
        %2700 = vmatpush1.msra.mxu0 0.0
        %2701 = vmatprep.subr.mxu0 0.0
        %2702 = vmatpush1.msra.mxu0 0.0
        %2703 = vmatprep.subr.mxu0 0.0
        %2704 = vmatpush1.msra.mxu0 0.0
        %2705 = vmatprep.subr.mxu0 0.0
        %2706 = vmatpush1.msra.mxu0 0.0
        %2707 = vmatprep.mubr.f32.mxu0 0.0
        %2708 = vmatmul.mubr.f32.gmra.mrb[0].mxu0 %v2638
        %v2709 = vpop.f32.mrb[0].mxu0
        %v2710 = vadd.f32 0.0, %v2709
        %v2711 = vpop.f32.mrb[0].mxu0
        %2712 = vmatprep.mubr.f32.mxu0 0.0
        %2713 = vmatmul.mubr.f32.gmra.mrb[0].mxu0 %v2641
        %v2714 = vpop.f32.mrb[0].mxu0
        %v2715 = vadd.f32 0.0, %v2714
        %v2716 = vpop.f32.mrb[0].mxu0
        %2717 = vdwg.mxu0
        %v2718 = vld [vmem:[%s16] sm:$0xff]
        %v2719 = vld [vmem:[%s16 + $0x8] sm:$0xff]
        %v2720 = vld [vmem:[%s16 + $0x10] sm:$0xff]
        %v2721 = vld [vmem:[%s16 + $0x18] sm:$0xff]
        %v2722 = vld [vmem:[%s16 + $0x20] sm:$0xff]
        %v2723 = vld [vmem:[%s16 + $0x28] sm:$0xff]
        %v2724 = vld [vmem:[%s16 + $0x30] sm:$0xff]
        %v2726 = vsel %vm899, %v2718, 0
        %v2729 = vsel %vm899, %v2719, 0
        %v2732 = vsel %vm899, %v2720, 0
        %v2735 = vsel %vm899, %v2721, 0
        %v2738 = vsel %vm899, %v2722, 0
        %v2741 = vsel %vm899, %v2723, 0
        %v2744 = vsel %vm899, %v2724, 0
        %2746 = vmatprep.subr.mxu0 0.0
        %2747 = vmatpush1.msra.mxu0 %v2710
        %2748 = vmatprep.subr.mxu0 0.0
        %2749 = vmatpush1.msra.mxu0 %v2715
        %2750 = vmatprep.subr.mxu0 0.0
        %2751 = vmatpush1.msra.mxu0 0.0
        %2752 = vmatprep.subr.mxu0 0.0
        %2753 = vmatpush1.msra.mxu0 0.0
        %2754 = vmatprep.subr.mxu0 0.0
        %2755 = vmatpush1.msra.mxu0 0.0
        %2756 = vmatprep.subr.mxu0 0.0
        %2757 = vmatpush1.msra.mxu0 0.0
        %2758 = vmatprep.subr.mxu0 0.0
        %2759 = vmatpush1.msra.mxu0 0.0
        %2760 = vmatprep.subr.mxu0 0.0
        %2761 = vmatpush1.msra.mxu0 0.0
        %2762 = vmatprep.subr.mxu0 0.0
        %2763 = vmatpush1.msra.mxu0 0.0
        %2764 = vmatprep.subr.mxu0 0.0
        %2765 = vmatpush1.msra.mxu0 0.0
        %2766 = vmatprep.subr.mxu0 0.0
        %2767 = vmatpush1.msra.mxu0 0.0
        %2768 = vmatprep.subr.mxu0 0.0
        %2769 = vmatpush1.msra.mxu0 0.0
        %2770 = vmatprep.subr.mxu0 0.0
        %2771 = vmatpush1.msra.mxu0 0.0
        %2772 = vmatprep.subr.mxu0 0.0
        %2773 = vmatpush1.msra.mxu0 0.0
        %2774 = vmatprep.subr.mxu0 0.0
        %2775 = vmatpush1.msra.mxu0 0.0
        %2776 = vmatprep.subr.mxu0 0.0
        %2777 = vmatpush1.msra.mxu0 0.0
        %2778 = vmatprep.subr.mxu0 0.0
        %2779 = vmatpush1.msra.mxu0 0.0
        %2780 = vmatprep.subr.mxu0 0.0
        %2781 = vmatpush1.msra.mxu0 0.0
        %2782 = vmatprep.subr.mxu0 0.0
        %2783 = vmatpush1.msra.mxu0 0.0
        %2784 = vmatprep.subr.mxu0 0.0
        %2785 = vmatpush1.msra.mxu0 0.0
        %2786 = vmatprep.subr.mxu0 0.0
        %2787 = vmatpush1.msra.mxu0 0.0
        %2788 = vmatprep.subr.mxu0 0.0
        %2789 = vmatpush1.msra.mxu0 0.0
        %2790 = vmatprep.subr.mxu0 0.0
        %2791 = vmatpush1.msra.mxu0 0.0
        %2792 = vmatprep.subr.mxu0 0.0
        %2793 = vmatpush1.msra.mxu0 0.0
        %2794 = vmatprep.subr.mxu0 0.0
        %2795 = vmatpush1.msra.mxu0 0.0
        %2796 = vmatprep.subr.mxu0 0.0
        %2797 = vmatpush1.msra.mxu0 0.0
        %2798 = vmatprep.subr.mxu0 0.0
        %2799 = vmatpush1.msra.mxu0 0.0
        %2800 = vmatprep.subr.mxu0 0.0
        %2801 = vmatpush1.msra.mxu0 0.0
        %2802 = vmatprep.subr.mxu0 0.0
        %2803 = vmatpush1.msra.mxu0 0.0
        %2804 = vmatprep.subr.mxu0 0.0
        %2805 = vmatpush1.msra.mxu0 0.0
        %2806 = vmatprep.subr.mxu0 0.0
        %2807 = vmatpush1.msra.mxu0 0.0
        %2808 = vmatprep.subr.mxu0 0.0
        %2809 = vmatpush1.msra.mxu0 0.0
        %2810 = vmatprep.mubr.f32.mxu0 0.0
        %2811 = vmatmul.mubr.f32.gmra.mrb[0].mxu0 %v2726
        %v2812 = vpop.f32.mrb[0].mxu0
        %v2813 = vadd.f32 0.0, %v2812
        %v2814 = vpop.f32.mrb[0].mxu0
        %2815 = vmatprep.mubr.f32.mxu0 0.0
        %2816 = vmatmul.mubr.f32.gmra.mrb[0].mxu0 %v2729
        %v2817 = vpop.f32.mrb[0].mxu0
        %v2818 = vadd.f32 0.0, %v2817
        %v2819 = vpop.f32.mrb[0].mxu0
        %2820 = vmatprep.mubr.f32.mxu0 0.0
        %2821 = vmatmul.mubr.f32.gmra.mrb[0].mxu0 %v2732
        %v2822 = vpop.f32.mrb[0].mxu0
        %v2823 = vadd.f32 0.0, %v2822
        %v2824 = vpop.f32.mrb[0].mxu0
        %2825 = vmatprep.mubr.f32.mxu0 0.0
        %2826 = vmatmul.mubr.f32.gmra.mrb[0].mxu0 %v2735
        %v2827 = vpop.f32.mrb[0].mxu0
        %v2828 = vadd.f32 0.0, %v2827
        %v2829 = vpop.f32.mrb[0].mxu0
        %2830 = vmatprep.mubr.f32.mxu0 0.0
        %2831 = vmatmul.mubr.f32.gmra.mrb[0].mxu0 %v2738
        %v2832 = vpop.f32.mrb[0].mxu0
        %v2833 = vadd.f32 0.0, %v2832
        %v2834 = vpop.f32.mrb[0].mxu0
        %2835 = vmatprep.mubr.f32.mxu0 0.0
        %2836 = vmatmul.mubr.f32.gmra.mrb[0].mxu0 %v2741
        %v2837 = vpop.f32.mrb[0].mxu0
        %v2838 = vadd.f32 0.0, %v2837
        %v2839 = vpop.f32.mrb[0].mxu0
        %2840 = vmatprep.mubr.f32.mxu0 0.0
        %2841 = vmatmul.mubr.f32.gmra.mrb[0].mxu0 %v2744
        %v2842 = vpop.f32.mrb[0].mxu0
        %v2843 = vadd.f32 0.0, %v2842
        %v2844 = vpop.f32.mrb[0].mxu0
        %2845 = vdwg.mxu0
        %2846 = vst.msk [vmem:[#allocation2] sm:$0xff] %vm2480, %v2813
        %2847 = vst.msk [vmem:[#allocation2 + $0x10] sm:$0xff] %vm2480, %v2818
        %2848 = vst.msk [vmem:[#allocation2 + $0x20] sm:$0xff] %vm2480, %v2823
        %2849 = vst.msk [vmem:[#allocation2 + $0x30] sm:$0xff] %vm2480, %v2828
        %2850 = vst.msk [vmem:[#allocation2 + $0x40] sm:$0xff] %vm2480, %v2833
        %2851 = vst.msk [vmem:[#allocation2 + $0x50] sm:$0xff] %vm2480, %v2838
        %2852 = vst.msk [vmem:[#allocation2 + $0x60] sm:$0xff] %vm2480, %v2843
        %v2853 = vld [vmem:[#allocation2] sm:$0xff]
        %v2854 = vld [vmem:[#allocation2 + $0x10] sm:$0xff]
        %2856 = vrot.lane.b32.xlu0 %v2854, 127
        %v2857 = vpop.permute.xlu0 %2856
        %v2859 = vadd.f32 %v2853, %v2857
        %v2860 = vld [vmem:[#allocation2 + $0x20] sm:$0xff]
        %2862 = vrot.lane.b32.xlu0 %v2860, 126
        %v2863 = vpop.permute.xlu0 %2862
        %v2865 = vadd.f32 %v2859, %v2863
        %v2866 = vld [vmem:[#allocation2 + $0x30] sm:$0xff]
        %2868 = vrot.lane.b32.xlu0 %v2866, 125
        %v2869 = vpop.permute.xlu0 %2868
        %v2871 = vadd.f32 %v2865, %v2869
        %v2872 = vld [vmem:[#allocation2 + $0x40] sm:$0xff]
        %2874 = vrot.lane.b32.xlu0 %v2872, 124
        %v2875 = vpop.permute.xlu0 %2874
        %v2877 = vadd.f32 %v2871, %v2875
        %v2878 = vld [vmem:[#allocation2 + $0x50] sm:$0xff]
        %2880 = vrot.lane.b32.xlu0 %v2878, 123
        %v2881 = vpop.permute.xlu0 %2880
        %v2883 = vadd.f32 %v2877, %v2881
        %v2884 = vld [vmem:[#allocation2 + $0x60] sm:$0xff]
        %2886 = vrot.lane.b32.xlu0 %v2884, 122
        %v2887 = vpop.permute.xlu0 %2886
        %v2889 = vadd.f32 %v2883, %v2887
        %v2890 = vld [vmem:[%s17] sm:$0xff]
        %2892 = vset.pattern.permute.xlu0 0
        %2893 = vperm.xlu0 %2892, %v2890
        %v2894 = vpop.permute.xlu0 %2893
        %v2896 = vadd.f32 %v2889, %v2894
        %v2897 = vmax.f32 %v2896, 0.0
        %v2898 = vadd.s32 %v890, 128
        %v2899 = vmul.u32 %v2601, 2
        %v2900 = vmul.u32 %v2602, 2
        %v2901 = vmul.u32 %v2603, 2
        %v2902 = vmul.u32 %v2604, 2
        %v2903 = vadd.s32 %v1304, 4
        %v2904 = vadd.s32 %v1305, 4
        %v2905 = vadd.s32 %v2190, 4
        %v2906 = vadd.s32 %v2191, 4
        %v2907 = vadd.s32 %v2899, 4
        %v2908 = vadd.s32 %v2900, 4
        %v2909 = vadd.s32 %v2901, 4
        %v2910 = vadd.s32 %v2902, 4
        %vm2911 = vcmp.eq.s32.totalorder %v890, %v2903
        %vm2912 = vcmp.eq.s32.totalorder %v2898, %v2903
        %vm2913 = vcmp.eq.s32.totalorder %v890, %v2904
        %vm2914 = vcmp.eq.s32.totalorder %v2898, %v2904
        %vm2915 = vcmp.eq.s32.totalorder %v890, %v2905
        %vm2916 = vcmp.eq.s32.totalorder %v2898, %v2905
        %vm2917 = vcmp.eq.s32.totalorder %v890, %v2906
        %vm2918 = vcmp.eq.s32.totalorder %v2898, %v2906
        %vm2919 = vcmp.eq.s32.totalorder %v890, %v2907
        %vm2920 = vcmp.eq.s32.totalorder %v2898, %v2907
        %vm2921 = vcmp.eq.s32.totalorder %v890, %v2908
        %vm2922 = vcmp.eq.s32.totalorder %v2898, %v2908
        %vm2923 = vcmp.eq.s32.totalorder %v890, %v2909
        %vm2924 = vcmp.eq.s32.totalorder %v2898, %v2909
        %vm2925 = vcmp.eq.s32.totalorder %v890, %v2910
        %vm2926 = vcmp.eq.s32.totalorder %v2898, %v2910
        %v2927 = vsel %vm2911, 1, 0
        %v2928 = vsel %vm2912, 1, 0
        %v2929 = vsel %vm2913, 1, 0
        %v2930 = vsel %vm2914, 1, 0
        %v2931 = vsel %vm2915, 1, 0
        %v2932 = vsel %vm2916, 1, 0
        %v2933 = vsel %vm2917, 1, 0
        %v2934 = vsel %vm2918, 1, 0
        %v2935 = vsel %vm2919, 1, 0
        %v2936 = vsel %vm2920, 1, 0
        %v2937 = vsel %vm2921, 1, 0
        %v2938 = vsel %vm2922, 1, 0
        %v2939 = vsel %vm2923, 1, 0
        %v2940 = vsel %vm2924, 1, 0
        %v2941 = vsel %vm2925, 1, 0
        %v2942 = vsel %vm2926, 1, 0
        %v2943 = vcvt.s32.f32 %v2927
        %v2944 = vcvt.s32.f32 %v2928
        %v2945 = vcvt.s32.f32 %v2929
        %v2946 = vcvt.s32.f32 %v2930
        %v2947 = vcvt.s32.f32 %v2931
        %v2948 = vcvt.s32.f32 %v2932
        %v2949 = vcvt.s32.f32 %v2933
        %v2950 = vcvt.s32.f32 %v2934
        %v2951 = vcvt.s32.f32 %v2935
        %v2952 = vcvt.s32.f32 %v2936
        %v2953 = vcvt.s32.f32 %v2937
        %v2954 = vcvt.s32.f32 %v2938
        %v2955 = vcvt.s32.f32 %v2939
        %v2956 = vcvt.s32.f32 %v2940
        %v2957 = vcvt.s32.f32 %v2941
        %v2958 = vcvt.s32.f32 %v2942
        %v2960 = vsel %vm1041, %v2897, 0
        %2962 = vmatprep.subr.mxu0 %v2944
        %2963 = vmatpush1.msra.mxu0 %v2943
        %2964 = vmatprep.subr.mxu0 %v2946
        %2965 = vmatpush1.msra.mxu0 %v2945
        %2966 = vmatprep.subr.mxu0 %v2948
        %2967 = vmatpush1.msra.mxu0 %v2947
        %2968 = vmatprep.subr.mxu0 %v2950
        %2969 = vmatpush1.msra.mxu0 %v2949
        %2970 = vmatprep.subr.mxu0 %v2952
        %2971 = vmatpush1.msra.mxu0 %v2951
        %2972 = vmatprep.subr.mxu0 %v2954
        %2973 = vmatpush1.msra.mxu0 %v2953
        %2974 = vmatprep.subr.mxu0 %v2956
        %2975 = vmatpush1.msra.mxu0 %v2955
        %2976 = vmatprep.subr.mxu0 %v2958
        %2977 = vmatpush1.msra.mxu0 %v2957
        %2978 = vmatprep.subr.mxu0 0.0
        %2979 = vmatpush1.msra.mxu0 0.0
        %2980 = vmatprep.subr.mxu0 0.0
        %2981 = vmatpush1.msra.mxu0 0.0
        %2982 = vmatprep.subr.mxu0 0.0
        %2983 = vmatpush1.msra.mxu0 0.0
        %2984 = vmatprep.subr.mxu0 0.0
        %2985 = vmatpush1.msra.mxu0 0.0
        %2986 = vmatprep.subr.mxu0 0.0
        %2987 = vmatpush1.msra.mxu0 0.0
        %2988 = vmatprep.subr.mxu0 0.0
        %2989 = vmatpush1.msra.mxu0 0.0
        %2990 = vmatprep.subr.mxu0 0.0
        %2991 = vmatpush1.msra.mxu0 0.0
        %2992 = vmatprep.subr.mxu0 0.0
        %2993 = vmatpush1.msra.mxu0 0.0
        %2994 = vmatprep.subr.mxu0 0.0
        %2995 = vmatpush1.msra.mxu0 0.0
        %2996 = vmatprep.subr.mxu0 0.0
        %2997 = vmatpush1.msra.mxu0 0.0
        %2998 = vmatprep.subr.mxu0 0.0
        %2999 = vmatpush1.msra.mxu0 0.0
        %3000 = vmatprep.subr.mxu0 0.0
        %3001 = vmatpush1.msra.mxu0 0.0
        %3002 = vmatprep.subr.mxu0 0.0
        %3003 = vmatpush1.msra.mxu0 0.0
        %3004 = vmatprep.subr.mxu0 0.0
        %3005 = vmatpush1.msra.mxu0 0.0
        %3006 = vmatprep.subr.mxu0 0.0
        %3007 = vmatpush1.msra.mxu0 0.0
        %3008 = vmatprep.subr.mxu0 0.0
        %3009 = vmatpush1.msra.mxu0 0.0
        %3010 = vmatprep.subr.mxu0 0.0
        %3011 = vmatpush1.msra.mxu0 0.0
        %3012 = vmatprep.subr.mxu0 0.0
        %3013 = vmatpush1.msra.mxu0 0.0
        %3014 = vmatprep.subr.mxu0 0.0
        %3015 = vmatpush1.msra.mxu0 0.0
        %3016 = vmatprep.subr.mxu0 0.0
        %3017 = vmatpush1.msra.mxu0 0.0
        %3018 = vmatprep.subr.mxu0 0.0
        %3019 = vmatpush1.msra.mxu0 0.0
        %3020 = vmatprep.subr.mxu0 0.0
        %3021 = vmatpush1.msra.mxu0 0.0
        %3022 = vmatprep.subr.mxu0 0.0
        %3023 = vmatpush1.msra.mxu0 0.0
        %3024 = vmatprep.subr.mxu0 0.0
        %3025 = vmatpush1.msra.mxu0 0.0
        %3026 = vmatprep.mubr.f32.mxu0 0.0
        %3027 = vmatmul.mubr.f32.gmra.mrb[0].mxu0 %v2960
        %v3028 = vpop.f32.mrb[0].mxu0
        %v3029 = vadd.f32 0.0, %v3028
        %v3030 = vpop.f32.mrb[0].mxu0
        %v3031 = vadd.f32 0.0, %v3030
        %3032 = vdwg.mxu0
        %v3033 = vld [vmem:[%s18] sm:$0xff]
        %v3034 = vld [vmem:[%s18 + $0x8] sm:$0xff]
        %v3035 = vld [vmem:[%s18 + $0x10] sm:$0xff]
        %v3036 = vld [vmem:[%s18 + $0x18] sm:$0xff]
        %v3037 = vld [vmem:[%s18 + $0x20] sm:$0xff]
        %v3038 = vld [vmem:[%s18 + $0x28] sm:$0xff]
        %v3039 = vld [vmem:[%s18 + $0x30] sm:$0xff]
        %v3040 = vld [vmem:[%s18 + $0x38] sm:$0xff]
        %v3041 = vld [vmem:[%s18 + $0x40] sm:$0xff]
        %vm3042 = vcmask 64512
        %v3044 = vsel %vm3042, %v3033, 0
        %v3047 = vsel %vm3042, %v3034, 0
        %v3050 = vsel %vm3042, %v3035, 0
        %v3053 = vsel %vm3042, %v3036, 0
        %v3056 = vsel %vm3042, %v3037, 0
        %v3059 = vsel %vm3042, %v3038, 0
        %v3062 = vsel %vm3042, %v3039, 0
        %v3065 = vsel %vm3042, %v3040, 0
        %v3068 = vsel %vm3042, %v3041, 0
        %3070 = vmatprep.subr.mxu0 %v3031
        %3071 = vmatpush1.msra.mxu0 %v3029
        %3072 = vmatprep.subr.mxu0 0.0
        %3073 = vmatpush1.msra.mxu0 0.0
        %3074 = vmatprep.subr.mxu0 0.0
        %3075 = vmatpush1.msra.mxu0 0.0
        %3076 = vmatprep.subr.mxu0 0.0
        %3077 = vmatpush1.msra.mxu0 0.0
        %3078 = vmatprep.subr.mxu0 0.0
        %3079 = vmatpush1.msra.mxu0 0.0
        %3080 = vmatprep.subr.mxu0 0.0
        %3081 = vmatpush1.msra.mxu0 0.0
        %3082 = vmatprep.subr.mxu0 0.0
        %3083 = vmatpush1.msra.mxu0 0.0
        %3084 = vmatprep.subr.mxu0 0.0
        %3085 = vmatpush1.msra.mxu0 0.0
        %3086 = vmatprep.subr.mxu0 0.0
        %3087 = vmatpush1.msra.mxu0 0.0
        %3088 = vmatprep.subr.mxu0 0.0
        %3089 = vmatpush1.msra.mxu0 0.0
        %3090 = vmatprep.subr.mxu0 0.0
        %3091 = vmatpush1.msra.mxu0 0.0
        %3092 = vmatprep.subr.mxu0 0.0
        %3093 = vmatpush1.msra.mxu0 0.0
        %3094 = vmatprep.subr.mxu0 0.0
        %3095 = vmatpush1.msra.mxu0 0.0
        %3096 = vmatprep.subr.mxu0 0.0
        %3097 = vmatpush1.msra.mxu0 0.0
        %3098 = vmatprep.subr.mxu0 0.0
        %3099 = vmatpush1.msra.mxu0 0.0
        %3100 = vmatprep.subr.mxu0 0.0
        %3101 = vmatpush1.msra.mxu0 0.0
        %3102 = vmatprep.subr.mxu0 0.0
        %3103 = vmatpush1.msra.mxu0 0.0
        %3104 = vmatprep.subr.mxu0 0.0
        %3105 = vmatpush1.msra.mxu0 0.0
        %3106 = vmatprep.subr.mxu0 0.0
        %3107 = vmatpush1.msra.mxu0 0.0
        %3108 = vmatprep.subr.mxu0 0.0
        %3109 = vmatpush1.msra.mxu0 0.0
        %3110 = vmatprep.subr.mxu0 0.0
        %3111 = vmatpush1.msra.mxu0 0.0
        %3112 = vmatprep.subr.mxu0 0.0
        %3113 = vmatpush1.msra.mxu0 0.0
        %3114 = vmatprep.subr.mxu0 0.0
        %3115 = vmatpush1.msra.mxu0 0.0
        %3116 = vmatprep.subr.mxu0 0.0
        %3117 = vmatpush1.msra.mxu0 0.0
        %3118 = vmatprep.subr.mxu0 0.0
        %3119 = vmatpush1.msra.mxu0 0.0
        %3120 = vmatprep.subr.mxu0 0.0
        %3121 = vmatpush1.msra.mxu0 0.0
        %3122 = vmatprep.subr.mxu0 0.0
        %3123 = vmatpush1.msra.mxu0 0.0
        %3124 = vmatprep.subr.mxu0 0.0
        %3125 = vmatpush1.msra.mxu0 0.0
        %3126 = vmatprep.subr.mxu0 0.0
        %3127 = vmatpush1.msra.mxu0 0.0
        %3128 = vmatprep.subr.mxu0 0.0
        %3129 = vmatpush1.msra.mxu0 0.0
        %3130 = vmatprep.subr.mxu0 0.0
        %3131 = vmatpush1.msra.mxu0 0.0
        %3132 = vmatprep.subr.mxu0 0.0
        %3133 = vmatpush1.msra.mxu0 0.0
        %3134 = vmatprep.mubr.f32.mxu0 0.0
        %3135 = vmatmul.mubr.f32.gmra.mrb[0].mxu0 %v3044
        %v3136 = vpop.f32.mrb[0].mxu0
        %v3137 = vadd.f32 0.0, %v3136
        %v3138 = vpop.f32.mrb[0].mxu0
        %v3139 = vadd.f32 0.0, %v3138
        %3140 = vmatprep.mubr.f32.mxu0 0.0
        %3141 = vmatmul.mubr.f32.gmra.mrb[0].mxu0 %v3047
        %v3142 = vpop.f32.mrb[0].mxu0
        %v3143 = vadd.f32 0.0, %v3142
        %v3144 = vpop.f32.mrb[0].mxu0
        %v3145 = vadd.f32 0.0, %v3144
        %3146 = vmatprep.mubr.f32.mxu0 0.0
        %3147 = vmatmul.mubr.f32.gmra.mrb[0].mxu0 %v3050
        %v3148 = vpop.f32.mrb[0].mxu0
        %v3149 = vadd.f32 0.0, %v3148
        %v3150 = vpop.f32.mrb[0].mxu0
        %v3151 = vadd.f32 0.0, %v3150
        %3152 = vmatprep.mubr.f32.mxu0 0.0
        %3153 = vmatmul.mubr.f32.gmra.mrb[0].mxu0 %v3053
        %v3154 = vpop.f32.mrb[0].mxu0
        %v3155 = vadd.f32 0.0, %v3154
        %v3156 = vpop.f32.mrb[0].mxu0
        %v3157 = vadd.f32 0.0, %v3156
        %3158 = vmatprep.mubr.f32.mxu0 0.0
        %3159 = vmatmul.mubr.f32.gmra.mrb[0].mxu0 %v3056
        %v3160 = vpop.f32.mrb[0].mxu0
        %v3161 = vadd.f32 0.0, %v3160
        %v3162 = vpop.f32.mrb[0].mxu0
        %v3163 = vadd.f32 0.0, %v3162
        %3164 = vmatprep.mubr.f32.mxu0 0.0
        %3165 = vmatmul.mubr.f32.gmra.mrb[0].mxu0 %v3059
        %v3166 = vpop.f32.mrb[0].mxu0
        %v3167 = vadd.f32 0.0, %v3166
        %v3168 = vpop.f32.mrb[0].mxu0
        %v3169 = vadd.f32 0.0, %v3168
        %3170 = vmatprep.mubr.f32.mxu0 0.0
        %3171 = vmatmul.mubr.f32.gmra.mrb[0].mxu0 %v3062
        %v3172 = vpop.f32.mrb[0].mxu0
        %v3173 = vadd.f32 0.0, %v3172
        %v3174 = vpop.f32.mrb[0].mxu0
        %v3175 = vadd.f32 0.0, %v3174
        %3176 = vmatprep.mubr.f32.mxu0 0.0
        %3177 = vmatmul.mubr.f32.gmra.mrb[0].mxu0 %v3065
        %v3178 = vpop.f32.mrb[0].mxu0
        %v3179 = vadd.f32 0.0, %v3178
        %v3180 = vpop.f32.mrb[0].mxu0
        %v3181 = vadd.f32 0.0, %v3180
        %3182 = vmatprep.mubr.f32.mxu0 0.0
        %3183 = vmatmul.mubr.f32.gmra.mrb[0].mxu0 %v3068
        %v3184 = vpop.f32.mrb[0].mxu0
        %v3185 = vadd.f32 0.0, %v3184
        %v3186 = vpop.f32.mrb[0].mxu0
        %v3187 = vadd.f32 0.0, %v3186
        %3188 = vdwg.mxu0
        %3189 = vst [vmem:[#allocation2] sm:$0xff] %v3137
        %3190 = vst.msk [vmem:[#allocation2 + $0x8] sm:$0xff] %vm3042, %v3139
        %3191 = vst [vmem:[#allocation2 + $0x10] sm:$0xff] %v3143
        %3192 = vst.msk [vmem:[#allocation2 + $0x18] sm:$0xff] %vm3042, %v3145
        %3193 = vst [vmem:[#allocation2 + $0x20] sm:$0xff] %v3149
        %3194 = vst.msk [vmem:[#allocation2 + $0x28] sm:$0xff] %vm3042, %v3151
        %3195 = vst [vmem:[#allocation2 + $0x30] sm:$0xff] %v3155
        %3196 = vst.msk [vmem:[#allocation2 + $0x38] sm:$0xff] %vm3042, %v3157
        %3197 = vst [vmem:[#allocation2 + $0x40] sm:$0xff] %v3161
        %3198 = vst.msk [vmem:[#allocation2 + $0x48] sm:$0xff] %vm3042, %v3163
        %3199 = vst [vmem:[#allocation2 + $0x50] sm:$0xff] %v3167
        %3200 = vst.msk [vmem:[#allocation2 + $0x58] sm:$0xff] %vm3042, %v3169
        %3201 = vst [vmem:[#allocation2 + $0x60] sm:$0xff] %v3173
        %3202 = vst.msk [vmem:[#allocation2 + $0x68] sm:$0xff] %vm3042, %v3175
        %3203 = vst [vmem:[#allocation2 + $0x70] sm:$0xff] %v3179
        %3204 = vst.msk [vmem:[#allocation2 + $0x78] sm:$0xff] %vm3042, %v3181
        %3205 = vst [vmem:[#allocation2 + $0x80] sm:$0xff] %v3185
        %3206 = vst.msk [vmem:[#allocation2 + $0x88] sm:$0xff] %vm3042, %v3187
        %v3207 = vld [vmem:[#allocation2] sm:$0xff]
        %v3208 = vld [vmem:[#allocation2 + $0x10] sm:$0xff]
        %v3209 = vld [vmem:[#allocation2 + $0x18] sm:$0xff]
        %3212 = vrot.lane.b32.xlu0 %v3208, 127
        %v3213 = vpop.permute.xlu0 %3212
        %3214 = vrot.lane.b32.xlu0 %v3209, 127
        %v3215 = vpop.permute.xlu0 %3214
        %vm3216 = vcmask 1039360
        %v3217 = vsel %vm3216, %v3213, %v3215
        %v3219 = vadd.f32 %v3207, %v3217
        %v3220 = vld [vmem:[#allocation2 + $0x20] sm:$0xff]
        %v3221 = vld [vmem:[#allocation2 + $0x28] sm:$0xff]
        %3224 = vrot.lane.b32.xlu0 %v3220, 126
        %v3225 = vpop.permute.xlu0 %3224
        %3226 = vrot.lane.b32.xlu0 %v3221, 126
        %v3227 = vpop.permute.xlu0 %3226
        %vm3228 = vcmask 1031168
        %v3229 = vsel %vm3228, %v3225, %v3227
        %v3231 = vadd.f32 %v3219, %v3229
        %v3232 = vld [vmem:[#allocation2 + $0x30] sm:$0xff]
        %v3233 = vld [vmem:[#allocation2 + $0x38] sm:$0xff]
        %3236 = vrot.lane.b32.xlu0 %v3232, 125
        %v3237 = vpop.permute.xlu0 %3236
        %3238 = vrot.lane.b32.xlu0 %v3233, 125
        %v3239 = vpop.permute.xlu0 %3238
        %vm3240 = vcmask 1022976
        %v3241 = vsel %vm3240, %v3237, %v3239
        %v3243 = vadd.f32 %v3231, %v3241
        %v3244 = vld [vmem:[#allocation2 + $0x40] sm:$0xff]
        %v3245 = vld [vmem:[#allocation2 + $0x48] sm:$0xff]
        %3248 = vrot.lane.b32.xlu0 %v3244, 124
        %v3249 = vpop.permute.xlu0 %3248
        %3250 = vrot.lane.b32.xlu0 %v3245, 124
        %v3251 = vpop.permute.xlu0 %3250
        %vm3252 = vcmask 1014784
        %v3253 = vsel %vm3252, %v3249, %v3251
        %v3255 = vadd.f32 %v3243, %v3253
        %v3256 = vld [vmem:[#allocation2 + $0x50] sm:$0xff]
        %v3257 = vld [vmem:[#allocation2 + $0x58] sm:$0xff]
        %3260 = vrot.lane.b32.xlu0 %v3256, 123
        %v3261 = vpop.permute.xlu0 %3260
        %3262 = vrot.lane.b32.xlu0 %v3257, 123
        %v3263 = vpop.permute.xlu0 %3262
        %vm3264 = vcmask 1006592
        %v3265 = vsel %vm3264, %v3261, %v3263
        %v3267 = vadd.f32 %v3255, %v3265
        %v3268 = vld [vmem:[#allocation2 + $0x60] sm:$0xff]
        %v3269 = vld [vmem:[#allocation2 + $0x68] sm:$0xff]
        %3272 = vrot.lane.b32.xlu0 %v3268, 122
        %v3273 = vpop.permute.xlu0 %3272
        %3274 = vrot.lane.b32.xlu0 %v3269, 122
        %v3275 = vpop.permute.xlu0 %3274
        %vm3276 = vcmask 998400
        %v3277 = vsel %vm3276, %v3273, %v3275
        %v3279 = vadd.f32 %v3267, %v3277
        %v3280 = vld [vmem:[#allocation2 + $0x70] sm:$0xff]
        %v3281 = vld [vmem:[#allocation2 + $0x78] sm:$0xff]
        %3284 = vrot.lane.b32.xlu0 %v3280, 121
        %v3285 = vpop.permute.xlu0 %3284
        %3286 = vrot.lane.b32.xlu0 %v3281, 121
        %v3287 = vpop.permute.xlu0 %3286
        %vm3288 = vcmask 990208
        %v3289 = vsel %vm3288, %v3285, %v3287
        %v3291 = vadd.f32 %v3279, %v3289
        %v3292 = vld [vmem:[#allocation2 + $0x80] sm:$0xff]
        %v3293 = vld [vmem:[#allocation2 + $0x88] sm:$0xff]
        %3296 = vrot.lane.b32.xlu0 %v3292, 120
        %v3297 = vpop.permute.xlu0 %3296
        %3298 = vrot.lane.b32.xlu0 %v3293, 120
        %v3299 = vpop.permute.xlu0 %3298
        %vm3300 = vcmask 982016
        %v3301 = vsel %vm3300, %v3297, %v3299
        %v3303 = vadd.f32 %v3291, %v3301
        %v3304 = vld [vmem:[%s19] sm:$0xff]
        %3306 = vset.pattern.permute.xlu0 0
        %3307 = vperm.xlu0 %3306, %v3304
        %v3308 = vpop.permute.xlu0 %3307
        %v3310 = vadd.f32 %v3303, %v3308
        %v3311 = vmax.f32 %v3310, 0.0
        %v3312 = vadd.s32 %v887, 64
        %v3313 = vadd.s32 %v887, 72
        %v3314 = vadd.s32 %v887, 80
        %v3315 = vadd.s32 %v887, 88
        %v3316 = vadd.s32 %v887, 96
        %v3317 = vadd.s32 %v887, 104
        %v3318 = vadd.s32 %v887, 112
        %v3319 = vadd.s32 %v887, 120
        %v3320 = vadd.s32 %v887, 4
        %v3321 = vadd.s32 %v888, 4
        %v3322 = vadd.s32 %v1842, 4
        %v3323 = vadd.s32 %v1843, 4
        %v3324 = vadd.s32 %v2601, 4
        %v3325 = vadd.s32 %v2602, 4
        %v3326 = vadd.s32 %v2603, 4
        %v3327 = vadd.s32 %v2604, 4
        %v3328 = vadd.s32 %v3312, 4
        %v3329 = vadd.s32 %v3313, 4
        %v3330 = vadd.s32 %v3314, 4
        %v3331 = vadd.s32 %v3315, 4
        %v3332 = vadd.s32 %v3316, 4
        %v3333 = vadd.s32 %v3317, 4
        %v3334 = vadd.s32 %v3318, 4
        %v3335 = vadd.s32 %v3319, 4
        %vm3336 = vcmp.eq.s32.totalorder %v890, %v3320
        %vm3337 = vcmp.eq.s32.totalorder %v2898, %v3320
        %vm3338 = vcmp.eq.s32.totalorder %v890, %v3321
        %vm3339 = vcmp.eq.s32.totalorder %v2898, %v3321
        %vm3340 = vcmp.eq.s32.totalorder %v890, %v3322
        %vm3341 = vcmp.eq.s32.totalorder %v2898, %v3322
        %vm3342 = vcmp.eq.s32.totalorder %v890, %v3323
        %vm3343 = vcmp.eq.s32.totalorder %v2898, %v3323
        %vm3344 = vcmp.eq.s32.totalorder %v890, %v3324
        %vm3345 = vcmp.eq.s32.totalorder %v2898, %v3324
        %vm3346 = vcmp.eq.s32.totalorder %v890, %v3325
        %vm3347 = vcmp.eq.s32.totalorder %v2898, %v3325
        %vm3348 = vcmp.eq.s32.totalorder %v890, %v3326
        %vm3349 = vcmp.eq.s32.totalorder %v2898, %v3326
        %vm3350 = vcmp.eq.s32.totalorder %v890, %v3327
        %vm3351 = vcmp.eq.s32.totalorder %v2898, %v3327
        %vm3352 = vcmp.eq.s32.totalorder %v890, %v3328
        %vm3353 = vcmp.eq.s32.totalorder %v2898, %v3328
        %vm3354 = vcmp.eq.s32.totalorder %v890, %v3329
        %vm3355 = vcmp.eq.s32.totalorder %v2898, %v3329
        %vm3356 = vcmp.eq.s32.totalorder %v890, %v3330
        %vm3357 = vcmp.eq.s32.totalorder %v2898, %v3330
        %vm3358 = vcmp.eq.s32.totalorder %v890, %v3331
        %vm3359 = vcmp.eq.s32.totalorder %v2898, %v3331
        %vm3360 = vcmp.eq.s32.totalorder %v890, %v3332
        %vm3361 = vcmp.eq.s32.totalorder %v2898, %v3332
        %vm3362 = vcmp.eq.s32.totalorder %v890, %v3333
        %vm3363 = vcmp.eq.s32.totalorder %v2898, %v3333
        %vm3364 = vcmp.eq.s32.totalorder %v890, %v3334
        %vm3365 = vcmp.eq.s32.totalorder %v2898, %v3334
        %vm3366 = vcmp.eq.s32.totalorder %v890, %v3335
        %vm3367 = vcmp.eq.s32.totalorder %v2898, %v3335
        %v3368 = vsel %vm3336, 1, 0
        %v3369 = vsel %vm3337, 1, 0
        %v3370 = vsel %vm3338, 1, 0
        %v3371 = vsel %vm3339, 1, 0
        %v3372 = vsel %vm3340, 1, 0
        %v3373 = vsel %vm3341, 1, 0
        %v3374 = vsel %vm3342, 1, 0
        %v3375 = vsel %vm3343, 1, 0
        %v3376 = vsel %vm3344, 1, 0
        %v3377 = vsel %vm3345, 1, 0
        %v3378 = vsel %vm3346, 1, 0
        %v3379 = vsel %vm3347, 1, 0
        %v3380 = vsel %vm3348, 1, 0
        %v3381 = vsel %vm3349, 1, 0
        %v3382 = vsel %vm3350, 1, 0
        %v3383 = vsel %vm3351, 1, 0
        %v3384 = vsel %vm3352, 1, 0
        %v3385 = vsel %vm3353, 1, 0
        %v3386 = vsel %vm3354, 1, 0
        %v3387 = vsel %vm3355, 1, 0
        %v3388 = vsel %vm3356, 1, 0
        %v3389 = vsel %vm3357, 1, 0
        %v3390 = vsel %vm3358, 1, 0
        %v3391 = vsel %vm3359, 1, 0
        %v3392 = vsel %vm3360, 1, 0
        %v3393 = vsel %vm3361, 1, 0
        %v3394 = vsel %vm3362, 1, 0
        %v3395 = vsel %vm3363, 1, 0
        %v3396 = vsel %vm3364, 1, 0
        %v3397 = vsel %vm3365, 1, 0
        %v3398 = vsel %vm3366, 1, 0
        %v3399 = vsel %vm3367, 1, 0
        %v3400 = vcvt.s32.f32 %v3368
        %v3401 = vcvt.s32.f32 %v3369
        %v3402 = vcvt.s32.f32 %v3370
        %v3403 = vcvt.s32.f32 %v3371
        %v3404 = vcvt.s32.f32 %v3372
        %v3405 = vcvt.s32.f32 %v3373
        %v3406 = vcvt.s32.f32 %v3374
        %v3407 = vcvt.s32.f32 %v3375
        %v3408 = vcvt.s32.f32 %v3376
        %v3409 = vcvt.s32.f32 %v3377
        %v3410 = vcvt.s32.f32 %v3378
        %v3411 = vcvt.s32.f32 %v3379
        %v3412 = vcvt.s32.f32 %v3380
        %v3413 = vcvt.s32.f32 %v3381
        %v3414 = vcvt.s32.f32 %v3382
        %v3415 = vcvt.s32.f32 %v3383
        %v3416 = vcvt.s32.f32 %v3384
        %v3417 = vcvt.s32.f32 %v3385
        %v3418 = vcvt.s32.f32 %v3386
        %v3419 = vcvt.s32.f32 %v3387
        %v3420 = vcvt.s32.f32 %v3388
        %v3421 = vcvt.s32.f32 %v3389
        %v3422 = vcvt.s32.f32 %v3390
        %v3423 = vcvt.s32.f32 %v3391
        %v3424 = vcvt.s32.f32 %v3392
        %v3425 = vcvt.s32.f32 %v3393
        %v3426 = vcvt.s32.f32 %v3394
        %v3427 = vcvt.s32.f32 %v3395
        %v3428 = vcvt.s32.f32 %v3396
        %v3429 = vcvt.s32.f32 %v3397
        %v3430 = vcvt.s32.f32 %v3398
        %v3431 = vcvt.s32.f32 %v3399
        %3432 = vmatprep.subr.mxu0 %v3401
        %3433 = vmatpush1.msra.mxu0 %v3400
        %3434 = vmatprep.subr.mxu0 %v3403
        %3435 = vmatpush1.msra.mxu0 %v3402
        %3436 = vmatprep.subr.mxu0 %v3405
        %3437 = vmatpush1.msra.mxu0 %v3404
        %3438 = vmatprep.subr.mxu0 %v3407
        %3439 = vmatpush1.msra.mxu0 %v3406
        %3440 = vmatprep.subr.mxu0 %v3409
        %3441 = vmatpush1.msra.mxu0 %v3408
        %3442 = vmatprep.subr.mxu0 %v3411
        %3443 = vmatpush1.msra.mxu0 %v3410
        %3444 = vmatprep.subr.mxu0 %v3413
        %3445 = vmatpush1.msra.mxu0 %v3412
        %3446 = vmatprep.subr.mxu0 %v3415
        %3447 = vmatpush1.msra.mxu0 %v3414
        %3448 = vmatprep.subr.mxu0 %v3417
        %3449 = vmatpush1.msra.mxu0 %v3416
        %3450 = vmatprep.subr.mxu0 %v3419
        %3451 = vmatpush1.msra.mxu0 %v3418
        %3452 = vmatprep.subr.mxu0 %v3421
        %3453 = vmatpush1.msra.mxu0 %v3420
        %3454 = vmatprep.subr.mxu0 %v3423
        %3455 = vmatpush1.msra.mxu0 %v3422
        %3456 = vmatprep.subr.mxu0 %v3425
        %3457 = vmatpush1.msra.mxu0 %v3424
        %3458 = vmatprep.subr.mxu0 %v3427
        %3459 = vmatpush1.msra.mxu0 %v3426
        %3460 = vmatprep.subr.mxu0 %v3429
        %3461 = vmatpush1.msra.mxu0 %v3428
        %3462 = vmatprep.subr.mxu0 %v3431
        %3463 = vmatpush1.msra.mxu0 %v3430
        %3464 = vmatprep.subr.mxu0 0.0
        %3465 = vmatpush1.msra.mxu0 0.0
        %3466 = vmatprep.subr.mxu0 0.0
        %3467 = vmatpush1.msra.mxu0 0.0
        %3468 = vmatprep.subr.mxu0 0.0
        %3469 = vmatpush1.msra.mxu0 0.0
        %3470 = vmatprep.subr.mxu0 0.0
        %3471 = vmatpush1.msra.mxu0 0.0
        %3472 = vmatprep.subr.mxu0 0.0
        %3473 = vmatpush1.msra.mxu0 0.0
        %3474 = vmatprep.subr.mxu0 0.0
        %3475 = vmatpush1.msra.mxu0 0.0
        %3476 = vmatprep.subr.mxu0 0.0
        %3477 = vmatpush1.msra.mxu0 0.0
        %3478 = vmatprep.subr.mxu0 0.0
        %3479 = vmatpush1.msra.mxu0 0.0
        %3480 = vmatprep.subr.mxu0 0.0
        %3481 = vmatpush1.msra.mxu0 0.0
        %3482 = vmatprep.subr.mxu0 0.0
        %3483 = vmatpush1.msra.mxu0 0.0
        %3484 = vmatprep.subr.mxu0 0.0
        %3485 = vmatpush1.msra.mxu0 0.0
        %3486 = vmatprep.subr.mxu0 0.0
        %3487 = vmatpush1.msra.mxu0 0.0
        %3488 = vmatprep.subr.mxu0 0.0
        %3489 = vmatpush1.msra.mxu0 0.0
        %3490 = vmatprep.subr.mxu0 0.0
        %3491 = vmatpush1.msra.mxu0 0.0
        %3492 = vmatprep.subr.mxu0 0.0
        %3493 = vmatpush1.msra.mxu0 0.0
        %3494 = vmatprep.subr.mxu0 0.0
        %3495 = vmatpush1.msra.mxu0 0.0
        %3496 = vmatprep.mubr.f32.mxu0 0.0
        %3497 = vmatmul.mubr.f32.gmra.mrb[0].mxu0 %v3311
        %v3498 = vpop.f32.mrb[0].mxu0
        %v3499 = vadd.f32 0.0, %v3498
        %v3500 = vpop.f32.mrb[0].mxu0
        %v3501 = vadd.f32 0.0, %v3500
        %3502 = vdwg.mxu0
        %v3503 = vld [vmem:[%s20] sm:$0xff]
        %v3504 = vld [vmem:[%s20 + $0x8] sm:$0xff]
        %v3505 = vld [vmem:[%s20 + $0x10] sm:$0xff]
        %v3506 = vld [vmem:[%s20 + $0x18] sm:$0xff]
        %v3507 = vld [vmem:[%s20 + $0x20] sm:$0xff]
        %v3508 = vld [vmem:[%s20 + $0x28] sm:$0xff]
        %v3509 = vld [vmem:[%s20 + $0x30] sm:$0xff]
        %v3510 = vld [vmem:[%s20 + $0x38] sm:$0xff]
        %v3511 = vld [vmem:[%s20 + $0x40] sm:$0xff]
        %v3513 = vsel %vm3042, %v3503, 0
        %v3516 = vsel %vm3042, %v3504, 0
        %v3519 = vsel %vm3042, %v3505, 0
        %v3522 = vsel %vm3042, %v3506, 0
        %v3525 = vsel %vm3042, %v3507, 0
        %v3528 = vsel %vm3042, %v3508, 0
        %v3531 = vsel %vm3042, %v3509, 0
        %v3534 = vsel %vm3042, %v3510, 0
        %v3537 = vsel %vm3042, %v3511, 0
        %3539 = vmatprep.subr.mxu0 %v3501
        %3540 = vmatpush1.msra.mxu0 %v3499
        %3541 = vmatprep.subr.mxu0 0.0
        %3542 = vmatpush1.msra.mxu0 0.0
        %3543 = vmatprep.subr.mxu0 0.0
        %3544 = vmatpush1.msra.mxu0 0.0
        %3545 = vmatprep.subr.mxu0 0.0
        %3546 = vmatpush1.msra.mxu0 0.0
        %3547 = vmatprep.subr.mxu0 0.0
        %3548 = vmatpush1.msra.mxu0 0.0
        %3549 = vmatprep.subr.mxu0 0.0
        %3550 = vmatpush1.msra.mxu0 0.0
        %3551 = vmatprep.subr.mxu0 0.0
        %3552 = vmatpush1.msra.mxu0 0.0
        %3553 = vmatprep.subr.mxu0 0.0
        %3554 = vmatpush1.msra.mxu0 0.0
        %3555 = vmatprep.subr.mxu0 0.0
        %3556 = vmatpush1.msra.mxu0 0.0
        %3557 = vmatprep.subr.mxu0 0.0
        %3558 = vmatpush1.msra.mxu0 0.0
        %3559 = vmatprep.subr.mxu0 0.0
        %3560 = vmatpush1.msra.mxu0 0.0
        %3561 = vmatprep.subr.mxu0 0.0
        %3562 = vmatpush1.msra.mxu0 0.0
        %3563 = vmatprep.subr.mxu0 0.0
        %3564 = vmatpush1.msra.mxu0 0.0
        %3565 = vmatprep.subr.mxu0 0.0
        %3566 = vmatpush1.msra.mxu0 0.0
        %3567 = vmatprep.subr.mxu0 0.0
        %3568 = vmatpush1.msra.mxu0 0.0
        %3569 = vmatprep.subr.mxu0 0.0
        %3570 = vmatpush1.msra.mxu0 0.0
        %3571 = vmatprep.subr.mxu0 0.0
        %3572 = vmatpush1.msra.mxu0 0.0
        %3573 = vmatprep.subr.mxu0 0.0
        %3574 = vmatpush1.msra.mxu0 0.0
        %3575 = vmatprep.subr.mxu0 0.0
        %3576 = vmatpush1.msra.mxu0 0.0
        %3577 = vmatprep.subr.mxu0 0.0
        %3578 = vmatpush1.msra.mxu0 0.0
        %3579 = vmatprep.subr.mxu0 0.0
        %3580 = vmatpush1.msra.mxu0 0.0
        %3581 = vmatprep.subr.mxu0 0.0
        %3582 = vmatpush1.msra.mxu0 0.0
        %3583 = vmatprep.subr.mxu0 0.0
        %3584 = vmatpush1.msra.mxu0 0.0
        %3585 = vmatprep.subr.mxu0 0.0
        %3586 = vmatpush1.msra.mxu0 0.0
        %3587 = vmatprep.subr.mxu0 0.0
        %3588 = vmatpush1.msra.mxu0 0.0
        %3589 = vmatprep.subr.mxu0 0.0
        %3590 = vmatpush1.msra.mxu0 0.0
        %3591 = vmatprep.subr.mxu0 0.0
        %3592 = vmatpush1.msra.mxu0 0.0
        %3593 = vmatprep.subr.mxu0 0.0
        %3594 = vmatpush1.msra.mxu0 0.0
        %3595 = vmatprep.subr.mxu0 0.0
        %3596 = vmatpush1.msra.mxu0 0.0
        %3597 = vmatprep.subr.mxu0 0.0
        %3598 = vmatpush1.msra.mxu0 0.0
        %3599 = vmatprep.subr.mxu0 0.0
        %3600 = vmatpush1.msra.mxu0 0.0
        %3601 = vmatprep.subr.mxu0 0.0
        %3602 = vmatpush1.msra.mxu0 0.0
        %3603 = vmatprep.mubr.f32.mxu0 0.0
        %3604 = vmatmul.mubr.f32.gmra.mrb[0].mxu0 %v3513
        %v3605 = vpop.f32.mrb[0].mxu0
        %v3606 = vadd.f32 0.0, %v3605
        %v3607 = vpop.f32.mrb[0].mxu0
        %v3608 = vadd.f32 0.0, %v3607
        %3609 = vmatprep.mubr.f32.mxu0 0.0
        %3610 = vmatmul.mubr.f32.gmra.mrb[0].mxu0 %v3516
        %v3611 = vpop.f32.mrb[0].mxu0
        %v3612 = vadd.f32 0.0, %v3611
        %v3613 = vpop.f32.mrb[0].mxu0
        %v3614 = vadd.f32 0.0, %v3613
        %3615 = vmatprep.mubr.f32.mxu0 0.0
        %3616 = vmatmul.mubr.f32.gmra.mrb[0].mxu0 %v3519
        %v3617 = vpop.f32.mrb[0].mxu0
        %v3618 = vadd.f32 0.0, %v3617
        %v3619 = vpop.f32.mrb[0].mxu0
        %v3620 = vadd.f32 0.0, %v3619
        %3621 = vmatprep.mubr.f32.mxu0 0.0
        %3622 = vmatmul.mubr.f32.gmra.mrb[0].mxu0 %v3522
        %v3623 = vpop.f32.mrb[0].mxu0
        %v3624 = vadd.f32 0.0, %v3623
        %v3625 = vpop.f32.mrb[0].mxu0
        %v3626 = vadd.f32 0.0, %v3625
        %3627 = vmatprep.mubr.f32.mxu0 0.0
        %3628 = vmatmul.mubr.f32.gmra.mrb[0].mxu0 %v3525
        %v3629 = vpop.f32.mrb[0].mxu0
        %v3630 = vadd.f32 0.0, %v3629
        %v3631 = vpop.f32.mrb[0].mxu0
        %v3632 = vadd.f32 0.0, %v3631
        %3633 = vmatprep.mubr.f32.mxu0 0.0
        %3634 = vmatmul.mubr.f32.gmra.mrb[0].mxu0 %v3528
        %v3635 = vpop.f32.mrb[0].mxu0
        %v3636 = vadd.f32 0.0, %v3635
        %v3637 = vpop.f32.mrb[0].mxu0
        %v3638 = vadd.f32 0.0, %v3637
        %3639 = vmatprep.mubr.f32.mxu0 0.0
        %3640 = vmatmul.mubr.f32.gmra.mrb[0].mxu0 %v3531
        %v3641 = vpop.f32.mrb[0].mxu0
        %v3642 = vadd.f32 0.0, %v3641
        %v3643 = vpop.f32.mrb[0].mxu0
        %v3644 = vadd.f32 0.0, %v3643
        %3645 = vmatprep.mubr.f32.mxu0 0.0
        %3646 = vmatmul.mubr.f32.gmra.mrb[0].mxu0 %v3534
        %v3647 = vpop.f32.mrb[0].mxu0
        %v3648 = vadd.f32 0.0, %v3647
        %v3649 = vpop.f32.mrb[0].mxu0
        %v3650 = vadd.f32 0.0, %v3649
        %3651 = vmatprep.mubr.f32.mxu0 0.0
        %3652 = vmatmul.mubr.f32.gmra.mrb[0].mxu0 %v3537
        %v3653 = vpop.f32.mrb[0].mxu0
        %v3654 = vadd.f32 0.0, %v3653
        %v3655 = vpop.f32.mrb[0].mxu0
        %v3656 = vadd.f32 0.0, %v3655
        %3657 = vdwg.mxu0
        %3658 = vst [vmem:[#allocation2] sm:$0xff] %v3606
        %3659 = vst.msk [vmem:[#allocation2 + $0x8] sm:$0xff] %vm3042, %v3608
        %3660 = vst [vmem:[#allocation2 + $0x10] sm:$0xff] %v3612
        %3661 = vst.msk [vmem:[#allocation2 + $0x18] sm:$0xff] %vm3042, %v3614
        %3662 = vst [vmem:[#allocation2 + $0x20] sm:$0xff] %v3618
        %3663 = vst.msk [vmem:[#allocation2 + $0x28] sm:$0xff] %vm3042, %v3620
        %3664 = vst [vmem:[#allocation2 + $0x30] sm:$0xff] %v3624
        %3665 = vst.msk [vmem:[#allocation2 + $0x38] sm:$0xff] %vm3042, %v3626
        %3666 = vst [vmem:[#allocation2 + $0x40] sm:$0xff] %v3630
        %3667 = vst.msk [vmem:[#allocation2 + $0x48] sm:$0xff] %vm3042, %v3632
        %3668 = vst [vmem:[#allocation2 + $0x50] sm:$0xff] %v3636
        %3669 = vst.msk [vmem:[#allocation2 + $0x58] sm:$0xff] %vm3042, %v3638
        %3670 = vst [vmem:[#allocation2 + $0x60] sm:$0xff] %v3642
        %3671 = vst.msk [vmem:[#allocation2 + $0x68] sm:$0xff] %vm3042, %v3644
        %3672 = vst [vmem:[#allocation2 + $0x70] sm:$0xff] %v3648
        %3673 = vst.msk [vmem:[#allocation2 + $0x78] sm:$0xff] %vm3042, %v3650
        %3674 = vst [vmem:[#allocation2 + $0x80] sm:$0xff] %v3654
        %3675 = vst.msk [vmem:[#allocation2 + $0x88] sm:$0xff] %vm3042, %v3656
        %v3676 = vld [vmem:[#allocation2] sm:$0xff]
        %v3677 = vld [vmem:[#allocation2 + $0x10] sm:$0xff]
        %v3678 = vld [vmem:[#allocation2 + $0x18] sm:$0xff]
        %3681 = vrot.lane.b32.xlu0 %v3677, 127
        %v3682 = vpop.permute.xlu0 %3681
        %3683 = vrot.lane.b32.xlu0 %v3678, 127
        %v3684 = vpop.permute.xlu0 %3683
        %v3685 = vsel %vm3216, %v3682, %v3684
        %v3687 = vadd.f32 %v3676, %v3685
        %v3688 = vld [vmem:[#allocation2 + $0x20] sm:$0xff]
        %v3689 = vld [vmem:[#allocation2 + $0x28] sm:$0xff]
        %3692 = vrot.lane.b32.xlu0 %v3688, 126
        %v3693 = vpop.permute.xlu0 %3692
        %3694 = vrot.lane.b32.xlu0 %v3689, 126
        %v3695 = vpop.permute.xlu0 %3694
        %v3696 = vsel %vm3228, %v3693, %v3695
        %v3698 = vadd.f32 %v3687, %v3696
        %v3699 = vld [vmem:[#allocation2 + $0x30] sm:$0xff]
        %v3700 = vld [vmem:[#allocation2 + $0x38] sm:$0xff]
        %3703 = vrot.lane.b32.xlu0 %v3699, 125
        %v3704 = vpop.permute.xlu0 %3703
        %3705 = vrot.lane.b32.xlu0 %v3700, 125
        %v3706 = vpop.permute.xlu0 %3705
        %v3707 = vsel %vm3240, %v3704, %v3706
        %v3709 = vadd.f32 %v3698, %v3707
        %v3710 = vld [vmem:[#allocation2 + $0x40] sm:$0xff]
        %v3711 = vld [vmem:[#allocation2 + $0x48] sm:$0xff]
        %3714 = vrot.lane.b32.xlu0 %v3710, 124
        %v3715 = vpop.permute.xlu0 %3714
        %3716 = vrot.lane.b32.xlu0 %v3711, 124
        %v3717 = vpop.permute.xlu0 %3716
        %v3718 = vsel %vm3252, %v3715, %v3717
        %v3720 = vadd.f32 %v3709, %v3718
        %v3721 = vld [vmem:[#allocation2 + $0x50] sm:$0xff]
        %v3722 = vld [vmem:[#allocation2 + $0x58] sm:$0xff]
        %3725 = vrot.lane.b32.xlu0 %v3721, 123
        %v3726 = vpop.permute.xlu0 %3725
        %3727 = vrot.lane.b32.xlu0 %v3722, 123
        %v3728 = vpop.permute.xlu0 %3727
        %v3729 = vsel %vm3264, %v3726, %v3728
        %v3731 = vadd.f32 %v3720, %v3729
        %v3732 = vld [vmem:[#allocation2 + $0x60] sm:$0xff]
        %v3733 = vld [vmem:[#allocation2 + $0x68] sm:$0xff]
        %3736 = vrot.lane.b32.xlu0 %v3732, 122
        %v3737 = vpop.permute.xlu0 %3736
        %3738 = vrot.lane.b32.xlu0 %v3733, 122
        %v3739 = vpop.permute.xlu0 %3738
        %v3740 = vsel %vm3276, %v3737, %v3739
        %v3742 = vadd.f32 %v3731, %v3740
        %v3743 = vld [vmem:[#allocation2 + $0x70] sm:$0xff]
        %v3744 = vld [vmem:[#allocation2 + $0x78] sm:$0xff]
        %3747 = vrot.lane.b32.xlu0 %v3743, 121
        %v3748 = vpop.permute.xlu0 %3747
        %3749 = vrot.lane.b32.xlu0 %v3744, 121
        %v3750 = vpop.permute.xlu0 %3749
        %v3751 = vsel %vm3288, %v3748, %v3750
        %v3753 = vadd.f32 %v3742, %v3751
        %v3754 = vld [vmem:[#allocation2 + $0x80] sm:$0xff]
        %v3755 = vld [vmem:[#allocation2 + $0x88] sm:$0xff]
        %3758 = vrot.lane.b32.xlu0 %v3754, 120
        %v3759 = vpop.permute.xlu0 %3758
        %3760 = vrot.lane.b32.xlu0 %v3755, 120
        %v3761 = vpop.permute.xlu0 %3760
        %v3762 = vsel %vm3300, %v3759, %v3761
        %v3764 = vadd.f32 %v3753, %v3762
        %v3765 = vld [vmem:[%s21] sm:$0xff]
        %3767 = vset.pattern.permute.xlu0 0
        %3768 = vperm.xlu0 %3767, %v3765
        %v3769 = vpop.permute.xlu0 %3768
        %v3771 = vadd.f32 %v3764, %v3769
        %v3772 = vxor.u32 %v3771, 2147483648
        %v3773 = vmul.f32 %v3772, 1.442695
        %v3774 = vpow.pop %v3773
        %v3775 = vadd.f32 %v3774, 1.0
        %v3776 = vrcp.pop %v3775
        %v3777 = vmul.f32 1.0, %v3776
        %3778 = vst [vmem:[%s721] sm:$0x3] %v3777
        %s3779 = sand.u32 %s526, 1
        %s3780 = scalar_lea.sflag [#allocation4], %s3779
        %s3781 = sand.u32 %s526, 1
        %s3782 = smul.addr %s3781, 2
        %s3783 = scalar_lea.vmem [#allocation3], %s3782
        // Predicated region
        $region109: #{det_decoder_forward.1} parent=107 // pred_check
          %p3784 = pneg %p536
        $region110: #{det_decoder_forward.1} parent=107 // pred_check_branch
          %3786 = sbr.rel (%p3784) target = $region112
        $region111: #{det_decoder_forward.1} parent=107 // pred_region
          %s3788 = ssub.s32 32, 32
          %3789 = vsyncadd %s3780, %s3788
          %s3790 = smul.addr %s36, 32
          %s3791 = scalar_lea.hbm %s22, %s3790
          %s3793 = sshll.u32 %s3783, 4
          %s3794 = int_to_ptr.vmem [resolvable:$true] %s3793
          %3796 = dma.vmem_to_hbm [thread:$0]  %s3794, 32, %s3791, %s3780
        $region112: #{det_decoder_forward.1} parent=107 // pred_fallthru
          _
      $region108: #{det_decoder_forward.1} parent=5 // pred_fallthru
        _
      %p3797 = scmp.le.s32.totalorder 2, %s31
      // Predicated region
      $region113: #{det_decoder_forward.1} parent=5 // pred_check
        %p3798 = pneg %p3797
      $region114: #{det_decoder_forward.1} parent=5 // pred_check_branch
        %3800 = sbr.rel (%p3798) target = $region116
      $region115: #{det_decoder_forward.1} parent=5 // pred_region
        %s3801 = ssub.s32 %s31, 2
        // Predicated region
        $region117: #{det_decoder_forward.1} parent=115 // pred_check
          %p3802 = pneg %p542
        $region118: #{det_decoder_forward.1} parent=115 // pred_check_branch
          %3804 = sbr.rel (%p3802) target = $region120
        $region119: #{det_decoder_forward.1} parent=115 // pred_region
          %s3805 = sand.u32 %s527, 1
          %s3806 = scalar_lea.sflag [#allocation4], %s3805
          %s3807 = sand.u32 %s527, 1
          %s3808 = smul.addr %s3807, 2
          %s3809 = scalar_lea.vmem [#allocation3], %s3808
          %3810 = dma.done %s3806, 32
        $region120: #{det_decoder_forward.1} parent=115 // pred_fallthru
          _
      $region116: #{det_decoder_forward.1} parent=5 // pred_fallthru
        _
    $region6: #{det_decoder_forward.1} parent=1 // loop_footer
      %s35 = sadd.s32 1, %s31
    $region7: #{det_decoder_forward.1} parent=1 // loop_footer_branch
      %30 = sbr.rel target = $region3
    $region8: #{det_decoder_forward.1} parent=1 // loop_exit
      _
    %3811 = vsyncpa [#allocation4], 1
    %s3812 = scalar_lea.sflag [#allocation4], 1
    %3813 = vsyncpa %s3812, 1

</llo_original>
